<compile_context>
chip_gen: v7x
topology: tpu7x:2x2x1
jax: 0.10.0
libtpu: 0.0.40
codegen_flags: <defaults>
</compile_context>

<pallas_src>
import jax
import jax.numpy as jnp
from jax.experimental import pallas as pl
from jax.experimental.pallas import tpu as pltpu

GEO_HIDDEN_DIM = 64
PART_NUM = 7
FEAT_LEN = PART_NUM * (PART_NUM * 2 + 9 + GEO_HIDDEN_DIM)   # 7 * 87 = 609
FEAT_PAD = 640                                              # 5 * 128 (lane-dense)
LATENT = 128
BN_EPS = 1e-5
LEAKY_SLOPE = 0.01

# ---------------------------------------------------------------------------
# Flat f32 parameter-slab layout (dequant scales, BN gamma/beta, biases).
# All segment widths are multiples of 128 -> all kernel slices lane-aligned.
# ---------------------------------------------------------------------------
_PARAM_LAYOUT = (
    ("s_e1", 1024), ("g_e1", 1024), ("b_e1", 1024),   # enc mlp1 scale + bn1
    ("s_e2", 512),  ("g_e2", 512),  ("b_e2", 512),    # enc mlp2 scale + bn2
    ("s_e3m", 256), ("bias_e3m", 256),                # fused mlp3·(mu|logvar)
    ("s_d1", 256),  ("g_d1", 256),  ("b_d1", 256),    # dec mlp1 scale + bn1
    ("s_d2", 512),  ("g_d2", 512),  ("b_d2", 512),    # dec mlp2 scale + bn2
    ("s_d3", 1024), ("g_d3", 1024), ("b_d3", 1024),   # dec mlp3 scale + bn3
    ("s_d4", 640),  ("bias_d4", 640),                 # dec mlp4 (padded to 640)
)
_PARAM_OFF = {}
_off = 0
for _name, _n in _PARAM_LAYOUT:
    _PARAM_OFF[_name] = (_off, _n)
    _off += _n
PARAM_TOTAL = _off                                    # 11776 = 92 * 128


# ---------------------------------------------------------------------------
# Pallas kernel: full SPVAE forward (encoder -> reparameterize -> decoder)
# ---------------------------------------------------------------------------
def spvae_kernel(
    x_ref, eps_ref,
    ew1, ew2, ew3m, dw1, dw2, dw3, dw4,               # int8 weights (fan_in, fan_out)
    pp_ref,                                           # (1, PARAM_TOTAL) f32 slab
    zml_ref, recon_ref,
):
    def vec(name):
        off, n = _PARAM_OFF[name]
        return pp_ref[:, off:off + n]                 # (1, n) f32, lane-aligned slice

    def linear_q(h_bf16, w_ref, scale_name):
        # int8 -> f32 -> bf16 dequant (exact: |q| <= 127), bf16 x bf16 -> f32 MXU,
        # per-output-column scale applied in the f32 epilogue.
        w = w_ref[...].astype(jnp.float32).astype(jnp.bfloat16)
        acc = jnp.dot(h_bf16, w, preferred_element_type=jnp.float32)
        return acc * vec(scale_name)

    def batchnorm(h, g_name, b_name):
        # PyTorch training-mode BN: batch mean, biased batch variance, affine.
        mean = jnp.mean(h, axis=0, keepdims=True)
        ex2 = jnp.mean(h * h, axis=0, keepdims=True)
        var = jnp.maximum(ex2 - mean * mean, 0.0)     # clamp: cancellation guard
        return (h - mean) * jax.lax.rsqrt(var + BN_EPS) * vec(g_name) + vec(b_name)

    def leaky_relu_bf16(h):
        # f32 elementwise math, bf16 result for the next MXU pass.
        return jnp.where(h > 0, h, LEAKY_SLOPE * h).astype(jnp.bfloat16)

    x = x_ref[...].astype(jnp.bfloat16)                                        # (B, 640)

    # ---- encoder ----
    h = leaky_relu_bf16(batchnorm(linear_q(x, ew1, "s_e1"), "g_e1", "b_e1"))   # (B, 1024)
    h = leaky_relu_bf16(batchnorm(linear_q(h, ew2, "s_e2"), "g_e2", "b_e2"))   # (B, 512)
    ml = linear_q(h, ew3m, "s_e3m") + vec("bias_e3m")                          # (B, 256) = [mu_lin | logvar]
    mu = jax.nn.sigmoid(ml[:, :LATENT])                                        # (B, 128)
    logvar = ml[:, LATENT:]                                                    # (B, 128)

    # ---- reparameterize: z = eps * exp(0.5*logvar) + mu ----
    z = eps_ref[...] * jnp.exp(0.5 * logvar) + mu                              # (B, 128) f32

    # ---- decoder ----
    d = leaky_relu_bf16(batchnorm(linear_q(z.astype(jnp.bfloat16), dw1, "s_d1"),
                                  "g_d1", "b_d1"))                             # (B, 256)
    d = leaky_relu_bf16(batchnorm(linear_q(d, dw2, "s_d2"), "g_d2", "b_d2"))   # (B, 512)
    d = leaky_relu_bf16(batchnorm(linear_q(d, dw3, "s_d3"), "g_d3", "b_d3"))   # (B, 1024)
    recon = jnp.tanh(linear_q(d, dw4, "s_d4") + vec("bias_d4"))                # (B, 640); cols 609: = tanh(0) = 0

    zml_ref[...] = jnp.concatenate([z, mu, logvar], axis=1)                    # (B, 384)
    recon_ref[...] = recon


# ---------------------------------------------------------------------------
# Parameter construction (deterministic, synthetic) + kernel pre-processing
# ---------------------------------------------------------------------------
def _quantize_cols(w_f32):
    """Symmetric per-output-column int8 quantization: w ≈ w_i8 * scale."""
    amax = jnp.max(jnp.abs(w_f32), axis=0, keepdims=True)         # (1, out)
    scale = jnp.where(amax > 0.0, amax, 1.0) / 127.0
    w_i8 = jnp.clip(jnp.round(w_f32 / scale), -127, 127).astype(jnp.int8)
    return w_i8, scale.astype(jnp.float32)


def init_params(key):
    """Returns (weights, slab) pre-processed for the kernel.

    weights: 7 int8 (fan_in, fan_out) matrices (= PyTorch weight.T, quantized)
    slab:    (1, PARAM_TOTAL) f32 — dequant scales, BN gamma/beta, biases.
    """
    keys = jax.random.split(key, 9)

    def w(k, fi, fo):
        return jax.random.normal(k, (fi, fo), jnp.float32) * 0.02

    # ---- encoder master weights (biases into BN are dropped: BN cancels them) ----
    ew1 = w(keys[0], FEAT_LEN, 1024)
    ew2 = w(keys[1], 1024, 512)
    ew3, eb3 = w(keys[2], 512, 256), jnp.zeros((1, 256), jnp.float32)
    ewmu, ebmu = w(keys[3], 256, LATENT), jnp.zeros((1, LATENT), jnp.float32)
    ewlv, eblv = w(keys[4], 256, LATENT), jnp.zeros((1, LATENT), jnp.float32)

    # ---- decoder master weights ----
    dw1 = w(keys[5], LATENT, 256)
    dw2 = w(keys[6], 256, 512)
    dw3 = w(keys[7], 512, 1024)
    dw4, db4 = w(keys[8], 1024, FEAT_LEN), jnp.zeros((1, FEAT_LEN), jnp.float32)

    # Fuse encoder mlp3 with the concatenated (mu | logvar) projection:
    #   (h @ W3 + b3) @ Wml + bml == h @ (W3 @ Wml) + (b3 @ Wml + bml)
    ewml = jnp.concatenate([ewmu, ewlv], axis=1)                  # (256, 256)
    ebml = jnp.concatenate([ebmu, eblv], axis=1)                  # (1, 256)
    ew3m = ew3 @ ewml                                             # (512, 256)
    eb3m = eb3 @ ewml + ebml                                      # (1, 256)

    # Zero-pad feature dim 609 -> 640: ew1 input rows, dw4/db4 output cols.
    # (Padded recon columns stay exactly 0: zero weight cols quantize to 0.)
    ew1 = jnp.pad(ew1, ((0, FEAT_PAD - FEAT_LEN), (0, 0)))
    dw4 = jnp.pad(dw4, ((0, 0), (0, FEAT_PAD - FEAT_LEN)))
    db4 = jnp.pad(db4, ((0, 0), (0, FEAT_PAD - FEAT_LEN)))

    # int8 per-output-column quantization of every matmul weight.
    qew1, s_e1 = _quantize_cols(ew1)
    qew2, s_e2 = _quantize_cols(ew2)
    qew3m, s_e3m = _quantize_cols(ew3m)
    qdw1, s_d1 = _quantize_cols(dw1)
    qdw2, s_d2 = _quantize_cols(dw2)
    qdw3, s_d3 = _quantize_cols(dw3)
    qdw4, s_d4 = _quantize_cols(dw4)

    def ones(n):
        return jnp.ones((1, n), jnp.float32)

    def zeros(n):
        return jnp.zeros((1, n), jnp.float32)

    pieces = {
        "s_e1": s_e1, "g_e1": ones(1024), "b_e1": zeros(1024),
        "s_e2": s_e2, "g_e2": ones(512),  "b_e2": zeros(512),
        "s_e3m": s_e3m, "bias_e3m": eb3m,
        "s_d1": s_d1, "g_d1": ones(256),  "b_d1": zeros(256),
        "s_d2": s_d2, "g_d2": ones(512),  "b_d2": zeros(512),
        "s_d3": s_d3, "g_d3": ones(1024), "b_d3": zeros(1024),
        "s_d4": s_d4, "bias_d4": db4,
    }
    slab = jnp.concatenate([pieces[name] for name, _ in _PARAM_LAYOUT], axis=1)
    assert slab.shape == (1, PARAM_TOTAL)

    weights = (qew1, qew2, qew3m, qdw1, qdw2, qdw3, qdw4)
    return weights, slab


# ---------------------------------------------------------------------------
# Wrapper
# ---------------------------------------------------------------------------
def spvae_forward(x, eps, params):
    weights, slab = params
    B = x.shape[0]
    x_pad = jnp.pad(x, ((0, 0), (0, FEAT_PAD - FEAT_LEN)))        # (B, 640)

    vmem = pl.BlockSpec(memory_space=pltpu.MemorySpace.VMEM)
    out_shapes = (
        jax.ShapeDtypeStruct((B, 3 * LATENT), jnp.float32),       # [z | mu | logvar]
        jax.ShapeDtypeStruct((B, FEAT_PAD), jnp.float32),         # recon (padded)
    )
    fn = pl.pallas_call(
        spvae_kernel,
        out_shape=out_shapes,
        in_specs=[vmem] * (2 + len(weights) + 1),
        out_specs=[vmem, vmem],
        compiler_params=pltpu.CompilerParams(vmem_limit_bytes=32 << 20),
    )
    zml, recon_pad = fn(x_pad, eps, *weights, slab)
    z = zml[:, :LATENT]
    mu = zml[:, LATENT:2 * LATENT]
    logvar = zml[:, 2 * LATENT:]
    return z, recon_pad[:, :FEAT_LEN], mu, logvar


# ---------------------------------------------------------------------------
# Pure-JAX reference (mirrors the kernel's quantized/bf16 math exactly)
# ---------------------------------------------------------------------------
def spvae_reference(x, eps, params):
    weights, slab = params
    ew1, ew2, ew3m, dw1, dw2, dw3, dw4 = weights

    def vec(name):
        off, n = _PARAM_OFF[name]
        return slab[:, off:off + n]

    def linq(h, w_i8, s_name):
        w = w_i8.astype(jnp.float32).astype(jnp.bfloat16)
        return jnp.dot(h.astype(jnp.bfloat16), w,
                       preferred_element_type=jnp.float32) * vec(s_name)

    def bn(h, g_name, b_name):
        m = jnp.mean(h, axis=0, keepdims=True)
        v = jnp.maximum(jnp.mean(h * h, axis=0, keepdims=True) - m * m, 0.0)
        return (h - m) * jax.lax.rsqrt(v + BN_EPS) * vec(g_name) + vec(b_name)

    def lrelu(h):
        return jnp.where(h > 0, h, LEAKY_SLOPE * h).astype(jnp.bfloat16)

    x_pad = jnp.pad(x, ((0, 0), (0, FEAT_PAD - FEAT_LEN)))
    h = lrelu(bn(linq(x_pad, ew1, "s_e1"), "g_e1", "b_e1"))
    h = lrelu(bn(linq(h, ew2, "s_e2"), "g_e2", "b_e2"))
    ml = linq(h, ew3m, "s_e3m") + vec("bias_e3m")
    mu = jax.nn.sigmoid(ml[:, :LATENT])
    logvar = ml[:, LATENT:]
    z = eps * jnp.exp(0.5 * logvar) + mu
    d = lrelu(bn(linq(z, dw1, "s_d1"), "g_d1", "b_d1"))
    d = lrelu(bn(linq(d, dw2, "s_d2"), "g_d2", "b_d2"))
    d = lrelu(bn(linq(d, dw3, "s_d3"), "g_d3", "b_d3"))
    recon = jnp.tanh(linq(d, dw4, "s_d4") + vec("bias_d4"))[:, :FEAT_LEN]
    return z, recon, mu, logvar


if __name__ == "__main__":
    key = jax.random.PRNGKey(0)
    k_x, k_eps, k_params = jax.random.split(key, 3)

    # Small batch for the smoke test; the same kernel handles any B (larger B
    # amortizes the one-shot weight DMA, which dominates at small batch).
    B = 8
    x = jax.random.normal(k_x, (B, FEAT_LEN), jnp.float32)
    eps = jax.random.normal(k_eps, (B, LATENT), jnp.float32)   # randn_like in reparameterize
    params = init_params(k_params)

    z, recon, mu, logvar = spvae_forward(x, eps, params)
    jax.block_until_ready((z, recon, mu, logvar))

    # Sanity check vs. precision-matched pure-JAX reference.
    z_r, recon_r, mu_r, logvar_r = spvae_reference(x, eps, params)
    assert jnp.allclose(z, z_r, atol=1e-2, rtol=1e-2)
    assert jnp.allclose(recon, recon_r, atol=1e-2, rtol=1e-2)
    assert jnp.allclose(mu, mu_r, atol=1e-2, rtol=1e-2)
    assert jnp.allclose(logvar, logvar_r, atol=1e-2, rtol=1e-2)
    assert z.shape == (B, LATENT) and recon.shape == (B, FEAT_LEN)
    assert mu.shape == (B, LATENT) and logvar.shape == (B, LATENT)

    print("KERNEL_OK")
</pallas_src>

<mosaic_0001>
module attributes {stable_mosaic.version = 11 : i64} {
  func.func @spvae_kernel(%arg0: memref<8x640xf32, #tpu.memory_space<vmem>>, %arg1: memref<8x128xf32, #tpu.memory_space<vmem>>, %arg2: memref<640x1024xi8, #tpu.memory_space<vmem>>, %arg3: memref<1024x512xi8, #tpu.memory_space<vmem>>, %arg4: memref<512x256xi8, #tpu.memory_space<vmem>>, %arg5: memref<128x256xi8, #tpu.memory_space<vmem>>, %arg6: memref<256x512xi8, #tpu.memory_space<vmem>>, %arg7: memref<512x1024xi8, #tpu.memory_space<vmem>>, %arg8: memref<1024x640xi8, #tpu.memory_space<vmem>>, %arg9: memref<1x11776xf32, #tpu.memory_space<vmem>>, %arg10: memref<8x384xf32, #tpu.memory_space<vmem>>, %arg11: memref<8x640xf32, #tpu.memory_space<vmem>>) attributes {dimension_semantics = [], scalar_prefetch = 0 : i64, scratch_operands = 0 : i64, tpu.core_type = #tpu.core_type<tc>} {
    %c0 = arith.constant 0 : index
    %c0_0 = arith.constant 0 : index
    %0 = vector.load %arg0[%c0, %c0_0] : memref<8x640xf32, #tpu.memory_space<vmem>>, vector<8x640xf32>
    %1 = arith.truncf %0 : vector<8x640xf32> to vector<8x640xbf16>
    %c0_1 = arith.constant 0 : index
    %c0_2 = arith.constant 0 : index
    %2 = vector.load %arg2[%c0_1, %c0_2] : memref<640x1024xi8, #tpu.memory_space<vmem>>, vector<640x1024xi8>
    %3 = arith.sitofp %2 : vector<640x1024xi8> to vector<640x1024xf32>
    %4 = arith.truncf %3 : vector<640x1024xf32> to vector<640x1024xbf16>
    %cst = arith.constant dense<0.000000e+00> : vector<8x1024xf32>
    %5 = tpu.matmul %1, %4, %cst {dimension_numbers = #tpu.dot_dimension_numbers<[1], [0], [0], [1], [0, 0, 1, 1], [], []>} : vector<8x640xbf16>, vector<640x1024xbf16>, vector<8x1024xf32> -> vector<8x1024xf32>
    %c0_3 = arith.constant 0 : index
    %c0_4 = arith.constant 0 : index
    %6 = vector.load %arg9[%c0_3, %c0_4] : memref<1x11776xf32, #tpu.memory_space<vmem>>, vector<1x1024xf32>
    %7 = vector.broadcast %6 : vector<1x1024xf32> to vector<8x1024xf32>
    %8 = arith.mulf %5, %7 : vector<8x1024xf32>
    %cst_5 = arith.constant dense<0.000000e+00> : vector<1024xf32>
    %9 = vector.multi_reduction <add>, %8, %cst_5 [0] : vector<8x1024xf32> to vector<1024xf32>
    %10 = vector.shape_cast %9 : vector<1024xf32> to vector<1x1024xf32>
    %cst_6 = arith.constant 8.000000e+00 : f32
    %11 = vector.broadcast %cst_6 : f32 to vector<1x1024xf32>
    %12 = arith.divf %10, %11 : vector<1x1024xf32>
    %13 = arith.mulf %8, %8 : vector<8x1024xf32>
    %cst_7 = arith.constant dense<0.000000e+00> : vector<1024xf32>
    %14 = vector.multi_reduction <add>, %13, %cst_7 [0] : vector<8x1024xf32> to vector<1024xf32>
    %15 = vector.shape_cast %14 : vector<1024xf32> to vector<1x1024xf32>
    %cst_8 = arith.constant 8.000000e+00 : f32
    %16 = vector.broadcast %cst_8 : f32 to vector<1x1024xf32>
    %17 = arith.divf %15, %16 : vector<1x1024xf32>
    %18 = arith.mulf %12, %12 : vector<1x1024xf32>
    %19 = arith.subf %17, %18 : vector<1x1024xf32>
    %cst_9 = arith.constant 0.000000e+00 : f32
    %20 = vector.broadcast %cst_9 : f32 to vector<1x1024xf32>
    %21 = arith.maximumf %19, %20 : vector<1x1024xf32>
    %22 = vector.broadcast %12 : vector<1x1024xf32> to vector<8x1024xf32>
    %23 = arith.subf %8, %22 : vector<8x1024xf32>
    %cst_10 = arith.constant 9.99999974E-6 : f32
    %24 = vector.broadcast %cst_10 : f32 to vector<1x1024xf32>
    %25 = arith.addf %21, %24 : vector<1x1024xf32>
    %26 = math.rsqrt %25 : vector<1x1024xf32>
    %27 = vector.broadcast %26 : vector<1x1024xf32> to vector<8x1024xf32>
    %28 = arith.mulf %23, %27 : vector<8x1024xf32>
    %c0_11 = arith.constant 0 : index
    %c1024 = arith.constant 1024 : index
    %29 = vector.load %arg9[%c0_11, %c1024] : memref<1x11776xf32, #tpu.memory_space<vmem>>, vector<1x1024xf32>
    %30 = vector.broadcast %29 : vector<1x1024xf32> to vector<8x1024xf32>
    %31 = arith.mulf %28, %30 : vector<8x1024xf32>
    %c0_12 = arith.constant 0 : index
    %c2048 = arith.constant 2048 : index
    %32 = vector.load %arg9[%c0_12, %c2048] : memref<1x11776xf32, #tpu.memory_space<vmem>>, vector<1x1024xf32>
    %33 = vector.broadcast %32 : vector<1x1024xf32> to vector<8x1024xf32>
    %34 = arith.addf %31, %33 : vector<8x1024xf32>
    %cst_13 = arith.constant 0.000000e+00 : f32
    %35 = vector.broadcast %cst_13 : f32 to vector<8x1024xf32>
    %36 = arith.cmpf ogt, %34, %35 : vector<8x1024xf32>
    %cst_14 = arith.constant 0.00999999977 : f32
    %37 = vector.broadcast %cst_14 : f32 to vector<8x1024xf32>
    %38 = arith.mulf %37, %34 : vector<8x1024xf32>
    %39 = arith.select %36, %34, %38 : vector<8x1024xi1>, vector<8x1024xf32>
    %40 = arith.truncf %39 : vector<8x1024xf32> to vector<8x1024xbf16>
    %c0_15 = arith.constant 0 : index
    %c0_16 = arith.constant 0 : index
    %41 = vector.load %arg3[%c0_15, %c0_16] : memref<1024x512xi8, #tpu.memory_space<vmem>>, vector<1024x512xi8>
    %42 = arith.sitofp %41 : vector<1024x512xi8> to vector<1024x512xf32>
    %43 = arith.truncf %42 : vector<1024x512xf32> to vector<1024x512xbf16>
    %cst_17 = arith.constant dense<0.000000e+00> : vector<8x512xf32>
    %44 = tpu.matmul %40, %43, %cst_17 {dimension_numbers = #tpu.dot_dimension_numbers<[1], [0], [0], [1], [0, 0, 1, 1], [], []>} : vector<8x1024xbf16>, vector<1024x512xbf16>, vector<8x512xf32> -> vector<8x512xf32>
    %c0_18 = arith.constant 0 : index
    %c3072 = arith.constant 3072 : index
    %45 = vector.load %arg9[%c0_18, %c3072] : memref<1x11776xf32, #tpu.memory_space<vmem>>, vector<1x512xf32>
    %46 = vector.broadcast %45 : vector<1x512xf32> to vector<8x512xf32>
    %47 = arith.mulf %44, %46 : vector<8x512xf32>
    %cst_19 = arith.constant dense<0.000000e+00> : vector<512xf32>
    %48 = vector.multi_reduction <add>, %47, %cst_19 [0] : vector<8x512xf32> to vector<512xf32>
    %49 = vector.shape_cast %48 : vector<512xf32> to vector<1x512xf32>
    %cst_20 = arith.constant 8.000000e+00 : f32
    %50 = vector.broadcast %cst_20 : f32 to vector<1x512xf32>
    %51 = arith.divf %49, %50 : vector<1x512xf32>
    %52 = arith.mulf %47, %47 : vector<8x512xf32>
    %cst_21 = arith.constant dense<0.000000e+00> : vector<512xf32>
    %53 = vector.multi_reduction <add>, %52, %cst_21 [0] : vector<8x512xf32> to vector<512xf32>
    %54 = vector.shape_cast %53 : vector<512xf32> to vector<1x512xf32>
    %cst_22 = arith.constant 8.000000e+00 : f32
    %55 = vector.broadcast %cst_22 : f32 to vector<1x512xf32>
    %56 = arith.divf %54, %55 : vector<1x512xf32>
    %57 = arith.mulf %51, %51 : vector<1x512xf32>
    %58 = arith.subf %56, %57 : vector<1x512xf32>
    %cst_23 = arith.constant 0.000000e+00 : f32
    %59 = vector.broadcast %cst_23 : f32 to vector<1x512xf32>
    %60 = arith.maximumf %58, %59 : vector<1x512xf32>
    %61 = vector.broadcast %51 : vector<1x512xf32> to vector<8x512xf32>
    %62 = arith.subf %47, %61 : vector<8x512xf32>
    %cst_24 = arith.constant 9.99999974E-6 : f32
    %63 = vector.broadcast %cst_24 : f32 to vector<1x512xf32>
    %64 = arith.addf %60, %63 : vector<1x512xf32>
    %65 = math.rsqrt %64 : vector<1x512xf32>
    %66 = vector.broadcast %65 : vector<1x512xf32> to vector<8x512xf32>
    %67 = arith.mulf %62, %66 : vector<8x512xf32>
    %c0_25 = arith.constant 0 : index
    %c3584 = arith.constant 3584 : index
    %68 = vector.load %arg9[%c0_25, %c3584] : memref<1x11776xf32, #tpu.memory_space<vmem>>, vector<1x512xf32>
    %69 = vector.broadcast %68 : vector<1x512xf32> to vector<8x512xf32>
    %70 = arith.mulf %67, %69 : vector<8x512xf32>
    %c0_26 = arith.constant 0 : index
    %c4096 = arith.constant 4096 : index
    %71 = vector.load %arg9[%c0_26, %c4096] : memref<1x11776xf32, #tpu.memory_space<vmem>>, vector<1x512xf32>
    %72 = vector.broadcast %71 : vector<1x512xf32> to vector<8x512xf32>
    %73 = arith.addf %70, %72 : vector<8x512xf32>
    %cst_27 = arith.constant 0.000000e+00 : f32
    %74 = vector.broadcast %cst_27 : f32 to vector<8x512xf32>
    %75 = arith.cmpf ogt, %73, %74 : vector<8x512xf32>
    %cst_28 = arith.constant 0.00999999977 : f32
    %76 = vector.broadcast %cst_28 : f32 to vector<8x512xf32>
    %77 = arith.mulf %76, %73 : vector<8x512xf32>
    %78 = arith.select %75, %73, %77 : vector<8x512xi1>, vector<8x512xf32>
    %79 = arith.truncf %78 : vector<8x512xf32> to vector<8x512xbf16>
    %c0_29 = arith.constant 0 : index
    %c0_30 = arith.constant 0 : index
    %80 = vector.load %arg4[%c0_29, %c0_30] : memref<512x256xi8, #tpu.memory_space<vmem>>, vector<512x256xi8>
    %81 = arith.sitofp %80 : vector<512x256xi8> to vector<512x256xf32>
    %82 = arith.truncf %81 : vector<512x256xf32> to vector<512x256xbf16>
    %cst_31 = arith.constant dense<0.000000e+00> : vector<8x256xf32>
    %83 = tpu.matmul %79, %82, %cst_31 {dimension_numbers = #tpu.dot_dimension_numbers<[1], [0], [0], [1], [0, 0, 1, 1], [], []>} : vector<8x512xbf16>, vector<512x256xbf16>, vector<8x256xf32> -> vector<8x256xf32>
    %c0_32 = arith.constant 0 : index
    %c4608 = arith.constant 4608 : index
    %84 = vector.load %arg9[%c0_32, %c4608] : memref<1x11776xf32, #tpu.memory_space<vmem>>, vector<1x256xf32>
    %85 = vector.broadcast %84 : vector<1x256xf32> to vector<8x256xf32>
    %86 = arith.mulf %83, %85 : vector<8x256xf32>
    %c0_33 = arith.constant 0 : index
    %c4864 = arith.constant 4864 : index
    %87 = vector.load %arg9[%c0_33, %c4864] : memref<1x11776xf32, #tpu.memory_space<vmem>>, vector<1x256xf32>
    %88 = vector.broadcast %87 : vector<1x256xf32> to vector<8x256xf32>
    %89 = arith.addf %86, %88 : vector<8x256xf32>
    %90 = vector.extract_strided_slice %89 {offsets = [0, 0], sizes = [8, 128], strides = [1, 1]} : vector<8x256xf32> to vector<8x128xf32>
    %91 = arith.negf %90 : vector<8x128xf32>
    %92 = math.exp %91 : vector<8x128xf32>
    %cst_34 = arith.constant 1.000000e+00 : f32
    %93 = vector.broadcast %cst_34 : f32 to vector<8x128xf32>
    %94 = arith.addf %93, %92 : vector<8x128xf32>
    %95 = arith.divf %93, %94 : vector<8x128xf32>
    %96 = vector.extract_strided_slice %89 {offsets = [0, 128], sizes = [8, 128], strides = [1, 1]} : vector<8x256xf32> to vector<8x128xf32>
    %c0_35 = arith.constant 0 : index
    %c0_36 = arith.constant 0 : index
    %97 = vector.load %arg1[%c0_35, %c0_36] : memref<8x128xf32, #tpu.memory_space<vmem>>, vector<8x128xf32>
    %cst_37 = arith.constant 5.000000e-01 : f32
    %98 = vector.broadcast %cst_37 : f32 to vector<8x128xf32>
    %99 = arith.mulf %98, %96 : vector<8x128xf32>
    %100 = math.exp %99 : vector<8x128xf32>
    %101 = arith.mulf %97, %100 : vector<8x128xf32>
    %102 = arith.addf %101, %95 : vector<8x128xf32>
    %103 = arith.truncf %102 : vector<8x128xf32> to vector<8x128xbf16>
    %c0_38 = arith.constant 0 : index
    %c0_39 = arith.constant 0 : index
    %104 = vector.load %arg5[%c0_38, %c0_39] : memref<128x256xi8, #tpu.memory_space<vmem>>, vector<128x256xi8>
    %105 = arith.sitofp %104 : vector<128x256xi8> to vector<128x256xf32>
    %106 = arith.truncf %105 : vector<128x256xf32> to vector<128x256xbf16>
    %cst_40 = arith.constant dense<0.000000e+00> : vector<8x256xf32>
    %107 = tpu.matmul %103, %106, %cst_40 {dimension_numbers = #tpu.dot_dimension_numbers<[1], [0], [0], [1], [0, 0, 1, 1], [], []>} : vector<8x128xbf16>, vector<128x256xbf16>, vector<8x256xf32> -> vector<8x256xf32>
    %c0_41 = arith.constant 0 : index
    %c5120 = arith.constant 5120 : index
    %108 = vector.load %arg9[%c0_41, %c5120] : memref<1x11776xf32, #tpu.memory_space<vmem>>, vector<1x256xf32>
    %109 = vector.broadcast %108 : vector<1x256xf32> to vector<8x256xf32>
    %110 = arith.mulf %107, %109 : vector<8x256xf32>
    %cst_42 = arith.constant dense<0.000000e+00> : vector<256xf32>
    %111 = vector.multi_reduction <add>, %110, %cst_42 [0] : vector<8x256xf32> to vector<256xf32>
    %112 = vector.shape_cast %111 : vector<256xf32> to vector<1x256xf32>
    %cst_43 = arith.constant 8.000000e+00 : f32
    %113 = vector.broadcast %cst_43 : f32 to vector<1x256xf32>
    %114 = arith.divf %112, %113 : vector<1x256xf32>
    %115 = arith.mulf %110, %110 : vector<8x256xf32>
    %cst_44 = arith.constant dense<0.000000e+00> : vector<256xf32>
    %116 = vector.multi_reduction <add>, %115, %cst_44 [0] : vector<8x256xf32> to vector<256xf32>
    %117 = vector.shape_cast %116 : vector<256xf32> to vector<1x256xf32>
    %cst_45 = arith.constant 8.000000e+00 : f32
    %118 = vector.broadcast %cst_45 : f32 to vector<1x256xf32>
    %119 = arith.divf %117, %118 : vector<1x256xf32>
    %120 = arith.mulf %114, %114 : vector<1x256xf32>
    %121 = arith.subf %119, %120 : vector<1x256xf32>
    %cst_46 = arith.constant 0.000000e+00 : f32
    %122 = vector.broadcast %cst_46 : f32 to vector<1x256xf32>
    %123 = arith.maximumf %121, %122 : vector<1x256xf32>
    %124 = vector.broadcast %114 : vector<1x256xf32> to vector<8x256xf32>
    %125 = arith.subf %110, %124 : vector<8x256xf32>
    %cst_47 = arith.constant 9.99999974E-6 : f32
    %126 = vector.broadcast %cst_47 : f32 to vector<1x256xf32>
    %127 = arith.addf %123, %126 : vector<1x256xf32>
    %128 = math.rsqrt %127 : vector<1x256xf32>
    %129 = vector.broadcast %128 : vector<1x256xf32> to vector<8x256xf32>
    %130 = arith.mulf %125, %129 : vector<8x256xf32>
    %c0_48 = arith.constant 0 : index
    %c5376 = arith.constant 5376 : index
    %131 = vector.load %arg9[%c0_48, %c5376] : memref<1x11776xf32, #tpu.memory_space<vmem>>, vector<1x256xf32>
    %132 = vector.broadcast %131 : vector<1x256xf32> to vector<8x256xf32>
    %133 = arith.mulf %130, %132 : vector<8x256xf32>
    %c0_49 = arith.constant 0 : index
    %c5632 = arith.constant 5632 : index
    %134 = vector.load %arg9[%c0_49, %c5632] : memref<1x11776xf32, #tpu.memory_space<vmem>>, vector<1x256xf32>
    %135 = vector.broadcast %134 : vector<1x256xf32> to vector<8x256xf32>
    %136 = arith.addf %133, %135 : vector<8x256xf32>
    %cst_50 = arith.constant 0.000000e+00 : f32
    %137 = vector.broadcast %cst_50 : f32 to vector<8x256xf32>
    %138 = arith.cmpf ogt, %136, %137 : vector<8x256xf32>
    %cst_51 = arith.constant 0.00999999977 : f32
    %139 = vector.broadcast %cst_51 : f32 to vector<8x256xf32>
    %140 = arith.mulf %139, %136 : vector<8x256xf32>
    %141 = arith.select %138, %136, %140 : vector<8x256xi1>, vector<8x256xf32>
    %142 = arith.truncf %141 : vector<8x256xf32> to vector<8x256xbf16>
    %c0_52 = arith.constant 0 : index
    %c0_53 = arith.constant 0 : index
    %143 = vector.load %arg6[%c0_52, %c0_53] : memref<256x512xi8, #tpu.memory_space<vmem>>, vector<256x512xi8>
    %144 = arith.sitofp %143 : vector<256x512xi8> to vector<256x512xf32>
    %145 = arith.truncf %144 : vector<256x512xf32> to vector<256x512xbf16>
    %cst_54 = arith.constant dense<0.000000e+00> : vector<8x512xf32>
    %146 = tpu.matmul %142, %145, %cst_54 {dimension_numbers = #tpu.dot_dimension_numbers<[1], [0], [0], [1], [0, 0, 1, 1], [], []>} : vector<8x256xbf16>, vector<256x512xbf16>, vector<8x512xf32> -> vector<8x512xf32>
    %c0_55 = arith.constant 0 : index
    %c5888 = arith.constant 5888 : index
    %147 = vector.load %arg9[%c0_55, %c5888] : memref<1x11776xf32, #tpu.memory_space<vmem>>, vector<1x512xf32>
    %148 = vector.broadcast %147 : vector<1x512xf32> to vector<8x512xf32>
    %149 = arith.mulf %146, %148 : vector<8x512xf32>
    %cst_56 = arith.constant dense<0.000000e+00> : vector<512xf32>
    %150 = vector.multi_reduction <add>, %149, %cst_56 [0] : vector<8x512xf32> to vector<512xf32>
    %151 = vector.shape_cast %150 : vector<512xf32> to vector<1x512xf32>
    %cst_57 = arith.constant 8.000000e+00 : f32
    %152 = vector.broadcast %cst_57 : f32 to vector<1x512xf32>
    %153 = arith.divf %151, %152 : vector<1x512xf32>
    %154 = arith.mulf %149, %149 : vector<8x512xf32>
    %cst_58 = arith.constant dense<0.000000e+00> : vector<512xf32>
    %155 = vector.multi_reduction <add>, %154, %cst_58 [0] : vector<8x512xf32> to vector<512xf32>
    %156 = vector.shape_cast %155 : vector<512xf32> to vector<1x512xf32>
    %cst_59 = arith.constant 8.000000e+00 : f32
    %157 = vector.broadcast %cst_59 : f32 to vector<1x512xf32>
    %158 = arith.divf %156, %157 : vector<1x512xf32>
    %159 = arith.mulf %153, %153 : vector<1x512xf32>
    %160 = arith.subf %158, %159 : vector<1x512xf32>
    %cst_60 = arith.constant 0.000000e+00 : f32
    %161 = vector.broadcast %cst_60 : f32 to vector<1x512xf32>
    %162 = arith.maximumf %160, %161 : vector<1x512xf32>
    %163 = vector.broadcast %153 : vector<1x512xf32> to vector<8x512xf32>
    %164 = arith.subf %149, %163 : vector<8x512xf32>
    %cst_61 = arith.constant 9.99999974E-6 : f32
    %165 = vector.broadcast %cst_61 : f32 to vector<1x512xf32>
    %166 = arith.addf %162, %165 : vector<1x512xf32>
    %167 = math.rsqrt %166 : vector<1x512xf32>
    %168 = vector.broadcast %167 : vector<1x512xf32> to vector<8x512xf32>
    %169 = arith.mulf %164, %168 : vector<8x512xf32>
    %c0_62 = arith.constant 0 : index
    %c6400 = arith.constant 6400 : index
    %170 = vector.load %arg9[%c0_62, %c6400] : memref<1x11776xf32, #tpu.memory_space<vmem>>, vector<1x512xf32>
    %171 = vector.broadcast %170 : vector<1x512xf32> to vector<8x512xf32>
    %172 = arith.mulf %169, %171 : vector<8x512xf32>
    %c0_63 = arith.constant 0 : index
    %c6912 = arith.constant 6912 : index
    %173 = vector.load %arg9[%c0_63, %c6912] : memref<1x11776xf32, #tpu.memory_space<vmem>>, vector<1x512xf32>
    %174 = vector.broadcast %173 : vector<1x512xf32> to vector<8x512xf32>
    %175 = arith.addf %172, %174 : vector<8x512xf32>
    %cst_64 = arith.constant 0.000000e+00 : f32
    %176 = vector.broadcast %cst_64 : f32 to vector<8x512xf32>
    %177 = arith.cmpf ogt, %175, %176 : vector<8x512xf32>
    %cst_65 = arith.constant 0.00999999977 : f32
    %178 = vector.broadcast %cst_65 : f32 to vector<8x512xf32>
    %179 = arith.mulf %178, %175 : vector<8x512xf32>
    %180 = arith.select %177, %175, %179 : vector<8x512xi1>, vector<8x512xf32>
    %181 = arith.truncf %180 : vector<8x512xf32> to vector<8x512xbf16>
    %c0_66 = arith.constant 0 : index
    %c0_67 = arith.constant 0 : index
    %182 = vector.load %arg7[%c0_66, %c0_67] : memref<512x1024xi8, #tpu.memory_space<vmem>>, vector<512x1024xi8>
    %183 = arith.sitofp %182 : vector<512x1024xi8> to vector<512x1024xf32>
    %184 = arith.truncf %183 : vector<512x1024xf32> to vector<512x1024xbf16>
    %cst_68 = arith.constant dense<0.000000e+00> : vector<8x1024xf32>
    %185 = tpu.matmul %181, %184, %cst_68 {dimension_numbers = #tpu.dot_dimension_numbers<[1], [0], [0], [1], [0, 0, 1, 1], [], []>} : vector<8x512xbf16>, vector<512x1024xbf16>, vector<8x1024xf32> -> vector<8x1024xf32>
    %c0_69 = arith.constant 0 : index
    %c7424 = arith.constant 7424 : index
    %186 = vector.load %arg9[%c0_69, %c7424] : memref<1x11776xf32, #tpu.memory_space<vmem>>, vector<1x1024xf32>
    %187 = vector.broadcast %186 : vector<1x1024xf32> to vector<8x1024xf32>
    %188 = arith.mulf %185, %187 : vector<8x1024xf32>
    %cst_70 = arith.constant dense<0.000000e+00> : vector<1024xf32>
    %189 = vector.multi_reduction <add>, %188, %cst_70 [0] : vector<8x1024xf32> to vector<1024xf32>
    %190 = vector.shape_cast %189 : vector<1024xf32> to vector<1x1024xf32>
    %cst_71 = arith.constant 8.000000e+00 : f32
    %191 = vector.broadcast %cst_71 : f32 to vector<1x1024xf32>
    %192 = arith.divf %190, %191 : vector<1x1024xf32>
    %193 = arith.mulf %188, %188 : vector<8x1024xf32>
    %cst_72 = arith.constant dense<0.000000e+00> : vector<1024xf32>
    %194 = vector.multi_reduction <add>, %193, %cst_72 [0] : vector<8x1024xf32> to vector<1024xf32>
    %195 = vector.shape_cast %194 : vector<1024xf32> to vector<1x1024xf32>
    %cst_73 = arith.constant 8.000000e+00 : f32
    %196 = vector.broadcast %cst_73 : f32 to vector<1x1024xf32>
    %197 = arith.divf %195, %196 : vector<1x1024xf32>
    %198 = arith.mulf %192, %192 : vector<1x1024xf32>
    %199 = arith.subf %197, %198 : vector<1x1024xf32>
    %cst_74 = arith.constant 0.000000e+00 : f32
    %200 = vector.broadcast %cst_74 : f32 to vector<1x1024xf32>
    %201 = arith.maximumf %199, %200 : vector<1x1024xf32>
    %202 = vector.broadcast %192 : vector<1x1024xf32> to vector<8x1024xf32>
    %203 = arith.subf %188, %202 : vector<8x1024xf32>
    %cst_75 = arith.constant 9.99999974E-6 : f32
    %204 = vector.broadcast %cst_75 : f32 to vector<1x1024xf32>
    %205 = arith.addf %201, %204 : vector<1x1024xf32>
    %206 = math.rsqrt %205 : vector<1x1024xf32>
    %207 = vector.broadcast %206 : vector<1x1024xf32> to vector<8x1024xf32>
    %208 = arith.mulf %203, %207 : vector<8x1024xf32>
    %c0_76 = arith.constant 0 : index
    %c8448 = arith.constant 8448 : index
    %209 = vector.load %arg9[%c0_76, %c8448] : memref<1x11776xf32, #tpu.memory_space<vmem>>, vector<1x1024xf32>
    %210 = vector.broadcast %209 : vector<1x1024xf32> to vector<8x1024xf32>
    %211 = arith.mulf %208, %210 : vector<8x1024xf32>
    %c0_77 = arith.constant 0 : index
    %c9472 = arith.constant 9472 : index
    %212 = vector.load %arg9[%c0_77, %c9472] : memref<1x11776xf32, #tpu.memory_space<vmem>>, vector<1x1024xf32>
    %213 = vector.broadcast %212 : vector<1x1024xf32> to vector<8x1024xf32>
    %214 = arith.addf %211, %213 : vector<8x1024xf32>
    %cst_78 = arith.constant 0.000000e+00 : f32
    %215 = vector.broadcast %cst_78 : f32 to vector<8x1024xf32>
    %216 = arith.cmpf ogt, %214, %215 : vector<8x1024xf32>
    %cst_79 = arith.constant 0.00999999977 : f32
    %217 = vector.broadcast %cst_79 : f32 to vector<8x1024xf32>
    %218 = arith.mulf %217, %214 : vector<8x1024xf32>
    %219 = arith.select %216, %214, %218 : vector<8x1024xi1>, vector<8x1024xf32>
    %220 = arith.truncf %219 : vector<8x1024xf32> to vector<8x1024xbf16>
    %c0_80 = arith.constant 0 : index
    %c0_81 = arith.constant 0 : index
    %221 = vector.load %arg8[%c0_80, %c0_81] : memref<1024x640xi8, #tpu.memory_space<vmem>>, vector<1024x640xi8>
    %222 = arith.sitofp %221 : vector<1024x640xi8> to vector<1024x640xf32>
    %223 = arith.truncf %222 : vector<1024x640xf32> to vector<1024x640xbf16>
    %cst_82 = arith.constant dense<0.000000e+00> : vector<8x640xf32>
    %224 = tpu.matmul %220, %223, %cst_82 {dimension_numbers = #tpu.dot_dimension_numbers<[1], [0], [0], [1], [0, 0, 1, 1], [], []>} : vector<8x1024xbf16>, vector<1024x640xbf16>, vector<8x640xf32> -> vector<8x640xf32>
    %c0_83 = arith.constant 0 : index
    %c10496 = arith.constant 10496 : index
    %225 = vector.load %arg9[%c0_83, %c10496] : memref<1x11776xf32, #tpu.memory_space<vmem>>, vector<1x640xf32>
    %226 = vector.broadcast %225 : vector<1x640xf32> to vector<8x640xf32>
    %227 = arith.mulf %224, %226 : vector<8x640xf32>
    %c0_84 = arith.constant 0 : index
    %c11136 = arith.constant 11136 : index
    %228 = vector.load %arg9[%c0_84, %c11136] : memref<1x11776xf32, #tpu.memory_space<vmem>>, vector<1x640xf32>
    %229 = vector.broadcast %228 : vector<1x640xf32> to vector<8x640xf32>
    %230 = arith.addf %227, %229 : vector<8x640xf32>
    %231 = math.tanh %230 : vector<8x640xf32>
    %232 = tpu.concatenate %102, %95, %96 in 1 : vector<8x128xf32>, vector<8x128xf32>, vector<8x128xf32> -> vector<8x384xf32>
    %c0_85 = arith.constant 0 : index
    %c0_86 = arith.constant 0 : index
    %233 = vector.load %arg10[%c0_85, %c0_86] : memref<8x384xf32, #tpu.memory_space<vmem>>, vector<8x384xf32>
    tpu.vector_store %arg10[%c0_85, %c0_86], %232 {strides = array<i32>} : memref<8x384xf32, #tpu.memory_space<vmem>>, vector<8x384xf32>,
    %c0_87 = arith.constant 0 : index
    %c0_88 = arith.constant 0 : index
    %234 = vector.load %arg11[%c0_87, %c0_88] : memref<8x640xf32, #tpu.memory_space<vmem>>, vector<8x640xf32>
    tpu.vector_store %arg11[%c0_87, %c0_88], %231 {strides = array<i32>} : memref<8x640xf32, #tpu.memory_space<vmem>>, vector<8x640xf32>,
    return
  }
}

</mosaic_0001>

<llo_original>
// kernel: tpu_custom_call.1
$region0: #{tpu_custom_call.1}
  #allocation0 [shape = 'u32[]', space=smem, size = 0x4, offset = 0x4, fixed_abs, tag = 'smem constant byte address 0x4 - core index']
  #allocation1 [shape = 'u32[144,128]{1,0:T(1,128)}', space=vmem, size = 0x12000, scoped, tag = 'internal scratch']
  %s0 = inlined_call_operand.hbm [shape: f32[8,640], index: 0, kind: input, shape index: {}]
  %s1 = inlined_call_operand.hbm [shape: f32[8,128], index: 1, kind: input, shape index: {}]
  %s2 = inlined_call_operand.hbm [shape: s8[640,1024], index: 2, kind: input, shape index: {}]
  %s3 = inlined_call_operand.hbm [shape: s8[1024,512], index: 3, kind: input, shape index: {}]
  %s4 = inlined_call_operand.hbm [shape: s8[512,256], index: 4, kind: input, shape index: {}]
  %s5 = inlined_call_operand.hbm [shape: s8[128,256], index: 5, kind: input, shape index: {}]
  %s6 = inlined_call_operand.hbm [shape: s8[256,512], index: 6, kind: input, shape index: {}]
  %s7 = inlined_call_operand.hbm [shape: s8[512,1024], index: 7, kind: input, shape index: {}]
  %s8 = inlined_call_operand.hbm [shape: s8[1024,640], index: 8, kind: input, shape index: {}]
  %s9 = inlined_call_operand.hbm [shape: f32[1,11776], index: 9, kind: input, shape index: {}]
  %s10 = inlined_call_operand.hbm [shape: f32[8,384], index: 10, kind: output, shape index: {0}]
  %s11 = inlined_call_operand.hbm [shape: f32[8,640], index: 11, kind: output, shape index: {1}]
  %12 = xla_tuple %s10, %s11
  %s13 = sld [smem:[#allocation0]]
  $region98: #{tpu_custom_call.1} parent=0
    _
  %s15 = ssub.s32 1, %s13
  %s16 = scalar_select 0, %s15, %s13
  $region1: #{tpu_custom_call.1} parent=0
    #allocation2 [shape = 'u8[20480]{0}', space=vmem, size = 0x5000, scoped, tag = 'input window, operand 0, single buffered']
    #allocation3 [shape = 's32[1]{0}', space=sflag, size = 0x4, scoped, tag = 'scoped memory for tpu_custom_call.1']
    #allocation4 [shape = 's32[1]{0}', space=sflag, size = 0x4, scoped, tag = 'scoped memory for tpu_custom_call.1']
    #allocation5 [shape = 'u8[4096]{0}', space=vmem, size = 0x1000, scoped, tag = 'input window, operand 1, single buffered']
    #allocation6 [shape = 's32[1]{0}', space=sflag, size = 0x4, scoped, tag = 'scoped memory for tpu_custom_call.1']
    #allocation7 [shape = 'u8[655360]{0}', space=vmem, size = 0xa0000, scoped, tag = 'input window, operand 2, single buffered']
    #allocation8 [shape = 'u8[524288]{0}', space=vmem, size = 0x80000, scoped, tag = 'input window, operand 3, single buffered']
    #allocation9 [shape = 's32[1]{0}', space=sflag, size = 0x4, scoped, tag = 'scoped memory for tpu_custom_call.1']
    #allocation10 [shape = 'u8[131072]{0}', space=vmem, size = 0x20000, scoped, tag = 'input window, operand 4, single buffered']
    #allocation11 [shape = 'u8[32768]{0}', space=vmem, size = 0x8000, scoped, tag = 'input window, operand 5, single buffered']
    #allocation12 [shape = 's32[1]{0}', space=sflag, size = 0x4, scoped, tag = 'scoped memory for tpu_custom_call.1']
    #allocation13 [shape = 'u8[131072]{0}', space=vmem, size = 0x20000, scoped, tag = 'input window, operand 6, single buffered']
    #allocation14 [shape = 'u8[524288]{0}', space=vmem, size = 0x80000, scoped, tag = 'input window, operand 7, single buffered']
    #allocation15 [shape = 's32[1]{0}', space=sflag, size = 0x4, scoped, tag = 'scoped memory for tpu_custom_call.1']
    #allocation16 [shape = 'u8[655360]{0}', space=vmem, size = 0xa0000, scoped, tag = 'input window, operand 8, single buffered']
    #allocation17 [shape = 'u8[47104]{0}', space=vmem, size = 0xb800, scoped, tag = 'input window, operand 9, single buffered']
    #allocation18 [shape = 's32[1]{0}', space=sflag, size = 0x4, scoped, tag = 'scoped memory for tpu_custom_call.1']
    #allocation19 [shape = 'u8[12288]{0}', space=vmem, size = 0x3000, scoped, tag = 'output window, operand 0, single buffered']
    #allocation20 [shape = 'u8[20480]{0}', space=vmem, size = 0x5000, scoped, tag = 'output window, operand 1, single buffered']
    #allocation21 [shape = 's32[1]{0}', space=sflag, size = 0x4, scoped, tag = 'scoped memory for tpu_custom_call.1']
    %17 = vsyncpa [#allocation3], 0
    %18 = vsyncpa [#allocation6], 0
    %19 = vsyncpa [#allocation9], 0
    %20 = vsyncpa [#allocation12], 0
    %21 = vsyncpa [#allocation15], 0
    %22 = vsyncpa [#allocation18], 0
    %23 = vsyncpa [#allocation4], 0
    %24 = vsyncpa [#allocation21], 0
    // Predicated region
    $region2: #{tpu_custom_call.1} parent=1 // pred_check
      _
    $region3: #{tpu_custom_call.1} parent=1 // pred_check_branch
      %26 = sbr.rel (0) target = $region5
    $region4: #{tpu_custom_call.1} parent=1 // pred_region
      %s28 = ssub.s32 640, 640
      %29 = vsyncadd [#allocation3], %s28
      %s31 = sshll.u32 [#allocation2], 4
      %s32 = int_to_ptr.vmem [resolvable:$true] %s31
      %34 = dma.hbm_to_vmem [thread:$0]  %s0, 640, %s32, [#allocation3]
    $region5: #{tpu_custom_call.1} parent=1 // pred_fallthru
      _
    // Predicated region
    $region6: #{tpu_custom_call.1} parent=1 // pred_check
      _
    $region7: #{tpu_custom_call.1} parent=1 // pred_check_branch
      %36 = sbr.rel (0) target = $region9
    $region8: #{tpu_custom_call.1} parent=1 // pred_region
      %s38 = ssub.s32 128, 128
      %39 = vsyncadd [#allocation6], %s38
      %s41 = sshll.u32 [#allocation5], 4
      %s42 = int_to_ptr.vmem [resolvable:$true] %s41
      %44 = dma.hbm_to_vmem [thread:$0]  %s1, 128, %s42, [#allocation6]
    $region9: #{tpu_custom_call.1} parent=1 // pred_fallthru
      _
    // Predicated region
    $region10: #{tpu_custom_call.1} parent=1 // pred_check
      _
    $region11: #{tpu_custom_call.1} parent=1 // pred_check_branch
      %46 = sbr.rel (0) target = $region13
    $region12: #{tpu_custom_call.1} parent=1 // pred_region
      %s48 = ssub.s32 20480, 20480
      %49 = vsyncadd [#allocation6], %s48
      %s50 = sshll.u32 [#allocation7], 4
      %s51 = int_to_ptr.vmem [resolvable:$true] %s50
      %56 = dma.hbm_to_vmem [thread:$0]  %s2, 20480, %s51, [#allocation6], 1024, 1024, 64
    $region13: #{tpu_custom_call.1} parent=1 // pred_fallthru
      _
    // Predicated region
    $region14: #{tpu_custom_call.1} parent=1 // pred_check
      _
    $region15: #{tpu_custom_call.1} parent=1 // pred_check_branch
      %58 = sbr.rel (0) target = $region17
    $region16: #{tpu_custom_call.1} parent=1 // pred_region
      %s60 = ssub.s32 16384, 16384
      %61 = vsyncadd [#allocation9], %s60
      %s62 = sshll.u32 [#allocation8], 4
      %s63 = int_to_ptr.vmem [resolvable:$true] %s62
      %68 = dma.hbm_to_vmem [thread:$0]  %s3, 16384, %s63, [#allocation9], 512, 512, 32
    $region17: #{tpu_custom_call.1} parent=1 // pred_fallthru
      _
    // Predicated region
    $region18: #{tpu_custom_call.1} parent=1 // pred_check
      _
    $region19: #{tpu_custom_call.1} parent=1 // pred_check_branch
      %70 = sbr.rel (0) target = $region21
    $region20: #{tpu_custom_call.1} parent=1 // pred_region
      %s72 = ssub.s32 4096, 4096
      %73 = vsyncadd [#allocation9], %s72
      %s74 = sshll.u32 [#allocation10], 4
      %s75 = int_to_ptr.vmem [resolvable:$true] %s74
      %80 = dma.hbm_to_vmem [thread:$0]  %s4, 4096, %s75, [#allocation9], 256, 256, 16
    $region21: #{tpu_custom_call.1} parent=1 // pred_fallthru
      _
    // Predicated region
    $region22: #{tpu_custom_call.1} parent=1 // pred_check
      _
    $region23: #{tpu_custom_call.1} parent=1 // pred_check_branch
      %82 = sbr.rel (0) target = $region25
    $region24: #{tpu_custom_call.1} parent=1 // pred_region
      %s84 = ssub.s32 1024, 1024
      %85 = vsyncadd [#allocation12], %s84
      %s86 = sshll.u32 [#allocation11], 4
      %s87 = int_to_ptr.vmem [resolvable:$true] %s86
      %92 = dma.hbm_to_vmem [thread:$0]  %s5, 1024, %s87, [#allocation12], 256, 256, 16
    $region25: #{tpu_custom_call.1} parent=1 // pred_fallthru
      _
    // Predicated region
    $region26: #{tpu_custom_call.1} parent=1 // pred_check
      _
    $region27: #{tpu_custom_call.1} parent=1 // pred_check_branch
      %94 = sbr.rel (0) target = $region29
    $region28: #{tpu_custom_call.1} parent=1 // pred_region
      %s96 = ssub.s32 4096, 4096
      %97 = vsyncadd [#allocation12], %s96
      %s98 = sshll.u32 [#allocation13], 4
      %s99 = int_to_ptr.vmem [resolvable:$true] %s98
      %104 = dma.hbm_to_vmem [thread:$0]  %s6, 4096, %s99, [#allocation12], 512, 512, 32
    $region29: #{tpu_custom_call.1} parent=1 // pred_fallthru
      _
    // Predicated region
    $region30: #{tpu_custom_call.1} parent=1 // pred_check
      _
    $region31: #{tpu_custom_call.1} parent=1 // pred_check_branch
      %106 = sbr.rel (0) target = $region33
    $region32: #{tpu_custom_call.1} parent=1 // pred_region
      %s108 = ssub.s32 16384, 16384
      %109 = vsyncadd [#allocation15], %s108
      %s110 = sshll.u32 [#allocation14], 4
      %s111 = int_to_ptr.vmem [resolvable:$true] %s110
      %116 = dma.hbm_to_vmem [thread:$0]  %s7, 16384, %s111, [#allocation15], 1024, 1024, 64
    $region33: #{tpu_custom_call.1} parent=1 // pred_fallthru
      _
    // Predicated region
    $region34: #{tpu_custom_call.1} parent=1 // pred_check
      _
    $region35: #{tpu_custom_call.1} parent=1 // pred_check_branch
      %118 = sbr.rel (0) target = $region37
    $region36: #{tpu_custom_call.1} parent=1 // pred_region
      %s120 = ssub.s32 20480, 20480
      %121 = vsyncadd [#allocation15], %s120
      %s122 = sshll.u32 [#allocation16], 4
      %s123 = int_to_ptr.vmem [resolvable:$true] %s122
      %128 = dma.hbm_to_vmem [thread:$0]  %s8, 20480, %s123, [#allocation15], 640, 640, 40
    $region37: #{tpu_custom_call.1} parent=1 // pred_fallthru
      _
    // Predicated region
    $region38: #{tpu_custom_call.1} parent=1 // pred_check
      _
    $region39: #{tpu_custom_call.1} parent=1 // pred_check_branch
      %130 = sbr.rel (0) target = $region41
    $region40: #{tpu_custom_call.1} parent=1 // pred_region
      %s132 = ssub.s32 1472, 1472
      %133 = vsyncadd [#allocation18], %s132
      %s135 = sshll.u32 [#allocation17], 4
      %s136 = int_to_ptr.vmem [resolvable:$true] %s135
      %138 = dma.hbm_to_vmem [thread:$0]  %s9, 1472, %s136, [#allocation18]
    $region41: #{tpu_custom_call.1} parent=1 // pred_fallthru
      _
    // Predicated region
    $region42: #{tpu_custom_call.1} parent=1 // pred_check
      _
    $region43: #{tpu_custom_call.1} parent=1 // pred_check_branch
      %140 = sbr.rel (0) target = $region45
    $region44: #{tpu_custom_call.1} parent=1 // pred_region
      %141 = dma.done [#allocation3], 640
    $region45: #{tpu_custom_call.1} parent=1 // pred_fallthru
      _
    // Predicated region
    $region46: #{tpu_custom_call.1} parent=1 // pred_check
      _
    $region47: #{tpu_custom_call.1} parent=1 // pred_check_branch
      %143 = sbr.rel (0) target = $region49
    $region48: #{tpu_custom_call.1} parent=1 // pred_region
      %144 = dma.done [#allocation6], 128
    $region49: #{tpu_custom_call.1} parent=1 // pred_fallthru
      _
    // Predicated region
    $region50: #{tpu_custom_call.1} parent=1 // pred_check
      _
    $region51: #{tpu_custom_call.1} parent=1 // pred_check_branch
      %146 = sbr.rel (0) target = $region53
    $region52: #{tpu_custom_call.1} parent=1 // pred_region
      %147 = dma.done [#allocation6], 20480
    $region53: #{tpu_custom_call.1} parent=1 // pred_fallthru
      _
    // Predicated region
    $region54: #{tpu_custom_call.1} parent=1 // pred_check
      _
    $region55: #{tpu_custom_call.1} parent=1 // pred_check_branch
      %149 = sbr.rel (0) target = $region57
    $region56: #{tpu_custom_call.1} parent=1 // pred_region
      %150 = dma.done [#allocation9], 16384
    $region57: #{tpu_custom_call.1} parent=1 // pred_fallthru
      _
    // Predicated region
    $region58: #{tpu_custom_call.1} parent=1 // pred_check
      _
    $region59: #{tpu_custom_call.1} parent=1 // pred_check_branch
      %152 = sbr.rel (0) target = $region61
    $region60: #{tpu_custom_call.1} parent=1 // pred_region
      %153 = dma.done [#allocation9], 4096
    $region61: #{tpu_custom_call.1} parent=1 // pred_fallthru
      _
    // Predicated region
    $region62: #{tpu_custom_call.1} parent=1 // pred_check
      _
    $region63: #{tpu_custom_call.1} parent=1 // pred_check_branch
      %155 = sbr.rel (0) target = $region65
    $region64: #{tpu_custom_call.1} parent=1 // pred_region
      %156 = dma.done [#allocation12], 1024
    $region65: #{tpu_custom_call.1} parent=1 // pred_fallthru
      _
    // Predicated region
    $region66: #{tpu_custom_call.1} parent=1 // pred_check
      _
    $region67: #{tpu_custom_call.1} parent=1 // pred_check_branch
      %158 = sbr.rel (0) target = $region69
    $region68: #{tpu_custom_call.1} parent=1 // pred_region
      %159 = dma.done [#allocation12], 4096
    $region69: #{tpu_custom_call.1} parent=1 // pred_fallthru
      _
    // Predicated region
    $region70: #{tpu_custom_call.1} parent=1 // pred_check
      _
    $region71: #{tpu_custom_call.1} parent=1 // pred_check_branch
      %161 = sbr.rel (0) target = $region73
    $region72: #{tpu_custom_call.1} parent=1 // pred_region
      %162 = dma.done [#allocation15], 16384
    $region73: #{tpu_custom_call.1} parent=1 // pred_fallthru
      _
    // Predicated region
    $region74: #{tpu_custom_call.1} parent=1 // pred_check
      _
    $region75: #{tpu_custom_call.1} parent=1 // pred_check_branch
      %164 = sbr.rel (0) target = $region77
    $region76: #{tpu_custom_call.1} parent=1 // pred_region
      %165 = dma.done [#allocation15], 20480
    $region77: #{tpu_custom_call.1} parent=1 // pred_fallthru
      _
    // Predicated region
    $region78: #{tpu_custom_call.1} parent=1 // pred_check
      _
    $region79: #{tpu_custom_call.1} parent=1 // pred_check_branch
      %167 = sbr.rel (0) target = $region81
    $region80: #{tpu_custom_call.1} parent=1 // pred_region
      %168 = dma.done [#allocation18], 1472
    $region81: #{tpu_custom_call.1} parent=1 // pred_fallthru
      _
    %v170 = vld [vmem:[#allocation2] sm:$0xff]
    %v171 = vld [vmem:[#allocation2 + $0x8] sm:$0xff]
    %v172 = vld [vmem:[#allocation2 + $0x10] sm:$0xff]
    %v173 = vld [vmem:[#allocation2 + $0x18] sm:$0xff]
    %v174 = vld [vmem:[#allocation2 + $0x20] sm:$0xff]
    %v175 = vpack.c.bf16 %v170, %v170
    %v176 = vpack.c.bf16 %v171, %v171
    %v177 = vpack.c.bf16 %v172, %v172
    %v178 = vpack.c.bf16 %v173, %v173
    %v179 = vpack.c.bf16 %v174, %v174
    %v180 = vld [vmem:[#allocation7] sm:$0xff]
    %v181 = vld [vmem:[#allocation7 + $0x8] sm:$0xff]
    %v182 = vld [vmem:[#allocation7 + $0x10] sm:$0xff]
    %v183 = vld [vmem:[#allocation7 + $0x18] sm:$0xff]
    %v184 = vld [vmem:[#allocation7 + $0x20] sm:$0xff]
    %v185 = vld [vmem:[#allocation7 + $0x28] sm:$0xff]
    %v186 = vld [vmem:[#allocation7 + $0x30] sm:$0xff]
    %v187 = vld [vmem:[#allocation7 + $0x38] sm:$0xff]
    %v188 = vld [vmem:[#allocation7 + $0x40] sm:$0xff]
    %v189 = vld [vmem:[#allocation7 + $0x48] sm:$0xff]
    %v190 = vld [vmem:[#allocation7 + $0x50] sm:$0xff]
    %v191 = vld [vmem:[#allocation7 + $0x58] sm:$0xff]
    %v192 = vld [vmem:[#allocation7 + $0x60] sm:$0xff]
    %v193 = vld [vmem:[#allocation7 + $0x68] sm:$0xff]
    %v194 = vld [vmem:[#allocation7 + $0x70] sm:$0xff]
    %v195 = vld [vmem:[#allocation7 + $0x78] sm:$0xff]
    %v196 = vld [vmem:[#allocation7 + $0x80] sm:$0xff]
    %v197 = vld [vmem:[#allocation7 + $0x88] sm:$0xff]
    %v198 = vld [vmem:[#allocation7 + $0x90] sm:$0xff]
    %v199 = vld [vmem:[#allocation7 + $0x98] sm:$0xff]
    %v200 = vld [vmem:[#allocation7 + $0xa0] sm:$0xff]
    %v201 = vld [vmem:[#allocation7 + $0xa8] sm:$0xff]
    %v202 = vld [vmem:[#allocation7 + $0xb0] sm:$0xff]
    %v203 = vld [vmem:[#allocation7 + $0xb8] sm:$0xff]
    %v204 = vld [vmem:[#allocation7 + $0xc0] sm:$0xff]
    %v205 = vld [vmem:[#allocation7 + $0xc8] sm:$0xff]
    %v206 = vld [vmem:[#allocation7 + $0xd0] sm:$0xff]
    %v207 = vld [vmem:[#allocation7 + $0xd8] sm:$0xff]
    %v208 = vld [vmem:[#allocation7 + $0xe0] sm:$0xff]
    %v209 = vld [vmem:[#allocation7 + $0xe8] sm:$0xff]
    %v210 = vld [vmem:[#allocation7 + $0xf0] sm:$0xff]
    %v211 = vld [vmem:[#allocation7 + $0xf8] sm:$0xff]
    %v212 = vld [vmem:[#allocation7 + $0x100] sm:$0xff]
    %v213 = vld [vmem:[#allocation7 + $0x108] sm:$0xff]
    %v214 = vld [vmem:[#allocation7 + $0x110] sm:$0xff]
    %v215 = vld [vmem:[#allocation7 + $0x118] sm:$0xff]
    %v216 = vld [vmem:[#allocation7 + $0x120] sm:$0xff]
    %v217 = vld [vmem:[#allocation7 + $0x128] sm:$0xff]
    %v218 = vld [vmem:[#allocation7 + $0x130] sm:$0xff]
    %v219 = vld [vmem:[#allocation7 + $0x138] sm:$0xff]
    %v220 = vld [vmem:[#allocation7 + $0x140] sm:$0xff]
    %v221 = vld [vmem:[#allocation7 + $0x148] sm:$0xff]
    %v222 = vld [vmem:[#allocation7 + $0x150] sm:$0xff]
    %v223 = vld [vmem:[#allocation7 + $0x158] sm:$0xff]
    %v224 = vld [vmem:[#allocation7 + $0x160] sm:$0xff]
    %v225 = vld [vmem:[#allocation7 + $0x168] sm:$0xff]
    %v226 = vld [vmem:[#allocation7 + $0x170] sm:$0xff]
    %v227 = vld [vmem:[#allocation7 + $0x178] sm:$0xff]
    %v228 = vld [vmem:[#allocation7 + $0x180] sm:$0xff]
    %v229 = vld [vmem:[#allocation7 + $0x188] sm:$0xff]
    %v230 = vld [vmem:[#allocation7 + $0x190] sm:$0xff]
    %v231 = vld [vmem:[#allocation7 + $0x198] sm:$0xff]
    %v232 = vld [vmem:[#allocation7 + $0x1a0] sm:$0xff]
    %v233 = vld [vmem:[#allocation7 + $0x1a8] sm:$0xff]
    %v234 = vld [vmem:[#allocation7 + $0x1b0] sm:$0xff]
    %v235 = vld [vmem:[#allocation7 + $0x1b8] sm:$0xff]
    %v236 = vld [vmem:[#allocation7 + $0x1c0] sm:$0xff]
    %v237 = vld [vmem:[#allocation7 + $0x1c8] sm:$0xff]
    %v238 = vld [vmem:[#allocation7 + $0x1d0] sm:$0xff]
    %v239 = vld [vmem:[#allocation7 + $0x1d8] sm:$0xff]
    %v240 = vld [vmem:[#allocation7 + $0x1e0] sm:$0xff]
    %v241 = vld [vmem:[#allocation7 + $0x1e8] sm:$0xff]
    %v242 = vld [vmem:[#allocation7 + $0x1f0] sm:$0xff]
    %v243 = vld [vmem:[#allocation7 + $0x1f8] sm:$0xff]
    %v244 = vld [vmem:[#allocation7 + $0x200] sm:$0xff]
    %v245 = vld [vmem:[#allocation7 + $0x208] sm:$0xff]
    %v246 = vld [vmem:[#allocation7 + $0x210] sm:$0xff]
    %v247 = vld [vmem:[#allocation7 + $0x218] sm:$0xff]
    %v248 = vld [vmem:[#allocation7 + $0x220] sm:$0xff]
    %v249 = vld [vmem:[#allocation7 + $0x228] sm:$0xff]
    %v250 = vld [vmem:[#allocation7 + $0x230] sm:$0xff]
    %v251 = vld [vmem:[#allocation7 + $0x238] sm:$0xff]
    %v252 = vld [vmem:[#allocation7 + $0x240] sm:$0xff]
    %v253 = vld [vmem:[#allocation7 + $0x248] sm:$0xff]
    %v254 = vld [vmem:[#allocation7 + $0x250] sm:$0xff]
    %v255 = vld [vmem:[#allocation7 + $0x258] sm:$0xff]
    %v256 = vld [vmem:[#allocation7 + $0x260] sm:$0xff]
    %v257 = vld [vmem:[#allocation7 + $0x268] sm:$0xff]
    %v258 = vld [vmem:[#allocation7 + $0x270] sm:$0xff]
    %v259 = vld [vmem:[#allocation7 + $0x278] sm:$0xff]
    %v260 = vld [vmem:[#allocation7 + $0x280] sm:$0xff]
    %v261 = vld [vmem:[#allocation7 + $0x288] sm:$0xff]
    %v262 = vld [vmem:[#allocation7 + $0x290] sm:$0xff]
    %v263 = vld [vmem:[#allocation7 + $0x298] sm:$0xff]
    %v264 = vld [vmem:[#allocation7 + $0x2a0] sm:$0xff]
    %v265 = vld [vmem:[#allocation7 + $0x2a8] sm:$0xff]
    %v266 = vld [vmem:[#allocation7 + $0x2b0] sm:$0xff]
    %v267 = vld [vmem:[#allocation7 + $0x2b8] sm:$0xff]
    %v268 = vld [vmem:[#allocation7 + $0x2c0] sm:$0xff]
    %v269 = vld [vmem:[#allocation7 + $0x2c8] sm:$0xff]
    %v270 = vld [vmem:[#allocation7 + $0x2d0] sm:$0xff]
    %v271 = vld [vmem:[#allocation7 + $0x2d8] sm:$0xff]
    %v272 = vld [vmem:[#allocation7 + $0x2e0] sm:$0xff]
    %v273 = vld [vmem:[#allocation7 + $0x2e8] sm:$0xff]
    %v274 = vld [vmem:[#allocation7 + $0x2f0] sm:$0xff]
    %v275 = vld [vmem:[#allocation7 + $0x2f8] sm:$0xff]
    %v276 = vld [vmem:[#allocation7 + $0x300] sm:$0xff]
    %v277 = vld [vmem:[#allocation7 + $0x308] sm:$0xff]
    %v278 = vld [vmem:[#allocation7 + $0x310] sm:$0xff]
    %v279 = vld [vmem:[#allocation7 + $0x318] sm:$0xff]
    %v280 = vld [vmem:[#allocation7 + $0x320] sm:$0xff]
    %v281 = vld [vmem:[#allocation7 + $0x328] sm:$0xff]
    %v282 = vld [vmem:[#allocation7 + $0x330] sm:$0xff]
    %v283 = vld [vmem:[#allocation7 + $0x338] sm:$0xff]
    %v284 = vld [vmem:[#allocation7 + $0x340] sm:$0xff]
    %v285 = vld [vmem:[#allocation7 + $0x348] sm:$0xff]
    %v286 = vld [vmem:[#allocation7 + $0x350] sm:$0xff]
    %v287 = vld [vmem:[#allocation7 + $0x358] sm:$0xff]
    %v288 = vld [vmem:[#allocation7 + $0x360] sm:$0xff]
    %v289 = vld [vmem:[#allocation7 + $0x368] sm:$0xff]
    %v290 = vld [vmem:[#allocation7 + $0x370] sm:$0xff]
    %v291 = vld [vmem:[#allocation7 + $0x378] sm:$0xff]
    %v292 = vld [vmem:[#allocation7 + $0x380] sm:$0xff]
    %v293 = vld [vmem:[#allocation7 + $0x388] sm:$0xff]
    %v294 = vld [vmem:[#allocation7 + $0x390] sm:$0xff]
    %v295 = vld [vmem:[#allocation7 + $0x398] sm:$0xff]
    %v296 = vld [vmem:[#allocation7 + $0x3a0] sm:$0xff]
    %v297 = vld [vmem:[#allocation7 + $0x3a8] sm:$0xff]
    %v298 = vld [vmem:[#allocation7 + $0x3b0] sm:$0xff]
    %v299 = vld [vmem:[#allocation7 + $0x3b8] sm:$0xff]
    %v300 = vld [vmem:[#allocation7 + $0x3c0] sm:$0xff]
    %v301 = vld [vmem:[#allocation7 + $0x3c8] sm:$0xff]
    %v302 = vld [vmem:[#allocation7 + $0x3d0] sm:$0xff]
    %v303 = vld [vmem:[#allocation7 + $0x3d8] sm:$0xff]
    %v304 = vld [vmem:[#allocation7 + $0x3e0] sm:$0xff]
    %v305 = vld [vmem:[#allocation7 + $0x3e8] sm:$0xff]
    %v306 = vld [vmem:[#allocation7 + $0x3f0] sm:$0xff]
    %v307 = vld [vmem:[#allocation7 + $0x3f8] sm:$0xff]
    %v308 = vld [vmem:[#allocation7 + $0x400] sm:$0xff]
    %v309 = vld [vmem:[#allocation7 + $0x408] sm:$0xff]
    %v310 = vld [vmem:[#allocation7 + $0x410] sm:$0xff]
    %v311 = vld [vmem:[#allocation7 + $0x418] sm:$0xff]
    %v312 = vld [vmem:[#allocation7 + $0x420] sm:$0xff]
    %v313 = vld [vmem:[#allocation7 + $0x428] sm:$0xff]
    %v314 = vld [vmem:[#allocation7 + $0x430] sm:$0xff]
    %v315 = vld [vmem:[#allocation7 + $0x438] sm:$0xff]
    %v316 = vld [vmem:[#allocation7 + $0x440] sm:$0xff]
    %v317 = vld [vmem:[#allocation7 + $0x448] sm:$0xff]
    %v318 = vld [vmem:[#allocation7 + $0x450] sm:$0xff]
    %v319 = vld [vmem:[#allocation7 + $0x458] sm:$0xff]
    %v320 = vld [vmem:[#allocation7 + $0x460] sm:$0xff]
    %v321 = vld [vmem:[#allocation7 + $0x468] sm:$0xff]
    %v322 = vld [vmem:[#allocation7 + $0x470] sm:$0xff]
    %v323 = vld [vmem:[#allocation7 + $0x478] sm:$0xff]
    %v324 = vld [vmem:[#allocation7 + $0x480] sm:$0xff]
    %v325 = vld [vmem:[#allocation7 + $0x488] sm:$0xff]
    %v326 = vld [vmem:[#allocation7 + $0x490] sm:$0xff]
    %v327 = vld [vmem:[#allocation7 + $0x498] sm:$0xff]
    %v328 = vld [vmem:[#allocation7 + $0x4a0] sm:$0xff]
    %v329 = vld [vmem:[#allocation7 + $0x4a8] sm:$0xff]
    %v330 = vld [vmem:[#allocation7 + $0x4b0] sm:$0xff]
    %v331 = vld [vmem:[#allocation7 + $0x4b8] sm:$0xff]
    %v332 = vld [vmem:[#allocation7 + $0x4c0] sm:$0xff]
    %v333 = vld [vmem:[#allocation7 + $0x4c8] sm:$0xff]
    %v334 = vld [vmem:[#allocation7 + $0x4d0] sm:$0xff]
    %v335 = vld [vmem:[#allocation7 + $0x4d8] sm:$0xff]
    %v336 = vld [vmem:[#allocation7 + $0x4e0] sm:$0xff]
    %v337 = vld [vmem:[#allocation7 + $0x4e8] sm:$0xff]
    %v338 = vld [vmem:[#allocation7 + $0x4f0] sm:$0xff]
    %v339 = vld [vmem:[#allocation7 + $0x4f8] sm:$0xff]
    %v340 = vunpack.c.l.s8.bf16 %v180
    %v341 = vunpack.c.l.s8.bf16 %v181
    %v342 = vunpack.c.l.s8.bf16 %v182
    %v343 = vunpack.c.l.s8.bf16 %v183
    %v344 = vunpack.c.l.s8.bf16 %v184
    %v345 = vunpack.c.l.s8.bf16 %v185
    %v346 = vunpack.c.l.s8.bf16 %v186
    %v347 = vunpack.c.l.s8.bf16 %v187
    %v348 = vunpack.c.h.s8.bf16 %v180
    %v349 = vunpack.c.h.s8.bf16 %v181
    %v350 = vunpack.c.h.s8.bf16 %v182
    %v351 = vunpack.c.h.s8.bf16 %v183
    %v352 = vunpack.c.h.s8.bf16 %v184
    %v353 = vunpack.c.h.s8.bf16 %v185
    %v354 = vunpack.c.h.s8.bf16 %v186
    %v355 = vunpack.c.h.s8.bf16 %v187
    %v356 = vunpack.c.l.s8.bf16 %v188
    %v357 = vunpack.c.l.s8.bf16 %v189
    %v358 = vunpack.c.l.s8.bf16 %v190
    %v359 = vunpack.c.l.s8.bf16 %v191
    %v360 = vunpack.c.l.s8.bf16 %v192
    %v361 = vunpack.c.l.s8.bf16 %v193
    %v362 = vunpack.c.l.s8.bf16 %v194
    %v363 = vunpack.c.l.s8.bf16 %v195
    %v364 = vunpack.c.h.s8.bf16 %v188
    %v365 = vunpack.c.h.s8.bf16 %v189
    %v366 = vunpack.c.h.s8.bf16 %v190
    %v367 = vunpack.c.h.s8.bf16 %v191
    %v368 = vunpack.c.h.s8.bf16 %v192
    %v369 = vunpack.c.h.s8.bf16 %v193
    %v370 = vunpack.c.h.s8.bf16 %v194
    %v371 = vunpack.c.h.s8.bf16 %v195
    %v372 = vunpack.c.l.s8.bf16 %v196
    %v373 = vunpack.c.l.s8.bf16 %v197
    %v374 = vunpack.c.l.s8.bf16 %v198
    %v375 = vunpack.c.l.s8.bf16 %v199
    %v376 = vunpack.c.l.s8.bf16 %v200
    %v377 = vunpack.c.l.s8.bf16 %v201
    %v378 = vunpack.c.l.s8.bf16 %v202
    %v379 = vunpack.c.l.s8.bf16 %v203
    %v380 = vunpack.c.h.s8.bf16 %v196
    %v381 = vunpack.c.h.s8.bf16 %v197
    %v382 = vunpack.c.h.s8.bf16 %v198
    %v383 = vunpack.c.h.s8.bf16 %v199
    %v384 = vunpack.c.h.s8.bf16 %v200
    %v385 = vunpack.c.h.s8.bf16 %v201
    %v386 = vunpack.c.h.s8.bf16 %v202
    %v387 = vunpack.c.h.s8.bf16 %v203
    %v388 = vunpack.c.l.s8.bf16 %v204
    %v389 = vunpack.c.l.s8.bf16 %v205
    %v390 = vunpack.c.l.s8.bf16 %v206
    %v391 = vunpack.c.l.s8.bf16 %v207
    %v392 = vunpack.c.l.s8.bf16 %v208
    %v393 = vunpack.c.l.s8.bf16 %v209
    %v394 = vunpack.c.l.s8.bf16 %v210
    %v395 = vunpack.c.l.s8.bf16 %v211
    %v396 = vunpack.c.h.s8.bf16 %v204
    %v397 = vunpack.c.h.s8.bf16 %v205
    %v398 = vunpack.c.h.s8.bf16 %v206
    %v399 = vunpack.c.h.s8.bf16 %v207
    %v400 = vunpack.c.h.s8.bf16 %v208
    %v401 = vunpack.c.h.s8.bf16 %v209
    %v402 = vunpack.c.h.s8.bf16 %v210
    %v403 = vunpack.c.h.s8.bf16 %v211
    %v404 = vunpack.c.l.s8.bf16 %v212
    %v405 = vunpack.c.l.s8.bf16 %v213
    %v406 = vunpack.c.l.s8.bf16 %v214
    %v407 = vunpack.c.l.s8.bf16 %v215
    %v408 = vunpack.c.l.s8.bf16 %v216
    %v409 = vunpack.c.l.s8.bf16 %v217
    %v410 = vunpack.c.l.s8.bf16 %v218
    %v411 = vunpack.c.l.s8.bf16 %v219
    %v412 = vunpack.c.h.s8.bf16 %v212
    %v413 = vunpack.c.h.s8.bf16 %v213
    %v414 = vunpack.c.h.s8.bf16 %v214
    %v415 = vunpack.c.h.s8.bf16 %v215
    %v416 = vunpack.c.h.s8.bf16 %v216
    %v417 = vunpack.c.h.s8.bf16 %v217
    %v418 = vunpack.c.h.s8.bf16 %v218
    %v419 = vunpack.c.h.s8.bf16 %v219
    %v420 = vunpack.c.l.s8.bf16 %v220
    %v421 = vunpack.c.l.s8.bf16 %v221
    %v422 = vunpack.c.l.s8.bf16 %v222
    %v423 = vunpack.c.l.s8.bf16 %v223
    %v424 = vunpack.c.l.s8.bf16 %v224
    %v425 = vunpack.c.l.s8.bf16 %v225
    %v426 = vunpack.c.l.s8.bf16 %v226
    %v427 = vunpack.c.l.s8.bf16 %v227
    %v428 = vunpack.c.h.s8.bf16 %v220
    %v429 = vunpack.c.h.s8.bf16 %v221
    %v430 = vunpack.c.h.s8.bf16 %v222
    %v431 = vunpack.c.h.s8.bf16 %v223
    %v432 = vunpack.c.h.s8.bf16 %v224
    %v433 = vunpack.c.h.s8.bf16 %v225
    %v434 = vunpack.c.h.s8.bf16 %v226
    %v435 = vunpack.c.h.s8.bf16 %v227
    %v436 = vunpack.c.l.s8.bf16 %v228
    %v437 = vunpack.c.l.s8.bf16 %v229
    %v438 = vunpack.c.l.s8.bf16 %v230
    %v439 = vunpack.c.l.s8.bf16 %v231
    %v440 = vunpack.c.l.s8.bf16 %v232
    %v441 = vunpack.c.l.s8.bf16 %v233
    %v442 = vunpack.c.l.s8.bf16 %v234
    %v443 = vunpack.c.l.s8.bf16 %v235
    %v444 = vunpack.c.h.s8.bf16 %v228
    %v445 = vunpack.c.h.s8.bf16 %v229
    %v446 = vunpack.c.h.s8.bf16 %v230
    %v447 = vunpack.c.h.s8.bf16 %v231
    %v448 = vunpack.c.h.s8.bf16 %v232
    %v449 = vunpack.c.h.s8.bf16 %v233
    %v450 = vunpack.c.h.s8.bf16 %v234
    %v451 = vunpack.c.h.s8.bf16 %v235
    %v452 = vunpack.c.l.s8.bf16 %v236
    %v453 = vunpack.c.l.s8.bf16 %v237
    %v454 = vunpack.c.l.s8.bf16 %v238
    %v455 = vunpack.c.l.s8.bf16 %v239
    %v456 = vunpack.c.l.s8.bf16 %v240
    %v457 = vunpack.c.l.s8.bf16 %v241
    %v458 = vunpack.c.l.s8.bf16 %v242
    %v459 = vunpack.c.l.s8.bf16 %v243
    %v460 = vunpack.c.h.s8.bf16 %v236
    %v461 = vunpack.c.h.s8.bf16 %v237
    %v462 = vunpack.c.h.s8.bf16 %v238
    %v463 = vunpack.c.h.s8.bf16 %v239
    %v464 = vunpack.c.h.s8.bf16 %v240
    %v465 = vunpack.c.h.s8.bf16 %v241
    %v466 = vunpack.c.h.s8.bf16 %v242
    %v467 = vunpack.c.h.s8.bf16 %v243
    %v468 = vunpack.c.l.s8.bf16 %v244
    %v469 = vunpack.c.l.s8.bf16 %v245
    %v470 = vunpack.c.l.s8.bf16 %v246
    %v471 = vunpack.c.l.s8.bf16 %v247
    %v472 = vunpack.c.l.s8.bf16 %v248
    %v473 = vunpack.c.l.s8.bf16 %v249
    %v474 = vunpack.c.l.s8.bf16 %v250
    %v475 = vunpack.c.l.s8.bf16 %v251
    %v476 = vunpack.c.h.s8.bf16 %v244
    %v477 = vunpack.c.h.s8.bf16 %v245
    %v478 = vunpack.c.h.s8.bf16 %v246
    %v479 = vunpack.c.h.s8.bf16 %v247
    %v480 = vunpack.c.h.s8.bf16 %v248
    %v481 = vunpack.c.h.s8.bf16 %v249
    %v482 = vunpack.c.h.s8.bf16 %v250
    %v483 = vunpack.c.h.s8.bf16 %v251
    %v484 = vunpack.c.l.s8.bf16 %v252
    %v485 = vunpack.c.l.s8.bf16 %v253
    %v486 = vunpack.c.l.s8.bf16 %v254
    %v487 = vunpack.c.l.s8.bf16 %v255
    %v488 = vunpack.c.l.s8.bf16 %v256
    %v489 = vunpack.c.l.s8.bf16 %v257
    %v490 = vunpack.c.l.s8.bf16 %v258
    %v491 = vunpack.c.l.s8.bf16 %v259
    %v492 = vunpack.c.h.s8.bf16 %v252
    %v493 = vunpack.c.h.s8.bf16 %v253
    %v494 = vunpack.c.h.s8.bf16 %v254
    %v495 = vunpack.c.h.s8.bf16 %v255
    %v496 = vunpack.c.h.s8.bf16 %v256
    %v497 = vunpack.c.h.s8.bf16 %v257
    %v498 = vunpack.c.h.s8.bf16 %v258
    %v499 = vunpack.c.h.s8.bf16 %v259
    %v500 = vunpack.c.l.s8.bf16 %v260
    %v501 = vunpack.c.l.s8.bf16 %v261
    %v502 = vunpack.c.l.s8.bf16 %v262
    %v503 = vunpack.c.l.s8.bf16 %v263
    %v504 = vunpack.c.l.s8.bf16 %v264
    %v505 = vunpack.c.l.s8.bf16 %v265
    %v506 = vunpack.c.l.s8.bf16 %v266
    %v507 = vunpack.c.l.s8.bf16 %v267
    %v508 = vunpack.c.h.s8.bf16 %v260
    %v509 = vunpack.c.h.s8.bf16 %v261
    %v510 = vunpack.c.h.s8.bf16 %v262
    %v511 = vunpack.c.h.s8.bf16 %v263
    %v512 = vunpack.c.h.s8.bf16 %v264
    %v513 = vunpack.c.h.s8.bf16 %v265
    %v514 = vunpack.c.h.s8.bf16 %v266
    %v515 = vunpack.c.h.s8.bf16 %v267
    %v516 = vunpack.c.l.s8.bf16 %v268
    %v517 = vunpack.c.l.s8.bf16 %v269
    %v518 = vunpack.c.l.s8.bf16 %v270
    %v519 = vunpack.c.l.s8.bf16 %v271
    %v520 = vunpack.c.l.s8.bf16 %v272
    %v521 = vunpack.c.l.s8.bf16 %v273
    %v522 = vunpack.c.l.s8.bf16 %v274
    %v523 = vunpack.c.l.s8.bf16 %v275
    %v524 = vunpack.c.h.s8.bf16 %v268
    %v525 = vunpack.c.h.s8.bf16 %v269
    %v526 = vunpack.c.h.s8.bf16 %v270
    %v527 = vunpack.c.h.s8.bf16 %v271
    %v528 = vunpack.c.h.s8.bf16 %v272
    %v529 = vunpack.c.h.s8.bf16 %v273
    %v530 = vunpack.c.h.s8.bf16 %v274
    %v531 = vunpack.c.h.s8.bf16 %v275
    %v532 = vunpack.c.l.s8.bf16 %v276
    %v533 = vunpack.c.l.s8.bf16 %v277
    %v534 = vunpack.c.l.s8.bf16 %v278
    %v535 = vunpack.c.l.s8.bf16 %v279
    %v536 = vunpack.c.l.s8.bf16 %v280
    %v537 = vunpack.c.l.s8.bf16 %v281
    %v538 = vunpack.c.l.s8.bf16 %v282
    %v539 = vunpack.c.l.s8.bf16 %v283
    %v540 = vunpack.c.h.s8.bf16 %v276
    %v541 = vunpack.c.h.s8.bf16 %v277
    %v542 = vunpack.c.h.s8.bf16 %v278
    %v543 = vunpack.c.h.s8.bf16 %v279
    %v544 = vunpack.c.h.s8.bf16 %v280
    %v545 = vunpack.c.h.s8.bf16 %v281
    %v546 = vunpack.c.h.s8.bf16 %v282
    %v547 = vunpack.c.h.s8.bf16 %v283
    %v548 = vunpack.c.l.s8.bf16 %v284
    %v549 = vunpack.c.l.s8.bf16 %v285
    %v550 = vunpack.c.l.s8.bf16 %v286
    %v551 = vunpack.c.l.s8.bf16 %v287
    %v552 = vunpack.c.l.s8.bf16 %v288
    %v553 = vunpack.c.l.s8.bf16 %v289
    %v554 = vunpack.c.l.s8.bf16 %v290
    %v555 = vunpack.c.l.s8.bf16 %v291
    %v556 = vunpack.c.h.s8.bf16 %v284
    %v557 = vunpack.c.h.s8.bf16 %v285
    %v558 = vunpack.c.h.s8.bf16 %v286
    %v559 = vunpack.c.h.s8.bf16 %v287
    %v560 = vunpack.c.h.s8.bf16 %v288
    %v561 = vunpack.c.h.s8.bf16 %v289
    %v562 = vunpack.c.h.s8.bf16 %v290
    %v563 = vunpack.c.h.s8.bf16 %v291
    %v564 = vunpack.c.l.s8.bf16 %v292
    %v565 = vunpack.c.l.s8.bf16 %v293
    %v566 = vunpack.c.l.s8.bf16 %v294
    %v567 = vunpack.c.l.s8.bf16 %v295
    %v568 = vunpack.c.l.s8.bf16 %v296
    %v569 = vunpack.c.l.s8.bf16 %v297
    %v570 = vunpack.c.l.s8.bf16 %v298
    %v571 = vunpack.c.l.s8.bf16 %v299
    %v572 = vunpack.c.h.s8.bf16 %v292
    %v573 = vunpack.c.h.s8.bf16 %v293
    %v574 = vunpack.c.h.s8.bf16 %v294
    %v575 = vunpack.c.h.s8.bf16 %v295
    %v576 = vunpack.c.h.s8.bf16 %v296
    %v577 = vunpack.c.h.s8.bf16 %v297
    %v578 = vunpack.c.h.s8.bf16 %v298
    %v579 = vunpack.c.h.s8.bf16 %v299
    %v580 = vunpack.c.l.s8.bf16 %v300
    %v581 = vunpack.c.l.s8.bf16 %v301
    %v582 = vunpack.c.l.s8.bf16 %v302
    %v583 = vunpack.c.l.s8.bf16 %v303
    %v584 = vunpack.c.l.s8.bf16 %v304
    %v585 = vunpack.c.l.s8.bf16 %v305
    %v586 = vunpack.c.l.s8.bf16 %v306
    %v587 = vunpack.c.l.s8.bf16 %v307
    %v588 = vunpack.c.h.s8.bf16 %v300
    %v589 = vunpack.c.h.s8.bf16 %v301
    %v590 = vunpack.c.h.s8.bf16 %v302
    %v591 = vunpack.c.h.s8.bf16 %v303
    %v592 = vunpack.c.h.s8.bf16 %v304
    %v593 = vunpack.c.h.s8.bf16 %v305
    %v594 = vunpack.c.h.s8.bf16 %v306
    %v595 = vunpack.c.h.s8.bf16 %v307
    %v596 = vunpack.c.l.s8.bf16 %v308
    %v597 = vunpack.c.l.s8.bf16 %v309
    %v598 = vunpack.c.l.s8.bf16 %v310
    %v599 = vunpack.c.l.s8.bf16 %v311
    %v600 = vunpack.c.l.s8.bf16 %v312
    %v601 = vunpack.c.l.s8.bf16 %v313
    %v602 = vunpack.c.l.s8.bf16 %v314
    %v603 = vunpack.c.l.s8.bf16 %v315
    %v604 = vunpack.c.h.s8.bf16 %v308
    %v605 = vunpack.c.h.s8.bf16 %v309
    %v606 = vunpack.c.h.s8.bf16 %v310
    %v607 = vunpack.c.h.s8.bf16 %v311
    %v608 = vunpack.c.h.s8.bf16 %v312
    %v609 = vunpack.c.h.s8.bf16 %v313
    %v610 = vunpack.c.h.s8.bf16 %v314
    %v611 = vunpack.c.h.s8.bf16 %v315
    %v612 = vunpack.c.l.s8.bf16 %v316
    %v613 = vunpack.c.l.s8.bf16 %v317
    %v614 = vunpack.c.l.s8.bf16 %v318
    %v615 = vunpack.c.l.s8.bf16 %v319
    %v616 = vunpack.c.l.s8.bf16 %v320
    %v617 = vunpack.c.l.s8.bf16 %v321
    %v618 = vunpack.c.l.s8.bf16 %v322
    %v619 = vunpack.c.l.s8.bf16 %v323
    %v620 = vunpack.c.h.s8.bf16 %v316
    %v621 = vunpack.c.h.s8.bf16 %v317
    %v622 = vunpack.c.h.s8.bf16 %v318
    %v623 = vunpack.c.h.s8.bf16 %v319
    %v624 = vunpack.c.h.s8.bf16 %v320
    %v625 = vunpack.c.h.s8.bf16 %v321
    %v626 = vunpack.c.h.s8.bf16 %v322
    %v627 = vunpack.c.h.s8.bf16 %v323
    %v628 = vunpack.c.l.s8.bf16 %v324
    %v629 = vunpack.c.l.s8.bf16 %v325
    %v630 = vunpack.c.l.s8.bf16 %v326
    %v631 = vunpack.c.l.s8.bf16 %v327
    %v632 = vunpack.c.l.s8.bf16 %v328
    %v633 = vunpack.c.l.s8.bf16 %v329
    %v634 = vunpack.c.l.s8.bf16 %v330
    %v635 = vunpack.c.l.s8.bf16 %v331
    %v636 = vunpack.c.h.s8.bf16 %v324
    %v637 = vunpack.c.h.s8.bf16 %v325
    %v638 = vunpack.c.h.s8.bf16 %v326
    %v639 = vunpack.c.h.s8.bf16 %v327
    %v640 = vunpack.c.h.s8.bf16 %v328
    %v641 = vunpack.c.h.s8.bf16 %v329
    %v642 = vunpack.c.h.s8.bf16 %v330
    %v643 = vunpack.c.h.s8.bf16 %v331
    %v644 = vunpack.c.l.s8.bf16 %v332
    %v645 = vunpack.c.l.s8.bf16 %v333
    %v646 = vunpack.c.l.s8.bf16 %v334
    %v647 = vunpack.c.l.s8.bf16 %v335
    %v648 = vunpack.c.l.s8.bf16 %v336
    %v649 = vunpack.c.l.s8.bf16 %v337
    %v650 = vunpack.c.l.s8.bf16 %v338
    %v651 = vunpack.c.l.s8.bf16 %v339
    %v652 = vunpack.c.h.s8.bf16 %v332
    %v653 = vunpack.c.h.s8.bf16 %v333
    %v654 = vunpack.c.h.s8.bf16 %v334
    %v655 = vunpack.c.h.s8.bf16 %v335
    %v656 = vunpack.c.h.s8.bf16 %v336
    %v657 = vunpack.c.h.s8.bf16 %v337
    %v658 = vunpack.c.h.s8.bf16 %v338
    %v659 = vunpack.c.h.s8.bf16 %v339
    %660 = vmatprep.subr.bf16.mxu0 %v341
    %661 = vmatpush1.bf16.msra.mxu0 %v340
    %662 = vmatprep.subr.bf16.mxu0 %v349
    %663 = vmatpush1.bf16.msra.mxu0 %v348
    %664 = vmatprep.subr.bf16.mxu0 %v357
    %665 = vmatpush1.bf16.msra.mxu0 %v356
    %666 = vmatprep.subr.bf16.mxu0 %v365
    %667 = vmatpush1.bf16.msra.mxu0 %v364
    %668 = vmatprep.subr.bf16.mxu0 %v373
    %669 = vmatpush1.bf16.msra.mxu0 %v372
    %670 = vmatprep.subr.bf16.mxu0 %v381
    %671 = vmatpush1.bf16.msra.mxu0 %v380
    %672 = vmatprep.subr.bf16.mxu0 %v389
    %673 = vmatpush1.bf16.msra.mxu0 %v388
    %674 = vmatprep.subr.bf16.mxu0 %v397
    %675 = vmatpush1.bf16.msra.mxu0 %v396
    %676 = vmatprep.subr.bf16.mxu0 %v405
    %677 = vmatpush1.bf16.msra.mxu0 %v404
    %678 = vmatprep.subr.bf16.mxu0 %v413
    %679 = vmatpush1.bf16.msra.mxu0 %v412
    %680 = vmatprep.subr.bf16.mxu0 %v421
    %681 = vmatpush1.bf16.msra.mxu0 %v420
    %682 = vmatprep.subr.bf16.mxu0 %v429
    %683 = vmatpush1.bf16.msra.mxu0 %v428
    %684 = vmatprep.subr.bf16.mxu0 %v437
    %685 = vmatpush1.bf16.msra.mxu0 %v436
    %686 = vmatprep.subr.bf16.mxu0 %v445
    %687 = vmatpush1.bf16.msra.mxu0 %v444
    %688 = vmatprep.subr.bf16.mxu0 %v453
    %689 = vmatpush1.bf16.msra.mxu0 %v452
    %690 = vmatprep.subr.bf16.mxu0 %v461
    %691 = vmatpush1.bf16.msra.mxu0 %v460
    %692 = vmatprep.mubr.bf16.mxu0 %v176
    %693 = vmatmul.mubr.bf16.gmra.mrb[0].mxu0 %v175
    %v694 = vpop.f32.mrb[0].mxu0
    %v695 = vadd.f32 0.0, %v694
    %v696 = vpop.f32.mrb[0].mxu0
    %v697 = vadd.f32 0.0, %v696
    %v698 = vpop.f32.mrb[0].mxu0
    %v699 = vpop.f32.mrb[0].mxu0
    %700 = vdwg.mxu0
    %701 = vmatprep.subr.bf16.mxu0 %v469
    %702 = vmatpush1.bf16.msra.mxu0 %v468
    %703 = vmatprep.subr.bf16.mxu0 %v477
    %704 = vmatpush1.bf16.msra.mxu0 %v476
    %705 = vmatprep.subr.bf16.mxu0 %v485
    %706 = vmatpush1.bf16.msra.mxu0 %v484
    %707 = vmatprep.subr.bf16.mxu0 %v493
    %708 = vmatpush1.bf16.msra.mxu0 %v492
    %709 = vmatprep.subr.bf16.mxu0 %v501
    %710 = vmatpush1.bf16.msra.mxu0 %v500
    %711 = vmatprep.subr.bf16.mxu0 %v509
    %712 = vmatpush1.bf16.msra.mxu0 %v508
    %713 = vmatprep.subr.bf16.mxu0 %v517
    %714 = vmatpush1.bf16.msra.mxu0 %v516
    %715 = vmatprep.subr.bf16.mxu0 %v525
    %716 = vmatpush1.bf16.msra.mxu0 %v524
    %717 = vmatprep.subr.bf16.mxu0 %v533
    %718 = vmatpush1.bf16.msra.mxu0 %v532
    %719 = vmatprep.subr.bf16.mxu0 %v541
    %720 = vmatpush1.bf16.msra.mxu0 %v540
    %721 = vmatprep.subr.bf16.mxu0 %v549
    %722 = vmatpush1.bf16.msra.mxu0 %v548
    %723 = vmatprep.subr.bf16.mxu0 %v557
    %724 = vmatpush1.bf16.msra.mxu0 %v556
    %725 = vmatprep.subr.bf16.mxu0 %v565
    %726 = vmatpush1.bf16.msra.mxu0 %v564
    %727 = vmatprep.subr.bf16.mxu0 %v573
    %728 = vmatpush1.bf16.msra.mxu0 %v572
    %729 = vmatprep.subr.bf16.mxu0 %v581
    %730 = vmatpush1.bf16.msra.mxu0 %v580
    %731 = vmatprep.subr.bf16.mxu0 %v589
    %732 = vmatpush1.bf16.msra.mxu0 %v588
    %733 = vmatprep.mubr.bf16.mxu0 %v178
    %734 = vmatmul.mubr.bf16.gmra.mrb[0].mxu0 %v177
    %v735 = vpop.f32.mrb[0].mxu0
    %v736 = vadd.f32 %v695, %v735
    %v737 = vpop.f32.mrb[0].mxu0
    %v738 = vadd.f32 %v697, %v737
    %v739 = vpop.f32.mrb[0].mxu0
    %v740 = vpop.f32.mrb[0].mxu0
    %741 = vdwg.mxu0
    %742 = vmatprep.subr.bf16.mxu0 %v597
    %743 = vmatpush1.bf16.msra.mxu0 %v596
    %744 = vmatprep.subr.bf16.mxu0 %v605
    %745 = vmatpush1.bf16.msra.mxu0 %v604
    %746 = vmatprep.subr.bf16.mxu0 %v613
    %747 = vmatpush1.bf16.msra.mxu0 %v612
    %748 = vmatprep.subr.bf16.mxu0 %v621
    %749 = vmatpush1.bf16.msra.mxu0 %v620
    %750 = vmatprep.subr.bf16.mxu0 %v629
    %751 = vmatpush1.bf16.msra.mxu0 %v628
    %752 = vmatprep.subr.bf16.mxu0 %v637
    %753 = vmatpush1.bf16.msra.mxu0 %v636
    %754 = vmatprep.subr.bf16.mxu0 %v645
    %755 = vmatpush1.bf16.msra.mxu0 %v644
    %756 = vmatprep.subr.bf16.mxu0 %v653
    %757 = vmatpush1.bf16.msra.mxu0 %v652
    %758 = vmatprep.subr.bf16.mxu0 0
    %759 = vmatpush1.bf16.msra.mxu0 0
    %760 = vmatprep.subr.bf16.mxu0 0
    %761 = vmatpush1.bf16.msra.mxu0 0
    %762 = vmatprep.subr.bf16.mxu0 0
    %763 = vmatpush1.bf16.msra.mxu0 0
    %764 = vmatprep.subr.bf16.mxu0 0
    %765 = vmatpush1.bf16.msra.mxu0 0
    %766 = vmatprep.subr.bf16.mxu0 0
    %767 = vmatpush1.bf16.msra.mxu0 0
    %768 = vmatprep.subr.bf16.mxu0 0
    %769 = vmatpush1.bf16.msra.mxu0 0
    %770 = vmatprep.subr.bf16.mxu0 0
    %771 = vmatpush1.bf16.msra.mxu0 0
    %772 = vmatprep.subr.bf16.mxu0 0
    %773 = vmatpush1.bf16.msra.mxu0 0
    %774 = vmatprep.mubr.bf16.mxu0 0
    %775 = vmatmul.mubr.bf16.gmra.mrb[0].mxu0 %v179
    %v776 = vpop.f32.mrb[0].mxu0
    %v777 = vadd.f32 %v736, %v776
    %v778 = vpop.f32.mrb[0].mxu0
    %v779 = vadd.f32 %v738, %v778
    %v780 = vpop.f32.mrb[0].mxu0
    %v781 = vpop.f32.mrb[0].mxu0
    %782 = vdwg.mxu0
    %783 = vmatprep.subr.bf16.mxu0 %v343
    %784 = vmatpush1.bf16.msra.mxu0 %v342
    %785 = vmatprep.subr.bf16.mxu0 %v351
    %786 = vmatpush1.bf16.msra.mxu0 %v350
    %787 = vmatprep.subr.bf16.mxu0 %v359
    %788 = vmatpush1.bf16.msra.mxu0 %v358
    %789 = vmatprep.subr.bf16.mxu0 %v367
    %790 = vmatpush1.bf16.msra.mxu0 %v366
    %791 = vmatprep.subr.bf16.mxu0 %v375
    %792 = vmatpush1.bf16.msra.mxu0 %v374
    %793 = vmatprep.subr.bf16.mxu0 %v383
    %794 = vmatpush1.bf16.msra.mxu0 %v382
    %795 = vmatprep.subr.bf16.mxu0 %v391
    %796 = vmatpush1.bf16.msra.mxu0 %v390
    %797 = vmatprep.subr.bf16.mxu0 %v399
    %798 = vmatpush1.bf16.msra.mxu0 %v398
    %799 = vmatprep.subr.bf16.mxu0 %v407
    %800 = vmatpush1.bf16.msra.mxu0 %v406
    %801 = vmatprep.subr.bf16.mxu0 %v415
    %802 = vmatpush1.bf16.msra.mxu0 %v414
    %803 = vmatprep.subr.bf16.mxu0 %v423
    %804 = vmatpush1.bf16.msra.mxu0 %v422
    %805 = vmatprep.subr.bf16.mxu0 %v431
    %806 = vmatpush1.bf16.msra.mxu0 %v430
    %807 = vmatprep.subr.bf16.mxu0 %v439
    %808 = vmatpush1.bf16.msra.mxu0 %v438
    %809 = vmatprep.subr.bf16.mxu0 %v447
    %810 = vmatpush1.bf16.msra.mxu0 %v446
    %811 = vmatprep.subr.bf16.mxu0 %v455
    %812 = vmatpush1.bf16.msra.mxu0 %v454
    %813 = vmatprep.subr.bf16.mxu0 %v463
    %814 = vmatpush1.bf16.msra.mxu0 %v462
    %815 = vmatprep.mubr.bf16.mxu0 %v176
    %816 = vmatmul.mubr.bf16.gmra.mrb[0].mxu0 %v175
    %v817 = vpop.f32.mrb[0].mxu0
    %v818 = vadd.f32 0.0, %v817
    %v819 = vpop.f32.mrb[0].mxu0
    %v820 = vadd.f32 0.0, %v819
    %v821 = vpop.f32.mrb[0].mxu0
    %v822 = vpop.f32.mrb[0].mxu0
    %823 = vdwg.mxu0
    %824 = vmatprep.subr.bf16.mxu0 %v471
    %825 = vmatpush1.bf16.msra.mxu0 %v470
    %826 = vmatprep.subr.bf16.mxu0 %v479
    %827 = vmatpush1.bf16.msra.mxu0 %v478
    %828 = vmatprep.subr.bf16.mxu0 %v487
    %829 = vmatpush1.bf16.msra.mxu0 %v486
    %830 = vmatprep.subr.bf16.mxu0 %v495
    %831 = vmatpush1.bf16.msra.mxu0 %v494
    %832 = vmatprep.subr.bf16.mxu0 %v503
    %833 = vmatpush1.bf16.msra.mxu0 %v502
    %834 = vmatprep.subr.bf16.mxu0 %v511
    %835 = vmatpush1.bf16.msra.mxu0 %v510
    %836 = vmatprep.subr.bf16.mxu0 %v519
    %837 = vmatpush1.bf16.msra.mxu0 %v518
    %838 = vmatprep.subr.bf16.mxu0 %v527
    %839 = vmatpush1.bf16.msra.mxu0 %v526
    %840 = vmatprep.subr.bf16.mxu0 %v535
    %841 = vmatpush1.bf16.msra.mxu0 %v534
    %842 = vmatprep.subr.bf16.mxu0 %v543
    %843 = vmatpush1.bf16.msra.mxu0 %v542
    %844 = vmatprep.subr.bf16.mxu0 %v551
    %845 = vmatpush1.bf16.msra.mxu0 %v550
    %846 = vmatprep.subr.bf16.mxu0 %v559
    %847 = vmatpush1.bf16.msra.mxu0 %v558
    %848 = vmatprep.subr.bf16.mxu0 %v567
    %849 = vmatpush1.bf16.msra.mxu0 %v566
    %850 = vmatprep.subr.bf16.mxu0 %v575
    %851 = vmatpush1.bf16.msra.mxu0 %v574
    %852 = vmatprep.subr.bf16.mxu0 %v583
    %853 = vmatpush1.bf16.msra.mxu0 %v582
    %854 = vmatprep.subr.bf16.mxu0 %v591
    %855 = vmatpush1.bf16.msra.mxu0 %v590
    %856 = vmatprep.mubr.bf16.mxu0 %v178
    %857 = vmatmul.mubr.bf16.gmra.mrb[0].mxu0 %v177
    %v858 = vpop.f32.mrb[0].mxu0
    %v859 = vadd.f32 %v818, %v858
    %v860 = vpop.f32.mrb[0].mxu0
    %v861 = vadd.f32 %v820, %v860
    %v862 = vpop.f32.mrb[0].mxu0
    %v863 = vpop.f32.mrb[0].mxu0
    %864 = vdwg.mxu0
    %865 = vmatprep.subr.bf16.mxu0 %v599
    %866 = vmatpush1.bf16.msra.mxu0 %v598
    %867 = vmatprep.subr.bf16.mxu0 %v607
    %868 = vmatpush1.bf16.msra.mxu0 %v606
    %869 = vmatprep.subr.bf16.mxu0 %v615
    %870 = vmatpush1.bf16.msra.mxu0 %v614
    %871 = vmatprep.subr.bf16.mxu0 %v623
    %872 = vmatpush1.bf16.msra.mxu0 %v622
    %873 = vmatprep.subr.bf16.mxu0 %v631
    %874 = vmatpush1.bf16.msra.mxu0 %v630
    %875 = vmatprep.subr.bf16.mxu0 %v639
    %876 = vmatpush1.bf16.msra.mxu0 %v638
    %877 = vmatprep.subr.bf16.mxu0 %v647
    %878 = vmatpush1.bf16.msra.mxu0 %v646
    %879 = vmatprep.subr.bf16.mxu0 %v655
    %880 = vmatpush1.bf16.msra.mxu0 %v654
    %881 = vmatprep.subr.bf16.mxu0 0
    %882 = vmatpush1.bf16.msra.mxu0 0
    %883 = vmatprep.subr.bf16.mxu0 0
    %884 = vmatpush1.bf16.msra.mxu0 0
    %885 = vmatprep.subr.bf16.mxu0 0
    %886 = vmatpush1.bf16.msra.mxu0 0
    %887 = vmatprep.subr.bf16.mxu0 0
    %888 = vmatpush1.bf16.msra.mxu0 0
    %889 = vmatprep.subr.bf16.mxu0 0
    %890 = vmatpush1.bf16.msra.mxu0 0
    %891 = vmatprep.subr.bf16.mxu0 0
    %892 = vmatpush1.bf16.msra.mxu0 0
    %893 = vmatprep.subr.bf16.mxu0 0
    %894 = vmatpush1.bf16.msra.mxu0 0
    %895 = vmatprep.subr.bf16.mxu0 0
    %896 = vmatpush1.bf16.msra.mxu0 0
    %897 = vmatprep.mubr.bf16.mxu0 0
    %898 = vmatmul.mubr.bf16.gmra.mrb[0].mxu0 %v179
    %v899 = vpop.f32.mrb[0].mxu0
    %v900 = vadd.f32 %v859, %v899
    %v901 = vpop.f32.mrb[0].mxu0
    %v902 = vadd.f32 %v861, %v901
    %v903 = vpop.f32.mrb[0].mxu0
    %v904 = vpop.f32.mrb[0].mxu0
    %905 = vdwg.mxu0
    %906 = vmatprep.subr.bf16.mxu0 %v345
    %907 = vmatpush1.bf16.msra.mxu0 %v344
    %908 = vmatprep.subr.bf16.mxu0 %v353
    %909 = vmatpush1.bf16.msra.mxu0 %v352
    %910 = vmatprep.subr.bf16.mxu0 %v361
    %911 = vmatpush1.bf16.msra.mxu0 %v360
    %912 = vmatprep.subr.bf16.mxu0 %v369
    %913 = vmatpush1.bf16.msra.mxu0 %v368
    %914 = vmatprep.subr.bf16.mxu0 %v377
    %915 = vmatpush1.bf16.msra.mxu0 %v376
    %916 = vmatprep.subr.bf16.mxu0 %v385
    %917 = vmatpush1.bf16.msra.mxu0 %v384
    %918 = vmatprep.subr.bf16.mxu0 %v393
    %919 = vmatpush1.bf16.msra.mxu0 %v392
    %920 = vmatprep.subr.bf16.mxu0 %v401
    %921 = vmatpush1.bf16.msra.mxu0 %v400
    %922 = vmatprep.subr.bf16.mxu0 %v409
    %923 = vmatpush1.bf16.msra.mxu0 %v408
    %924 = vmatprep.subr.bf16.mxu0 %v417
    %925 = vmatpush1.bf16.msra.mxu0 %v416
    %926 = vmatprep.subr.bf16.mxu0 %v425
    %927 = vmatpush1.bf16.msra.mxu0 %v424
    %928 = vmatprep.subr.bf16.mxu0 %v433
    %929 = vmatpush1.bf16.msra.mxu0 %v432
    %930 = vmatprep.subr.bf16.mxu0 %v441
    %931 = vmatpush1.bf16.msra.mxu0 %v440
    %932 = vmatprep.subr.bf16.mxu0 %v449
    %933 = vmatpush1.bf16.msra.mxu0 %v448
    %934 = vmatprep.subr.bf16.mxu0 %v457
    %935 = vmatpush1.bf16.msra.mxu0 %v456
    %936 = vmatprep.subr.bf16.mxu0 %v465
    %937 = vmatpush1.bf16.msra.mxu0 %v464
    %938 = vmatprep.mubr.bf16.mxu0 %v176
    %939 = vmatmul.mubr.bf16.gmra.mrb[0].mxu0 %v175
    %v940 = vpop.f32.mrb[0].mxu0
    %v941 = vadd.f32 0.0, %v940
    %v942 = vpop.f32.mrb[0].mxu0
    %v943 = vadd.f32 0.0, %v942
    %v944 = vpop.f32.mrb[0].mxu0
    %v945 = vpop.f32.mrb[0].mxu0
    %946 = vdwg.mxu0
    %947 = vmatprep.subr.bf16.mxu0 %v473
    %948 = vmatpush1.bf16.msra.mxu0 %v472
    %949 = vmatprep.subr.bf16.mxu0 %v481
    %950 = vmatpush1.bf16.msra.mxu0 %v480
    %951 = vmatprep.subr.bf16.mxu0 %v489
    %952 = vmatpush1.bf16.msra.mxu0 %v488
    %953 = vmatprep.subr.bf16.mxu0 %v497
    %954 = vmatpush1.bf16.msra.mxu0 %v496
    %955 = vmatprep.subr.bf16.mxu0 %v505
    %956 = vmatpush1.bf16.msra.mxu0 %v504
    %957 = vmatprep.subr.bf16.mxu0 %v513
    %958 = vmatpush1.bf16.msra.mxu0 %v512
    %959 = vmatprep.subr.bf16.mxu0 %v521
    %960 = vmatpush1.bf16.msra.mxu0 %v520
    %961 = vmatprep.subr.bf16.mxu0 %v529
    %962 = vmatpush1.bf16.msra.mxu0 %v528
    %963 = vmatprep.subr.bf16.mxu0 %v537
    %964 = vmatpush1.bf16.msra.mxu0 %v536
    %965 = vmatprep.subr.bf16.mxu0 %v545
    %966 = vmatpush1.bf16.msra.mxu0 %v544
    %967 = vmatprep.subr.bf16.mxu0 %v553
    %968 = vmatpush1.bf16.msra.mxu0 %v552
    %969 = vmatprep.subr.bf16.mxu0 %v561
    %970 = vmatpush1.bf16.msra.mxu0 %v560
    %971 = vmatprep.subr.bf16.mxu0 %v569
    %972 = vmatpush1.bf16.msra.mxu0 %v568
    %973 = vmatprep.subr.bf16.mxu0 %v577
    %974 = vmatpush1.bf16.msra.mxu0 %v576
    %975 = vmatprep.subr.bf16.mxu0 %v585
    %976 = vmatpush1.bf16.msra.mxu0 %v584
    %977 = vmatprep.subr.bf16.mxu0 %v593
    %978 = vmatpush1.bf16.msra.mxu0 %v592
    %979 = vmatprep.mubr.bf16.mxu0 %v178
    %980 = vmatmul.mubr.bf16.gmra.mrb[0].mxu0 %v177
    %v981 = vpop.f32.mrb[0].mxu0
    %v982 = vadd.f32 %v941, %v981
    %v983 = vpop.f32.mrb[0].mxu0
    %v984 = vadd.f32 %v943, %v983
    %v985 = vpop.f32.mrb[0].mxu0
    %v986 = vpop.f32.mrb[0].mxu0
    %987 = vdwg.mxu0
    %988 = vmatprep.subr.bf16.mxu0 %v601
    %989 = vmatpush1.bf16.msra.mxu0 %v600
    %990 = vmatprep.subr.bf16.mxu0 %v609
    %991 = vmatpush1.bf16.msra.mxu0 %v608
    %992 = vmatprep.subr.bf16.mxu0 %v617
    %993 = vmatpush1.bf16.msra.mxu0 %v616
    %994 = vmatprep.subr.bf16.mxu0 %v625
    %995 = vmatpush1.bf16.msra.mxu0 %v624
    %996 = vmatprep.subr.bf16.mxu0 %v633
    %997 = vmatpush1.bf16.msra.mxu0 %v632
    %998 = vmatprep.subr.bf16.mxu0 %v641
    %999 = vmatpush1.bf16.msra.mxu0 %v640
    %1000 = vmatprep.subr.bf16.mxu0 %v649
    %1001 = vmatpush1.bf16.msra.mxu0 %v648
    %1002 = vmatprep.subr.bf16.mxu0 %v657
    %1003 = vmatpush1.bf16.msra.mxu0 %v656
    %1004 = vmatprep.subr.bf16.mxu0 0
    %1005 = vmatpush1.bf16.msra.mxu0 0
    %1006 = vmatprep.subr.bf16.mxu0 0
    %1007 = vmatpush1.bf16.msra.mxu0 0
    %1008 = vmatprep.subr.bf16.mxu0 0
    %1009 = vmatpush1.bf16.msra.mxu0 0
    %1010 = vmatprep.subr.bf16.mxu0 0
    %1011 = vmatpush1.bf16.msra.mxu0 0
    %1012 = vmatprep.subr.bf16.mxu0 0
    %1013 = vmatpush1.bf16.msra.mxu0 0
    %1014 = vmatprep.subr.bf16.mxu0 0
    %1015 = vmatpush1.bf16.msra.mxu0 0
    %1016 = vmatprep.subr.bf16.mxu0 0
    %1017 = vmatpush1.bf16.msra.mxu0 0
    %1018 = vmatprep.subr.bf16.mxu0 0
    %1019 = vmatpush1.bf16.msra.mxu0 0
    %1020 = vmatprep.mubr.bf16.mxu0 0
    %1021 = vmatmul.mubr.bf16.gmra.mrb[0].mxu0 %v179
    %v1022 = vpop.f32.mrb[0].mxu0
    %v1023 = vadd.f32 %v982, %v1022
    %v1024 = vpop.f32.mrb[0].mxu0
    %v1025 = vadd.f32 %v984, %v1024
    %v1026 = vpop.f32.mrb[0].mxu0
    %v1027 = vpop.f32.mrb[0].mxu0
    %1028 = vdwg.mxu0
    %1029 = vmatprep.subr.bf16.mxu0 %v347
    %1030 = vmatpush1.bf16.msra.mxu0 %v346
    %1031 = vmatprep.subr.bf16.mxu0 %v355
    %1032 = vmatpush1.bf16.msra.mxu0 %v354
    %1033 = vmatprep.subr.bf16.mxu0 %v363
    %1034 = vmatpush1.bf16.msra.mxu0 %v362
    %1035 = vmatprep.subr.bf16.mxu0 %v371
    %1036 = vmatpush1.bf16.msra.mxu0 %v370
    %1037 = vmatprep.subr.bf16.mxu0 %v379
    %1038 = vmatpush1.bf16.msra.mxu0 %v378
    %1039 = vmatprep.subr.bf16.mxu0 %v387
    %1040 = vmatpush1.bf16.msra.mxu0 %v386
    %1041 = vmatprep.subr.bf16.mxu0 %v395
    %1042 = vmatpush1.bf16.msra.mxu0 %v394
    %1043 = vmatprep.subr.bf16.mxu0 %v403
    %1044 = vmatpush1.bf16.msra.mxu0 %v402
    %1045 = vmatprep.subr.bf16.mxu0 %v411
    %1046 = vmatpush1.bf16.msra.mxu0 %v410
    %1047 = vmatprep.subr.bf16.mxu0 %v419
    %1048 = vmatpush1.bf16.msra.mxu0 %v418
    %1049 = vmatprep.subr.bf16.mxu0 %v427
    %1050 = vmatpush1.bf16.msra.mxu0 %v426
    %1051 = vmatprep.subr.bf16.mxu0 %v435
    %1052 = vmatpush1.bf16.msra.mxu0 %v434
    %1053 = vmatprep.subr.bf16.mxu0 %v443
    %1054 = vmatpush1.bf16.msra.mxu0 %v442
    %1055 = vmatprep.subr.bf16.mxu0 %v451
    %1056 = vmatpush1.bf16.msra.mxu0 %v450
    %1057 = vmatprep.subr.bf16.mxu0 %v459
    %1058 = vmatpush1.bf16.msra.mxu0 %v458
    %1059 = vmatprep.subr.bf16.mxu0 %v467
    %1060 = vmatpush1.bf16.msra.mxu0 %v466
    %1061 = vmatprep.mubr.bf16.mxu0 %v176
    %1062 = vmatmul.mubr.bf16.gmra.mrb[0].mxu0 %v175
    %v1063 = vpop.f32.mrb[0].mxu0
    %v1064 = vadd.f32 0.0, %v1063
    %v1065 = vpop.f32.mrb[0].mxu0
    %v1066 = vadd.f32 0.0, %v1065
    %v1067 = vpop.f32.mrb[0].mxu0
    %v1068 = vpop.f32.mrb[0].mxu0
    %1069 = vdwg.mxu0
    %1070 = vmatprep.subr.bf16.mxu0 %v475
    %1071 = vmatpush1.bf16.msra.mxu0 %v474
    %1072 = vmatprep.subr.bf16.mxu0 %v483
    %1073 = vmatpush1.bf16.msra.mxu0 %v482
    %1074 = vmatprep.subr.bf16.mxu0 %v491
    %1075 = vmatpush1.bf16.msra.mxu0 %v490
    %1076 = vmatprep.subr.bf16.mxu0 %v499
    %1077 = vmatpush1.bf16.msra.mxu0 %v498
    %1078 = vmatprep.subr.bf16.mxu0 %v507
    %1079 = vmatpush1.bf16.msra.mxu0 %v506
    %1080 = vmatprep.subr.bf16.mxu0 %v515
    %1081 = vmatpush1.bf16.msra.mxu0 %v514
    %1082 = vmatprep.subr.bf16.mxu0 %v523
    %1083 = vmatpush1.bf16.msra.mxu0 %v522
    %1084 = vmatprep.subr.bf16.mxu0 %v531
    %1085 = vmatpush1.bf16.msra.mxu0 %v530
    %1086 = vmatprep.subr.bf16.mxu0 %v539
    %1087 = vmatpush1.bf16.msra.mxu0 %v538
    %1088 = vmatprep.subr.bf16.mxu0 %v547
    %1089 = vmatpush1.bf16.msra.mxu0 %v546
    %1090 = vmatprep.subr.bf16.mxu0 %v555
    %1091 = vmatpush1.bf16.msra.mxu0 %v554
    %1092 = vmatprep.subr.bf16.mxu0 %v563
    %1093 = vmatpush1.bf16.msra.mxu0 %v562
    %1094 = vmatprep.subr.bf16.mxu0 %v571
    %1095 = vmatpush1.bf16.msra.mxu0 %v570
    %1096 = vmatprep.subr.bf16.mxu0 %v579
    %1097 = vmatpush1.bf16.msra.mxu0 %v578
    %1098 = vmatprep.subr.bf16.mxu0 %v587
    %1099 = vmatpush1.bf16.msra.mxu0 %v586
    %1100 = vmatprep.subr.bf16.mxu0 %v595
    %1101 = vmatpush1.bf16.msra.mxu0 %v594
    %1102 = vmatprep.mubr.bf16.mxu0 %v178
    %1103 = vmatmul.mubr.bf16.gmra.mrb[0].mxu0 %v177
    %v1104 = vpop.f32.mrb[0].mxu0
    %v1105 = vadd.f32 %v1064, %v1104
    %v1106 = vpop.f32.mrb[0].mxu0
    %v1107 = vadd.f32 %v1066, %v1106
    %v1108 = vpop.f32.mrb[0].mxu0
    %v1109 = vpop.f32.mrb[0].mxu0
    %1110 = vdwg.mxu0
    %1111 = vmatprep.subr.bf16.mxu0 %v603
    %1112 = vmatpush1.bf16.msra.mxu0 %v602
    %1113 = vmatprep.subr.bf16.mxu0 %v611
    %1114 = vmatpush1.bf16.msra.mxu0 %v610
    %1115 = vmatprep.subr.bf16.mxu0 %v619
    %1116 = vmatpush1.bf16.msra.mxu0 %v618
    %1117 = vmatprep.subr.bf16.mxu0 %v627
    %1118 = vmatpush1.bf16.msra.mxu0 %v626
    %1119 = vmatprep.subr.bf16.mxu0 %v635
    %1120 = vmatpush1.bf16.msra.mxu0 %v634
    %1121 = vmatprep.subr.bf16.mxu0 %v643
    %1122 = vmatpush1.bf16.msra.mxu0 %v642
    %1123 = vmatprep.subr.bf16.mxu0 %v651
    %1124 = vmatpush1.bf16.msra.mxu0 %v650
    %1125 = vmatprep.subr.bf16.mxu0 %v659
    %1126 = vmatpush1.bf16.msra.mxu0 %v658
    %1127 = vmatprep.subr.bf16.mxu0 0
    %1128 = vmatpush1.bf16.msra.mxu0 0
    %1129 = vmatprep.subr.bf16.mxu0 0
    %1130 = vmatpush1.bf16.msra.mxu0 0
    %1131 = vmatprep.subr.bf16.mxu0 0
    %1132 = vmatpush1.bf16.msra.mxu0 0
    %1133 = vmatprep.subr.bf16.mxu0 0
    %1134 = vmatpush1.bf16.msra.mxu0 0
    %1135 = vmatprep.subr.bf16.mxu0 0
    %1136 = vmatpush1.bf16.msra.mxu0 0
    %1137 = vmatprep.subr.bf16.mxu0 0
    %1138 = vmatpush1.bf16.msra.mxu0 0
    %1139 = vmatprep.subr.bf16.mxu0 0
    %1140 = vmatpush1.bf16.msra.mxu0 0
    %1141 = vmatprep.subr.bf16.mxu0 0
    %1142 = vmatpush1.bf16.msra.mxu0 0
    %1143 = vmatprep.mubr.bf16.mxu0 0
    %1144 = vmatmul.mubr.bf16.gmra.mrb[0].mxu0 %v179
    %v1145 = vpop.f32.mrb[0].mxu0
    %v1146 = vadd.f32 %v1105, %v1145
    %v1147 = vpop.f32.mrb[0].mxu0
    %v1148 = vadd.f32 %v1107, %v1147
    %v1149 = vpop.f32.mrb[0].mxu0
    %v1150 = vpop.f32.mrb[0].mxu0
    %1151 = vdwg.mxu0
    %v1152 = vld [vmem:[#allocation17] sm:$0xff]
    %v1154 = vlaneseq
    %v1155 = vshrl.u32 %v1154, 7
    %v1156 = vsub.s32 0, %v1155
    %v1157 = vrot.slane %v1152, %v1156
    %v1158 = vlaneseq
    %v1159 = vshrl.u32 %v1158, 7
    %v1160 = vsub.s32 1, %v1159
    %v1161 = vrot.slane %v1152, %v1160
    %v1162 = vlaneseq
    %v1163 = vshrl.u32 %v1162, 7
    %v1164 = vsub.s32 2, %v1163
    %v1165 = vrot.slane %v1152, %v1164
    %v1166 = vlaneseq
    %v1167 = vshrl.u32 %v1166, 7
    %v1168 = vsub.s32 3, %v1167
    %v1169 = vrot.slane %v1152, %v1168
    %v1170 = vlaneseq
    %v1171 = vshrl.u32 %v1170, 7
    %v1172 = vsub.s32 4, %v1171
    %v1173 = vrot.slane %v1152, %v1172
    %v1174 = vlaneseq
    %v1175 = vshrl.u32 %v1174, 7
    %v1176 = vsub.s32 5, %v1175
    %v1177 = vrot.slane %v1152, %v1176
    %v1178 = vlaneseq
    %v1179 = vshrl.u32 %v1178, 7
    %v1180 = vsub.s32 6, %v1179
    %v1181 = vrot.slane %v1152, %v1180
    %v1182 = vlaneseq
    %v1183 = vshrl.u32 %v1182, 7
    %v1184 = vsub.s32 7, %v1183
    %v1185 = vrot.slane %v1152, %v1184
    %v1194 = vmul.f32 %v777, %v1157
    %v1195 = vmul.f32 %v779, %v1161
    %v1196 = vmul.f32 %v900, %v1165
    %v1197 = vmul.f32 %v902, %v1169
    %v1198 = vmul.f32 %v1023, %v1173
    %v1199 = vmul.f32 %v1025, %v1177
    %v1200 = vmul.f32 %v1146, %v1181
    %v1201 = vmul.f32 %v1148, %v1185
    %v1202 = vrot.slane %v1194, 4
    %v1203 = vadd.f32 %v1194, %v1202
    %v1204 = vrot.slane %v1203, 2
    %v1205 = vadd.f32 %v1203, %v1204
    %v1206 = vrot.slane %v1205, 1
    %v1207 = vadd.f32 %v1205, %v1206
    %v1208 = vrot.slane %v1195, 4
    %v1209 = vadd.f32 %v1195, %v1208
    %v1210 = vrot.slane %v1209, 2
    %v1211 = vadd.f32 %v1209, %v1210
    %v1212 = vrot.slane %v1211, 1
    %v1213 = vadd.f32 %v1211, %v1212
    %v1214 = vrot.slane %v1196, 4
    %v1215 = vadd.f32 %v1196, %v1214
    %v1216 = vrot.slane %v1215, 2
    %v1217 = vadd.f32 %v1215, %v1216
    %v1218 = vrot.slane %v1217, 1
    %v1219 = vadd.f32 %v1217, %v1218
    %v1220 = vrot.slane %v1197, 4
    %v1221 = vadd.f32 %v1197, %v1220
    %v1222 = vrot.slane %v1221, 2
    %v1223 = vadd.f32 %v1221, %v1222
    %v1224 = vrot.slane %v1223, 1
    %v1225 = vadd.f32 %v1223, %v1224
    %v1226 = vrot.slane %v1198, 4
    %v1227 = vadd.f32 %v1198, %v1226
    %v1228 = vrot.slane %v1227, 2
    %v1229 = vadd.f32 %v1227, %v1228
    %v1230 = vrot.slane %v1229, 1
    %v1231 = vadd.f32 %v1229, %v1230
    %v1232 = vrot.slane %v1199, 4
    %v1233 = vadd.f32 %v1199, %v1232
    %v1234 = vrot.slane %v1233, 2
    %v1235 = vadd.f32 %v1233, %v1234
    %v1236 = vrot.slane %v1235, 1
    %v1237 = vadd.f32 %v1235, %v1236
    %v1238 = vrot.slane %v1200, 4
    %v1239 = vadd.f32 %v1200, %v1238
    %v1240 = vrot.slane %v1239, 2
    %v1241 = vadd.f32 %v1239, %v1240
    %v1242 = vrot.slane %v1241, 1
    %v1243 = vadd.f32 %v1241, %v1242
    %v1244 = vrot.slane %v1201, 4
    %v1245 = vadd.f32 %v1201, %v1244
    %v1246 = vrot.slane %v1245, 2
    %v1247 = vadd.f32 %v1245, %v1246
    %v1248 = vrot.slane %v1247, 1
    %v1249 = vadd.f32 %v1247, %v1248
    %v1250 = vrcp.pop 8.0
    %v1251 = vmul.f32 %v1207, %v1250
    %v1252 = vmul.f32 %v1213, %v1250
    %v1253 = vmul.f32 %v1219, %v1250
    %v1254 = vmul.f32 %v1225, %v1250
    %v1255 = vmul.f32 %v1231, %v1250
    %v1256 = vmul.f32 %v1237, %v1250
    %v1257 = vmul.f32 %v1243, %v1250
    %v1258 = vmul.f32 %v1249, %v1250
    %v1259 = vmul.f32 %v1194, %v1194
    %v1260 = vmul.f32 %v1195, %v1195
    %v1261 = vmul.f32 %v1196, %v1196
    %v1262 = vmul.f32 %v1197, %v1197
    %v1263 = vmul.f32 %v1198, %v1198
    %v1264 = vmul.f32 %v1199, %v1199
    %v1265 = vmul.f32 %v1200, %v1200
    %v1266 = vmul.f32 %v1201, %v1201
    %v1267 = vrot.slane %v1259, 4
    %v1268 = vadd.f32 %v1259, %v1267
    %v1269 = vrot.slane %v1268, 2
    %v1270 = vadd.f32 %v1268, %v1269
    %v1271 = vrot.slane %v1270, 1
    %v1272 = vadd.f32 %v1270, %v1271
    %v1273 = vrot.slane %v1260, 4
    %v1274 = vadd.f32 %v1260, %v1273
    %v1275 = vrot.slane %v1274, 2
    %v1276 = vadd.f32 %v1274, %v1275
    %v1277 = vrot.slane %v1276, 1
    %v1278 = vadd.f32 %v1276, %v1277
    %v1279 = vrot.slane %v1261, 4
    %v1280 = vadd.f32 %v1261, %v1279
    %v1281 = vrot.slane %v1280, 2
    %v1282 = vadd.f32 %v1280, %v1281
    %v1283 = vrot.slane %v1282, 1
    %v1284 = vadd.f32 %v1282, %v1283
    %v1285 = vrot.slane %v1262, 4
    %v1286 = vadd.f32 %v1262, %v1285
    %v1287 = vrot.slane %v1286, 2
    %v1288 = vadd.f32 %v1286, %v1287
    %v1289 = vrot.slane %v1288, 1
    %v1290 = vadd.f32 %v1288, %v1289
    %v1291 = vrot.slane %v1263, 4
    %v1292 = vadd.f32 %v1263, %v1291
    %v1293 = vrot.slane %v1292, 2
    %v1294 = vadd.f32 %v1292, %v1293
    %v1295 = vrot.slane %v1294, 1
    %v1296 = vadd.f32 %v1294, %v1295
    %v1297 = vrot.slane %v1264, 4
    %v1298 = vadd.f32 %v1264, %v1297
    %v1299 = vrot.slane %v1298, 2
    %v1300 = vadd.f32 %v1298, %v1299
    %v1301 = vrot.slane %v1300, 1
    %v1302 = vadd.f32 %v1300, %v1301
    %v1303 = vrot.slane %v1265, 4
    %v1304 = vadd.f32 %v1265, %v1303
    %v1305 = vrot.slane %v1304, 2
    %v1306 = vadd.f32 %v1304, %v1305
    %v1307 = vrot.slane %v1306, 1
    %v1308 = vadd.f32 %v1306, %v1307
    %v1309 = vrot.slane %v1266, 4
    %v1310 = vadd.f32 %v1266, %v1309
    %v1311 = vrot.slane %v1310, 2
    %v1312 = vadd.f32 %v1310, %v1311
    %v1313 = vrot.slane %v1312, 1
    %v1314 = vadd.f32 %v1312, %v1313
    %v1315 = vmul.f32 %v1272, %v1250
    %v1316 = vmul.f32 %v1278, %v1250
    %v1317 = vmul.f32 %v1284, %v1250
    %v1318 = vmul.f32 %v1290, %v1250
    %v1319 = vmul.f32 %v1296, %v1250
    %v1320 = vmul.f32 %v1302, %v1250
    %v1321 = vmul.f32 %v1308, %v1250
    %v1322 = vmul.f32 %v1314, %v1250
    %v1323 = vmul.f32 %v1251, %v1251
    %v1324 = vmul.f32 %v1252, %v1252
    %v1325 = vmul.f32 %v1253, %v1253
    %v1326 = vmul.f32 %v1254, %v1254
    %v1327 = vmul.f32 %v1255, %v1255
    %v1328 = vmul.f32 %v1256, %v1256
    %v1329 = vmul.f32 %v1257, %v1257
    %v1330 = vmul.f32 %v1258, %v1258
    %v1331 = vsub.f32 %v1315, %v1323
    %v1332 = vsub.f32 %v1316, %v1324
    %v1333 = vsub.f32 %v1317, %v1325
    %v1334 = vsub.f32 %v1318, %v1326
    %v1335 = vsub.f32 %v1319, %v1327
    %v1336 = vsub.f32 %v1320, %v1328
    %v1337 = vsub.f32 %v1321, %v1329
    %v1338 = vsub.f32 %v1322, %v1330
    %v1339 = vmax.f32 %v1331, 0.0
    %v1340 = vmax.f32 %v1332, 0.0
    %v1341 = vmax.f32 %v1333, 0.0
    %v1342 = vmax.f32 %v1334, 0.0
    %v1343 = vmax.f32 %v1335, 0.0
    %v1344 = vmax.f32 %v1336, 0.0
    %v1345 = vmax.f32 %v1337, 0.0
    %v1346 = vmax.f32 %v1338, 0.0
    %v1347 = vsub.f32 %v1194, %v1251
    %v1348 = vsub.f32 %v1195, %v1252
    %v1349 = vsub.f32 %v1196, %v1253
    %v1350 = vsub.f32 %v1197, %v1254
    %v1351 = vsub.f32 %v1198, %v1255
    %v1352 = vsub.f32 %v1199, %v1256
    %v1353 = vsub.f32 %v1200, %v1257
    %v1354 = vsub.f32 %v1201, %v1258
    %v1355 = vadd.f32 %v1339, 1e-05
    %v1356 = vadd.f32 %v1340, 1e-05
    %v1357 = vadd.f32 %v1341, 1e-05
    %v1358 = vadd.f32 %v1342, 1e-05
    %v1359 = vadd.f32 %v1343, 1e-05
    %v1360 = vadd.f32 %v1344, 1e-05
    %v1361 = vadd.f32 %v1345, 1e-05
    %v1362 = vadd.f32 %v1346, 1e-05
    %v1363 = vrsqrt.pop %v1355
    %v1364 = vrsqrt.pop %v1356
    %v1365 = vrsqrt.pop %v1357
    %v1366 = vrsqrt.pop %v1358
    %v1367 = vrsqrt.pop %v1359
    %v1368 = vrsqrt.pop %v1360
    %v1369 = vrsqrt.pop %v1361
    %v1370 = vrsqrt.pop %v1362
    %v1371 = vmul.f32 %v1347, %v1363
    %v1372 = vmul.f32 %v1348, %v1364
    %v1373 = vmul.f32 %v1349, %v1365
    %v1374 = vmul.f32 %v1350, %v1366
    %v1375 = vmul.f32 %v1351, %v1367
    %v1376 = vmul.f32 %v1352, %v1368
    %v1377 = vmul.f32 %v1353, %v1369
    %v1378 = vmul.f32 %v1354, %v1370
    %v1379 = vld [vmem:[#allocation17 + $0x8] sm:$0xff]
    %v1381 = vlaneseq
    %v1382 = vshrl.u32 %v1381, 7
    %v1383 = vsub.s32 0, %v1382
    %v1384 = vrot.slane %v1379, %v1383
    %v1385 = vlaneseq
    %v1386 = vshrl.u32 %v1385, 7
    %v1387 = vsub.s32 1, %v1386
    %v1388 = vrot.slane %v1379, %v1387
    %v1389 = vlaneseq
    %v1390 = vshrl.u32 %v1389, 7
    %v1391 = vsub.s32 2, %v1390
    %v1392 = vrot.slane %v1379, %v1391
    %v1393 = vlaneseq
    %v1394 = vshrl.u32 %v1393, 7
    %v1395 = vsub.s32 3, %v1394
    %v1396 = vrot.slane %v1379, %v1395
    %v1397 = vlaneseq
    %v1398 = vshrl.u32 %v1397, 7
    %v1399 = vsub.s32 4, %v1398
    %v1400 = vrot.slane %v1379, %v1399
    %v1401 = vlaneseq
    %v1402 = vshrl.u32 %v1401, 7
    %v1403 = vsub.s32 5, %v1402
    %v1404 = vrot.slane %v1379, %v1403
    %v1405 = vlaneseq
    %v1406 = vshrl.u32 %v1405, 7
    %v1407 = vsub.s32 6, %v1406
    %v1408 = vrot.slane %v1379, %v1407
    %v1409 = vlaneseq
    %v1410 = vshrl.u32 %v1409, 7
    %v1411 = vsub.s32 7, %v1410
    %v1412 = vrot.slane %v1379, %v1411
    %v1421 = vmul.f32 %v1371, %v1384
    %v1422 = vmul.f32 %v1372, %v1388
    %v1423 = vmul.f32 %v1373, %v1392
    %v1424 = vmul.f32 %v1374, %v1396
    %v1425 = vmul.f32 %v1375, %v1400
    %v1426 = vmul.f32 %v1376, %v1404
    %v1427 = vmul.f32 %v1377, %v1408
    %v1428 = vmul.f32 %v1378, %v1412
    %v1429 = vld [vmem:[#allocation17 + $0x10] sm:$0xff]
    %v1431 = vlaneseq
    %v1432 = vshrl.u32 %v1431, 7
    %v1433 = vsub.s32 0, %v1432
    %v1434 = vrot.slane %v1429, %v1433
    %v1435 = vlaneseq
    %v1436 = vshrl.u32 %v1435, 7
    %v1437 = vsub.s32 1, %v1436
    %v1438 = vrot.slane %v1429, %v1437
    %v1439 = vlaneseq
    %v1440 = vshrl.u32 %v1439, 7
    %v1441 = vsub.s32 2, %v1440
    %v1442 = vrot.slane %v1429, %v1441
    %v1443 = vlaneseq
    %v1444 = vshrl.u32 %v1443, 7
    %v1445 = vsub.s32 3, %v1444
    %v1446 = vrot.slane %v1429, %v1445
    %v1447 = vlaneseq
    %v1448 = vshrl.u32 %v1447, 7
    %v1449 = vsub.s32 4, %v1448
    %v1450 = vrot.slane %v1429, %v1449
    %v1451 = vlaneseq
    %v1452 = vshrl.u32 %v1451, 7
    %v1453 = vsub.s32 5, %v1452
    %v1454 = vrot.slane %v1429, %v1453
    %v1455 = vlaneseq
    %v1456 = vshrl.u32 %v1455, 7
    %v1457 = vsub.s32 6, %v1456
    %v1458 = vrot.slane %v1429, %v1457
    %v1459 = vlaneseq
    %v1460 = vshrl.u32 %v1459, 7
    %v1461 = vsub.s32 7, %v1460
    %v1462 = vrot.slane %v1429, %v1461
    %v1471 = vadd.f32 %v1421, %v1434
    %v1472 = vadd.f32 %v1422, %v1438
    %v1473 = vadd.f32 %v1423, %v1442
    %v1474 = vadd.f32 %v1424, %v1446
    %v1475 = vadd.f32 %v1425, %v1450
    %v1476 = vadd.f32 %v1426, %v1454
    %v1477 = vadd.f32 %v1427, %v1458
    %v1478 = vadd.f32 %v1428, %v1462
    %vm1479 = vcmp.gt.f32.partialorder %v1471, 0.0
    %vm1480 = vcmp.gt.f32.partialorder %v1472, 0.0
    %vm1481 = vcmp.gt.f32.partialorder %v1473, 0.0
    %vm1482 = vcmp.gt.f32.partialorder %v1474, 0.0
    %vm1483 = vcmp.gt.f32.partialorder %v1475, 0.0
    %vm1484 = vcmp.gt.f32.partialorder %v1476, 0.0
    %vm1485 = vcmp.gt.f32.partialorder %v1477, 0.0
    %vm1486 = vcmp.gt.f32.partialorder %v1478, 0.0
    %v1487 = vmul.f32 %v1471, 0.01
    %v1488 = vmul.f32 %v1472, 0.01
    %v1489 = vmul.f32 %v1473, 0.01
    %v1490 = vmul.f32 %v1474, 0.01
    %v1491 = vmul.f32 %v1475, 0.01
    %v1492 = vmul.f32 %v1476, 0.01
    %v1493 = vmul.f32 %v1477, 0.01
    %v1494 = vmul.f32 %v1478, 0.01
    %v1495 = vsel %vm1479, %v1471, %v1487
    %v1496 = vsel %vm1480, %v1472, %v1488
    %v1497 = vsel %vm1481, %v1473, %v1489
    %v1498 = vsel %vm1482, %v1474, %v1490
    %v1499 = vsel %vm1483, %v1475, %v1491
    %v1500 = vsel %vm1484, %v1476, %v1492
    %v1501 = vsel %vm1485, %v1477, %v1493
    %v1502 = vsel %vm1486, %v1478, %v1494
    %v1503 = vpack.c.bf16 %v1495, %v1495
    %v1504 = vpack.c.bf16 %v1496, %v1496
    %v1505 = vpack.c.bf16 %v1497, %v1497
    %v1506 = vpack.c.bf16 %v1498, %v1498
    %v1507 = vpack.c.bf16 %v1499, %v1499
    %v1508 = vpack.c.bf16 %v1500, %v1500
    %v1509 = vpack.c.bf16 %v1501, %v1501
    %v1510 = vpack.c.bf16 %v1502, %v1502
    %v1511 = vld [vmem:[#allocation8] sm:$0xff]
    %v1512 = vld [vmem:[#allocation8 + $0x8] sm:$0xff]
    %v1513 = vld [vmem:[#allocation8 + $0x10] sm:$0xff]
    %v1514 = vld [vmem:[#allocation8 + $0x18] sm:$0xff]
    %v1515 = vld [vmem:[#allocation8 + $0x20] sm:$0xff]
    %v1516 = vld [vmem:[#allocation8 + $0x28] sm:$0xff]
    %v1517 = vld [vmem:[#allocation8 + $0x30] sm:$0xff]
    %v1518 = vld [vmem:[#allocation8 + $0x38] sm:$0xff]
    %v1519 = vld [vmem:[#allocation8 + $0x40] sm:$0xff]
    %v1520 = vld [vmem:[#allocation8 + $0x48] sm:$0xff]
    %v1521 = vld [vmem:[#allocation8 + $0x50] sm:$0xff]
    %v1522 = vld [vmem:[#allocation8 + $0x58] sm:$0xff]
    %v1523 = vld [vmem:[#allocation8 + $0x60] sm:$0xff]
    %v1524 = vld [vmem:[#allocation8 + $0x68] sm:$0xff]
    %v1525 = vld [vmem:[#allocation8 + $0x70] sm:$0xff]
    %v1526 = vld [vmem:[#allocation8 + $0x78] sm:$0xff]
    %v1527 = vld [vmem:[#allocation8 + $0x80] sm:$0xff]
    %v1528 = vld [vmem:[#allocation8 + $0x88] sm:$0xff]
    %v1529 = vld [vmem:[#allocation8 + $0x90] sm:$0xff]
    %v1530 = vld [vmem:[#allocation8 + $0x98] sm:$0xff]
    %v1531 = vld [vmem:[#allocation8 + $0xa0] sm:$0xff]
    %v1532 = vld [vmem:[#allocation8 + $0xa8] sm:$0xff]
    %v1533 = vld [vmem:[#allocation8 + $0xb0] sm:$0xff]
    %v1534 = vld [vmem:[#allocation8 + $0xb8] sm:$0xff]
    %v1535 = vld [vmem:[#allocation8 + $0xc0] sm:$0xff]
    %v1536 = vld [vmem:[#allocation8 + $0xc8] sm:$0xff]
    %v1537 = vld [vmem:[#allocation8 + $0xd0] sm:$0xff]
    %v1538 = vld [vmem:[#allocation8 + $0xd8] sm:$0xff]
    %v1539 = vld [vmem:[#allocation8 + $0xe0] sm:$0xff]
    %v1540 = vld [vmem:[#allocation8 + $0xe8] sm:$0xff]
    %v1541 = vld [vmem:[#allocation8 + $0xf0] sm:$0xff]
    %v1542 = vld [vmem:[#allocation8 + $0xf8] sm:$0xff]
    %v1543 = vld [vmem:[#allocation8 + $0x100] sm:$0xff]
    %v1544 = vld [vmem:[#allocation8 + $0x108] sm:$0xff]
    %v1545 = vld [vmem:[#allocation8 + $0x110] sm:$0xff]
    %v1546 = vld [vmem:[#allocation8 + $0x118] sm:$0xff]
    %v1547 = vld [vmem:[#allocation8 + $0x120] sm:$0xff]
    %v1548 = vld [vmem:[#allocation8 + $0x128] sm:$0xff]
    %v1549 = vld [vmem:[#allocation8 + $0x130] sm:$0xff]
    %v1550 = vld [vmem:[#allocation8 + $0x138] sm:$0xff]
    %v1551 = vld [vmem:[#allocation8 + $0x140] sm:$0xff]
    %v1552 = vld [vmem:[#allocation8 + $0x148] sm:$0xff]
    %v1553 = vld [vmem:[#allocation8 + $0x150] sm:$0xff]
    %v1554 = vld [vmem:[#allocation8 + $0x158] sm:$0xff]
    %v1555 = vld [vmem:[#allocation8 + $0x160] sm:$0xff]
    %v1556 = vld [vmem:[#allocation8 + $0x168] sm:$0xff]
    %v1557 = vld [vmem:[#allocation8 + $0x170] sm:$0xff]
    %v1558 = vld [vmem:[#allocation8 + $0x178] sm:$0xff]
    %v1559 = vld [vmem:[#allocation8 + $0x180] sm:$0xff]
    %v1560 = vld [vmem:[#allocation8 + $0x188] sm:$0xff]
    %v1561 = vld [vmem:[#allocation8 + $0x190] sm:$0xff]
    %v1562 = vld [vmem:[#allocation8 + $0x198] sm:$0xff]
    %v1563 = vld [vmem:[#allocation8 + $0x1a0] sm:$0xff]
    %v1564 = vld [vmem:[#allocation8 + $0x1a8] sm:$0xff]
    %v1565 = vld [vmem:[#allocation8 + $0x1b0] sm:$0xff]
    %v1566 = vld [vmem:[#allocation8 + $0x1b8] sm:$0xff]
    %v1567 = vld [vmem:[#allocation8 + $0x1c0] sm:$0xff]
    %v1568 = vld [vmem:[#allocation8 + $0x1c8] sm:$0xff]
    %v1569 = vld [vmem:[#allocation8 + $0x1d0] sm:$0xff]
    %v1570 = vld [vmem:[#allocation8 + $0x1d8] sm:$0xff]
    %v1571 = vld [vmem:[#allocation8 + $0x1e0] sm:$0xff]
    %v1572 = vld [vmem:[#allocation8 + $0x1e8] sm:$0xff]
    %v1573 = vld [vmem:[#allocation8 + $0x1f0] sm:$0xff]
    %v1574 = vld [vmem:[#allocation8 + $0x1f8] sm:$0xff]
    %v1575 = vld [vmem:[#allocation8 + $0x200] sm:$0xff]
    %v1576 = vld [vmem:[#allocation8 + $0x208] sm:$0xff]
    %v1577 = vld [vmem:[#allocation8 + $0x210] sm:$0xff]
    %v1578 = vld [vmem:[#allocation8 + $0x218] sm:$0xff]
    %v1579 = vld [vmem:[#allocation8 + $0x220] sm:$0xff]
    %v1580 = vld [vmem:[#allocation8 + $0x228] sm:$0xff]
    %v1581 = vld [vmem:[#allocation8 + $0x230] sm:$0xff]
    %v1582 = vld [vmem:[#allocation8 + $0x238] sm:$0xff]
    %v1583 = vld [vmem:[#allocation8 + $0x240] sm:$0xff]
    %v1584 = vld [vmem:[#allocation8 + $0x248] sm:$0xff]
    %v1585 = vld [vmem:[#allocation8 + $0x250] sm:$0xff]
    %v1586 = vld [vmem:[#allocation8 + $0x258] sm:$0xff]
    %v1587 = vld [vmem:[#allocation8 + $0x260] sm:$0xff]
    %v1588 = vld [vmem:[#allocation8 + $0x268] sm:$0xff]
    %v1589 = vld [vmem:[#allocation8 + $0x270] sm:$0xff]
    %v1590 = vld [vmem:[#allocation8 + $0x278] sm:$0xff]
    %v1591 = vld [vmem:[#allocation8 + $0x280] sm:$0xff]
    %v1592 = vld [vmem:[#allocation8 + $0x288] sm:$0xff]
    %v1593 = vld [vmem:[#allocation8 + $0x290] sm:$0xff]
    %v1594 = vld [vmem:[#allocation8 + $0x298] sm:$0xff]
    %v1595 = vld [vmem:[#allocation8 + $0x2a0] sm:$0xff]
    %v1596 = vld [vmem:[#allocation8 + $0x2a8] sm:$0xff]
    %v1597 = vld [vmem:[#allocation8 + $0x2b0] sm:$0xff]
    %v1598 = vld [vmem:[#allocation8 + $0x2b8] sm:$0xff]
    %v1599 = vld [vmem:[#allocation8 + $0x2c0] sm:$0xff]
    %v1600 = vld [vmem:[#allocation8 + $0x2c8] sm:$0xff]
    %v1601 = vld [vmem:[#allocation8 + $0x2d0] sm:$0xff]
    %v1602 = vld [vmem:[#allocation8 + $0x2d8] sm:$0xff]
    %v1603 = vld [vmem:[#allocation8 + $0x2e0] sm:$0xff]
    %v1604 = vld [vmem:[#allocation8 + $0x2e8] sm:$0xff]
    %v1605 = vld [vmem:[#allocation8 + $0x2f0] sm:$0xff]
    %v1606 = vld [vmem:[#allocation8 + $0x2f8] sm:$0xff]
    %v1607 = vld [vmem:[#allocation8 + $0x300] sm:$0xff]
    %v1608 = vld [vmem:[#allocation8 + $0x308] sm:$0xff]
    %v1609 = vld [vmem:[#allocation8 + $0x310] sm:$0xff]
    %v1610 = vld [vmem:[#allocation8 + $0x318] sm:$0xff]
    %v1611 = vld [vmem:[#allocation8 + $0x320] sm:$0xff]
    %v1612 = vld [vmem:[#allocation8 + $0x328] sm:$0xff]
    %v1613 = vld [vmem:[#allocation8 + $0x330] sm:$0xff]
    %v1614 = vld [vmem:[#allocation8 + $0x338] sm:$0xff]
    %v1615 = vld [vmem:[#allocation8 + $0x340] sm:$0xff]
    %v1616 = vld [vmem:[#allocation8 + $0x348] sm:$0xff]
    %v1617 = vld [vmem:[#allocation8 + $0x350] sm:$0xff]
    %v1618 = vld [vmem:[#allocation8 + $0x358] sm:$0xff]
    %v1619 = vld [vmem:[#allocation8 + $0x360] sm:$0xff]
    %v1620 = vld [vmem:[#allocation8 + $0x368] sm:$0xff]
    %v1621 = vld [vmem:[#allocation8 + $0x370] sm:$0xff]
    %v1622 = vld [vmem:[#allocation8 + $0x378] sm:$0xff]
    %v1623 = vld [vmem:[#allocation8 + $0x380] sm:$0xff]
    %v1624 = vld [vmem:[#allocation8 + $0x388] sm:$0xff]
    %v1625 = vld [vmem:[#allocation8 + $0x390] sm:$0xff]
    %v1626 = vld [vmem:[#allocation8 + $0x398] sm:$0xff]
    %v1627 = vld [vmem:[#allocation8 + $0x3a0] sm:$0xff]
    %v1628 = vld [vmem:[#allocation8 + $0x3a8] sm:$0xff]
    %v1629 = vld [vmem:[#allocation8 + $0x3b0] sm:$0xff]
    %v1630 = vld [vmem:[#allocation8 + $0x3b8] sm:$0xff]
    %v1631 = vld [vmem:[#allocation8 + $0x3c0] sm:$0xff]
    %v1632 = vld [vmem:[#allocation8 + $0x3c8] sm:$0xff]
    %v1633 = vld [vmem:[#allocation8 + $0x3d0] sm:$0xff]
    %v1634 = vld [vmem:[#allocation8 + $0x3d8] sm:$0xff]
    %v1635 = vld [vmem:[#allocation8 + $0x3e0] sm:$0xff]
    %v1636 = vld [vmem:[#allocation8 + $0x3e8] sm:$0xff]
    %v1637 = vld [vmem:[#allocation8 + $0x3f0] sm:$0xff]
    %v1638 = vld [vmem:[#allocation8 + $0x3f8] sm:$0xff]
    %v1639 = vunpack.c.l.s8.bf16 %v1511
    %v1640 = vunpack.c.l.s8.bf16 %v1512
    %v1641 = vunpack.c.l.s8.bf16 %v1513
    %v1642 = vunpack.c.l.s8.bf16 %v1514
    %v1643 = vunpack.c.h.s8.bf16 %v1511
    %v1644 = vunpack.c.h.s8.bf16 %v1512
    %v1645 = vunpack.c.h.s8.bf16 %v1513
    %v1646 = vunpack.c.h.s8.bf16 %v1514
    %v1647 = vunpack.c.l.s8.bf16 %v1515
    %v1648 = vunpack.c.l.s8.bf16 %v1516
    %v1649 = vunpack.c.l.s8.bf16 %v1517
    %v1650 = vunpack.c.l.s8.bf16 %v1518
    %v1651 = vunpack.c.h.s8.bf16 %v1515
    %v1652 = vunpack.c.h.s8.bf16 %v1516
    %v1653 = vunpack.c.h.s8.bf16 %v1517
    %v1654 = vunpack.c.h.s8.bf16 %v1518
    %v1655 = vunpack.c.l.s8.bf16 %v1519
    %v1656 = vunpack.c.l.s8.bf16 %v1520
    %v1657 = vunpack.c.l.s8.bf16 %v1521
    %v1658 = vunpack.c.l.s8.bf16 %v1522
    %v1659 = vunpack.c.h.s8.bf16 %v1519
    %v1660 = vunpack.c.h.s8.bf16 %v1520
    %v1661 = vunpack.c.h.s8.bf16 %v1521
    %v1662 = vunpack.c.h.s8.bf16 %v1522
    %v1663 = vunpack.c.l.s8.bf16 %v1523
    %v1664 = vunpack.c.l.s8.bf16 %v1524
    %v1665 = vunpack.c.l.s8.bf16 %v1525
    %v1666 = vunpack.c.l.s8.bf16 %v1526
    %v1667 = vunpack.c.h.s8.bf16 %v1523
    %v1668 = vunpack.c.h.s8.bf16 %v1524
    %v1669 = vunpack.c.h.s8.bf16 %v1525
    %v1670 = vunpack.c.h.s8.bf16 %v1526
    %v1671 = vunpack.c.l.s8.bf16 %v1527
    %v1672 = vunpack.c.l.s8.bf16 %v1528
    %v1673 = vunpack.c.l.s8.bf16 %v1529
    %v1674 = vunpack.c.l.s8.bf16 %v1530
    %v1675 = vunpack.c.h.s8.bf16 %v1527
    %v1676 = vunpack.c.h.s8.bf16 %v1528
    %v1677 = vunpack.c.h.s8.bf16 %v1529
    %v1678 = vunpack.c.h.s8.bf16 %v1530
    %v1679 = vunpack.c.l.s8.bf16 %v1531
    %v1680 = vunpack.c.l.s8.bf16 %v1532
    %v1681 = vunpack.c.l.s8.bf16 %v1533
    %v1682 = vunpack.c.l.s8.bf16 %v1534
    %v1683 = vunpack.c.h.s8.bf16 %v1531
    %v1684 = vunpack.c.h.s8.bf16 %v1532
    %v1685 = vunpack.c.h.s8.bf16 %v1533
    %v1686 = vunpack.c.h.s8.bf16 %v1534
    %v1687 = vunpack.c.l.s8.bf16 %v1535
    %v1688 = vunpack.c.l.s8.bf16 %v1536
    %v1689 = vunpack.c.l.s8.bf16 %v1537
    %v1690 = vunpack.c.l.s8.bf16 %v1538
    %v1691 = vunpack.c.h.s8.bf16 %v1535
    %v1692 = vunpack.c.h.s8.bf16 %v1536
    %v1693 = vunpack.c.h.s8.bf16 %v1537
    %v1694 = vunpack.c.h.s8.bf16 %v1538
    %v1695 = vunpack.c.l.s8.bf16 %v1539
    %v1696 = vunpack.c.l.s8.bf16 %v1540
    %v1697 = vunpack.c.l.s8.bf16 %v1541
    %v1698 = vunpack.c.l.s8.bf16 %v1542
    %v1699 = vunpack.c.h.s8.bf16 %v1539
    %v1700 = vunpack.c.h.s8.bf16 %v1540
    %v1701 = vunpack.c.h.s8.bf16 %v1541
    %v1702 = vunpack.c.h.s8.bf16 %v1542
    %v1703 = vunpack.c.l.s8.bf16 %v1543
    %v1704 = vunpack.c.l.s8.bf16 %v1544
    %v1705 = vunpack.c.l.s8.bf16 %v1545
    %v1706 = vunpack.c.l.s8.bf16 %v1546
    %v1707 = vunpack.c.h.s8.bf16 %v1543
    %v1708 = vunpack.c.h.s8.bf16 %v1544
    %v1709 = vunpack.c.h.s8.bf16 %v1545
    %v1710 = vunpack.c.h.s8.bf16 %v1546
    %v1711 = vunpack.c.l.s8.bf16 %v1547
    %v1712 = vunpack.c.l.s8.bf16 %v1548
    %v1713 = vunpack.c.l.s8.bf16 %v1549
    %v1714 = vunpack.c.l.s8.bf16 %v1550
    %v1715 = vunpack.c.h.s8.bf16 %v1547
    %v1716 = vunpack.c.h.s8.bf16 %v1548
    %v1717 = vunpack.c.h.s8.bf16 %v1549
    %v1718 = vunpack.c.h.s8.bf16 %v1550
    %v1719 = vunpack.c.l.s8.bf16 %v1551
    %v1720 = vunpack.c.l.s8.bf16 %v1552
    %v1721 = vunpack.c.l.s8.bf16 %v1553
    %v1722 = vunpack.c.l.s8.bf16 %v1554
    %v1723 = vunpack.c.h.s8.bf16 %v1551
    %v1724 = vunpack.c.h.s8.bf16 %v1552
    %v1725 = vunpack.c.h.s8.bf16 %v1553
    %v1726 = vunpack.c.h.s8.bf16 %v1554
    %v1727 = vunpack.c.l.s8.bf16 %v1555
    %v1728 = vunpack.c.l.s8.bf16 %v1556
    %v1729 = vunpack.c.l.s8.bf16 %v1557
    %v1730 = vunpack.c.l.s8.bf16 %v1558
    %v1731 = vunpack.c.h.s8.bf16 %v1555
    %v1732 = vunpack.c.h.s8.bf16 %v1556
    %v1733 = vunpack.c.h.s8.bf16 %v1557
    %v1734 = vunpack.c.h.s8.bf16 %v1558
    %v1735 = vunpack.c.l.s8.bf16 %v1559
    %v1736 = vunpack.c.l.s8.bf16 %v1560
    %v1737 = vunpack.c.l.s8.bf16 %v1561
    %v1738 = vunpack.c.l.s8.bf16 %v1562
    %v1739 = vunpack.c.h.s8.bf16 %v1559
    %v1740 = vunpack.c.h.s8.bf16 %v1560
    %v1741 = vunpack.c.h.s8.bf16 %v1561
    %v1742 = vunpack.c.h.s8.bf16 %v1562
    %v1743 = vunpack.c.l.s8.bf16 %v1563
    %v1744 = vunpack.c.l.s8.bf16 %v1564
    %v1745 = vunpack.c.l.s8.bf16 %v1565
    %v1746 = vunpack.c.l.s8.bf16 %v1566
    %v1747 = vunpack.c.h.s8.bf16 %v1563
    %v1748 = vunpack.c.h.s8.bf16 %v1564
    %v1749 = vunpack.c.h.s8.bf16 %v1565
    %v1750 = vunpack.c.h.s8.bf16 %v1566
    %v1751 = vunpack.c.l.s8.bf16 %v1567
    %v1752 = vunpack.c.l.s8.bf16 %v1568
    %v1753 = vunpack.c.l.s8.bf16 %v1569
    %v1754 = vunpack.c.l.s8.bf16 %v1570
    %v1755 = vunpack.c.h.s8.bf16 %v1567
    %v1756 = vunpack.c.h.s8.bf16 %v1568
    %v1757 = vunpack.c.h.s8.bf16 %v1569
    %v1758 = vunpack.c.h.s8.bf16 %v1570
    %v1759 = vunpack.c.l.s8.bf16 %v1571
    %v1760 = vunpack.c.l.s8.bf16 %v1572
    %v1761 = vunpack.c.l.s8.bf16 %v1573
    %v1762 = vunpack.c.l.s8.bf16 %v1574
    %v1763 = vunpack.c.h.s8.bf16 %v1571
    %v1764 = vunpack.c.h.s8.bf16 %v1572
    %v1765 = vunpack.c.h.s8.bf16 %v1573
    %v1766 = vunpack.c.h.s8.bf16 %v1574
    %v1767 = vunpack.c.l.s8.bf16 %v1575
    %v1768 = vunpack.c.l.s8.bf16 %v1576
    %v1769 = vunpack.c.l.s8.bf16 %v1577
    %v1770 = vunpack.c.l.s8.bf16 %v1578
    %v1771 = vunpack.c.h.s8.bf16 %v1575
    %v1772 = vunpack.c.h.s8.bf16 %v1576
    %v1773 = vunpack.c.h.s8.bf16 %v1577
    %v1774 = vunpack.c.h.s8.bf16 %v1578
    %v1775 = vunpack.c.l.s8.bf16 %v1579
    %v1776 = vunpack.c.l.s8.bf16 %v1580
    %v1777 = vunpack.c.l.s8.bf16 %v1581
    %v1778 = vunpack.c.l.s8.bf16 %v1582
    %v1779 = vunpack.c.h.s8.bf16 %v1579
    %v1780 = vunpack.c.h.s8.bf16 %v1580
    %v1781 = vunpack.c.h.s8.bf16 %v1581
    %v1782 = vunpack.c.h.s8.bf16 %v1582
    %v1783 = vunpack.c.l.s8.bf16 %v1583
    %v1784 = vunpack.c.l.s8.bf16 %v1584
    %v1785 = vunpack.c.l.s8.bf16 %v1585
    %v1786 = vunpack.c.l.s8.bf16 %v1586
    %v1787 = vunpack.c.h.s8.bf16 %v1583
    %v1788 = vunpack.c.h.s8.bf16 %v1584
    %v1789 = vunpack.c.h.s8.bf16 %v1585
    %v1790 = vunpack.c.h.s8.bf16 %v1586
    %v1791 = vunpack.c.l.s8.bf16 %v1587
    %v1792 = vunpack.c.l.s8.bf16 %v1588
    %v1793 = vunpack.c.l.s8.bf16 %v1589
    %v1794 = vunpack.c.l.s8.bf16 %v1590
    %v1795 = vunpack.c.h.s8.bf16 %v1587
    %v1796 = vunpack.c.h.s8.bf16 %v1588
    %v1797 = vunpack.c.h.s8.bf16 %v1589
    %v1798 = vunpack.c.h.s8.bf16 %v1590
    %v1799 = vunpack.c.l.s8.bf16 %v1591
    %v1800 = vunpack.c.l.s8.bf16 %v1592
    %v1801 = vunpack.c.l.s8.bf16 %v1593
    %v1802 = vunpack.c.l.s8.bf16 %v1594
    %v1803 = vunpack.c.h.s8.bf16 %v1591
    %v1804 = vunpack.c.h.s8.bf16 %v1592
    %v1805 = vunpack.c.h.s8.bf16 %v1593
    %v1806 = vunpack.c.h.s8.bf16 %v1594
    %v1807 = vunpack.c.l.s8.bf16 %v1595
    %v1808 = vunpack.c.l.s8.bf16 %v1596
    %v1809 = vunpack.c.l.s8.bf16 %v1597
    %v1810 = vunpack.c.l.s8.bf16 %v1598
    %v1811 = vunpack.c.h.s8.bf16 %v1595
    %v1812 = vunpack.c.h.s8.bf16 %v1596
    %v1813 = vunpack.c.h.s8.bf16 %v1597
    %v1814 = vunpack.c.h.s8.bf16 %v1598
    %v1815 = vunpack.c.l.s8.bf16 %v1599
    %v1816 = vunpack.c.l.s8.bf16 %v1600
    %v1817 = vunpack.c.l.s8.bf16 %v1601
    %v1818 = vunpack.c.l.s8.bf16 %v1602
    %v1819 = vunpack.c.h.s8.bf16 %v1599
    %v1820 = vunpack.c.h.s8.bf16 %v1600
    %v1821 = vunpack.c.h.s8.bf16 %v1601
    %v1822 = vunpack.c.h.s8.bf16 %v1602
    %v1823 = vunpack.c.l.s8.bf16 %v1603
    %v1824 = vunpack.c.l.s8.bf16 %v1604
    %v1825 = vunpack.c.l.s8.bf16 %v1605
    %v1826 = vunpack.c.l.s8.bf16 %v1606
    %v1827 = vunpack.c.h.s8.bf16 %v1603
    %v1828 = vunpack.c.h.s8.bf16 %v1604
    %v1829 = vunpack.c.h.s8.bf16 %v1605
    %v1830 = vunpack.c.h.s8.bf16 %v1606
    %v1831 = vunpack.c.l.s8.bf16 %v1607
    %v1832 = vunpack.c.l.s8.bf16 %v1608
    %v1833 = vunpack.c.l.s8.bf16 %v1609
    %v1834 = vunpack.c.l.s8.bf16 %v1610
    %v1835 = vunpack.c.h.s8.bf16 %v1607
    %v1836 = vunpack.c.h.s8.bf16 %v1608
    %v1837 = vunpack.c.h.s8.bf16 %v1609
    %v1838 = vunpack.c.h.s8.bf16 %v1610
    %v1839 = vunpack.c.l.s8.bf16 %v1611
    %v1840 = vunpack.c.l.s8.bf16 %v1612
    %v1841 = vunpack.c.l.s8.bf16 %v1613
    %v1842 = vunpack.c.l.s8.bf16 %v1614
    %v1843 = vunpack.c.h.s8.bf16 %v1611
    %v1844 = vunpack.c.h.s8.bf16 %v1612
    %v1845 = vunpack.c.h.s8.bf16 %v1613
    %v1846 = vunpack.c.h.s8.bf16 %v1614
    %v1847 = vunpack.c.l.s8.bf16 %v1615
    %v1848 = vunpack.c.l.s8.bf16 %v1616
    %v1849 = vunpack.c.l.s8.bf16 %v1617
    %v1850 = vunpack.c.l.s8.bf16 %v1618
    %v1851 = vunpack.c.h.s8.bf16 %v1615
    %v1852 = vunpack.c.h.s8.bf16 %v1616
    %v1853 = vunpack.c.h.s8.bf16 %v1617
    %v1854 = vunpack.c.h.s8.bf16 %v1618
    %v1855 = vunpack.c.l.s8.bf16 %v1619
    %v1856 = vunpack.c.l.s8.bf16 %v1620
    %v1857 = vunpack.c.l.s8.bf16 %v1621
    %v1858 = vunpack.c.l.s8.bf16 %v1622
    %v1859 = vunpack.c.h.s8.bf16 %v1619
    %v1860 = vunpack.c.h.s8.bf16 %v1620
    %v1861 = vunpack.c.h.s8.bf16 %v1621
    %v1862 = vunpack.c.h.s8.bf16 %v1622
    %v1863 = vunpack.c.l.s8.bf16 %v1623
    %v1864 = vunpack.c.l.s8.bf16 %v1624
    %v1865 = vunpack.c.l.s8.bf16 %v1625
    %v1866 = vunpack.c.l.s8.bf16 %v1626
    %v1867 = vunpack.c.h.s8.bf16 %v1623
    %v1868 = vunpack.c.h.s8.bf16 %v1624
    %v1869 = vunpack.c.h.s8.bf16 %v1625
    %v1870 = vunpack.c.h.s8.bf16 %v1626
    %v1871 = vunpack.c.l.s8.bf16 %v1627
    %v1872 = vunpack.c.l.s8.bf16 %v1628
    %v1873 = vunpack.c.l.s8.bf16 %v1629
    %v1874 = vunpack.c.l.s8.bf16 %v1630
    %v1875 = vunpack.c.h.s8.bf16 %v1627
    %v1876 = vunpack.c.h.s8.bf16 %v1628
    %v1877 = vunpack.c.h.s8.bf16 %v1629
    %v1878 = vunpack.c.h.s8.bf16 %v1630
    %v1879 = vunpack.c.l.s8.bf16 %v1631
    %v1880 = vunpack.c.l.s8.bf16 %v1632
    %v1881 = vunpack.c.l.s8.bf16 %v1633
    %v1882 = vunpack.c.l.s8.bf16 %v1634
    %v1883 = vunpack.c.h.s8.bf16 %v1631
    %v1884 = vunpack.c.h.s8.bf16 %v1632
    %v1885 = vunpack.c.h.s8.bf16 %v1633
    %v1886 = vunpack.c.h.s8.bf16 %v1634
    %v1887 = vunpack.c.l.s8.bf16 %v1635
    %v1888 = vunpack.c.l.s8.bf16 %v1636
    %v1889 = vunpack.c.l.s8.bf16 %v1637
    %v1890 = vunpack.c.l.s8.bf16 %v1638
    %v1891 = vunpack.c.h.s8.bf16 %v1635
    %v1892 = vunpack.c.h.s8.bf16 %v1636
    %v1893 = vunpack.c.h.s8.bf16 %v1637
    %v1894 = vunpack.c.h.s8.bf16 %v1638
    %1895 = vmatprep.subr.bf16.mxu0 %v1640
    %1896 = vmatpush1.bf16.msra.mxu0 %v1639
    %1897 = vmatprep.subr.bf16.mxu0 %v1644
    %1898 = vmatpush1.bf16.msra.mxu0 %v1643
    %1899 = vmatprep.subr.bf16.mxu0 %v1648
    %1900 = vmatpush1.bf16.msra.mxu0 %v1647
    %1901 = vmatprep.subr.bf16.mxu0 %v1652
    %1902 = vmatpush1.bf16.msra.mxu0 %v1651
    %1903 = vmatprep.subr.bf16.mxu0 %v1656
    %1904 = vmatpush1.bf16.msra.mxu0 %v1655
    %1905 = vmatprep.subr.bf16.mxu0 %v1660
    %1906 = vmatpush1.bf16.msra.mxu0 %v1659
    %1907 = vmatprep.subr.bf16.mxu0 %v1664
    %1908 = vmatpush1.bf16.msra.mxu0 %v1663
    %1909 = vmatprep.subr.bf16.mxu0 %v1668
    %1910 = vmatpush1.bf16.msra.mxu0 %v1667
    %1911 = vmatprep.subr.bf16.mxu0 %v1672
    %1912 = vmatpush1.bf16.msra.mxu0 %v1671
    %1913 = vmatprep.subr.bf16.mxu0 %v1676
    %1914 = vmatpush1.bf16.msra.mxu0 %v1675
    %1915 = vmatprep.subr.bf16.mxu0 %v1680
    %1916 = vmatpush1.bf16.msra.mxu0 %v1679
    %1917 = vmatprep.subr.bf16.mxu0 %v1684
    %1918 = vmatpush1.bf16.msra.mxu0 %v1683
    %1919 = vmatprep.subr.bf16.mxu0 %v1688
    %1920 = vmatpush1.bf16.msra.mxu0 %v1687
    %1921 = vmatprep.subr.bf16.mxu0 %v1692
    %1922 = vmatpush1.bf16.msra.mxu0 %v1691
    %1923 = vmatprep.subr.bf16.mxu0 %v1696
    %1924 = vmatpush1.bf16.msra.mxu0 %v1695
    %1925 = vmatprep.subr.bf16.mxu0 %v1700
    %1926 = vmatpush1.bf16.msra.mxu0 %v1699
    %1927 = vmatprep.mubr.bf16.mxu0 %v1504
    %1928 = vmatmul.mubr.bf16.gmra.mrb[0].mxu0 %v1503
    %v1929 = vpop.f32.mrb[0].mxu0
    %v1930 = vadd.f32 0.0, %v1929
    %v1931 = vpop.f32.mrb[0].mxu0
    %v1932 = vadd.f32 0.0, %v1931
    %v1933 = vpop.f32.mrb[0].mxu0
    %v1934 = vpop.f32.mrb[0].mxu0
    %1935 = vdwg.mxu0
    %1936 = vmatprep.subr.bf16.mxu0 %v1704
    %1937 = vmatpush1.bf16.msra.mxu0 %v1703
    %1938 = vmatprep.subr.bf16.mxu0 %v1708
    %1939 = vmatpush1.bf16.msra.mxu0 %v1707
    %1940 = vmatprep.subr.bf16.mxu0 %v1712
    %1941 = vmatpush1.bf16.msra.mxu0 %v1711
    %1942 = vmatprep.subr.bf16.mxu0 %v1716
    %1943 = vmatpush1.bf16.msra.mxu0 %v1715
    %1944 = vmatprep.subr.bf16.mxu0 %v1720
    %1945 = vmatpush1.bf16.msra.mxu0 %v1719
    %1946 = vmatprep.subr.bf16.mxu0 %v1724
    %1947 = vmatpush1.bf16.msra.mxu0 %v1723
    %1948 = vmatprep.subr.bf16.mxu0 %v1728
    %1949 = vmatpush1.bf16.msra.mxu0 %v1727
    %1950 = vmatprep.subr.bf16.mxu0 %v1732
    %1951 = vmatpush1.bf16.msra.mxu0 %v1731
    %1952 = vmatprep.subr.bf16.mxu0 %v1736
    %1953 = vmatpush1.bf16.msra.mxu0 %v1735
    %1954 = vmatprep.subr.bf16.mxu0 %v1740
    %1955 = vmatpush1.bf16.msra.mxu0 %v1739
    %1956 = vmatprep.subr.bf16.mxu0 %v1744
    %1957 = vmatpush1.bf16.msra.mxu0 %v1743
    %1958 = vmatprep.subr.bf16.mxu0 %v1748
    %1959 = vmatpush1.bf16.msra.mxu0 %v1747
    %1960 = vmatprep.subr.bf16.mxu0 %v1752
    %1961 = vmatpush1.bf16.msra.mxu0 %v1751
    %1962 = vmatprep.subr.bf16.mxu0 %v1756
    %1963 = vmatpush1.bf16.msra.mxu0 %v1755
    %1964 = vmatprep.subr.bf16.mxu0 %v1760
    %1965 = vmatpush1.bf16.msra.mxu0 %v1759
    %1966 = vmatprep.subr.bf16.mxu0 %v1764
    %1967 = vmatpush1.bf16.msra.mxu0 %v1763
    %1968 = vmatprep.mubr.bf16.mxu0 %v1506
    %1969 = vmatmul.mubr.bf16.gmra.mrb[0].mxu0 %v1505
    %v1970 = vpop.f32.mrb[0].mxu0
    %v1971 = vadd.f32 %v1930, %v1970
    %v1972 = vpop.f32.mrb[0].mxu0
    %v1973 = vadd.f32 %v1932, %v1972
    %v1974 = vpop.f32.mrb[0].mxu0
    %v1975 = vpop.f32.mrb[0].mxu0
    %1976 = vdwg.mxu0
    %1977 = vmatprep.subr.bf16.mxu0 %v1768
    %1978 = vmatpush1.bf16.msra.mxu0 %v1767
    %1979 = vmatprep.subr.bf16.mxu0 %v1772
    %1980 = vmatpush1.bf16.msra.mxu0 %v1771
    %1981 = vmatprep.subr.bf16.mxu0 %v1776
    %1982 = vmatpush1.bf16.msra.mxu0 %v1775
    %1983 = vmatprep.subr.bf16.mxu0 %v1780
    %1984 = vmatpush1.bf16.msra.mxu0 %v1779
    %1985 = vmatprep.subr.bf16.mxu0 %v1784
    %1986 = vmatpush1.bf16.msra.mxu0 %v1783
    %1987 = vmatprep.subr.bf16.mxu0 %v1788
    %1988 = vmatpush1.bf16.msra.mxu0 %v1787
    %1989 = vmatprep.subr.bf16.mxu0 %v1792
    %1990 = vmatpush1.bf16.msra.mxu0 %v1791
    %1991 = vmatprep.subr.bf16.mxu0 %v1796
    %1992 = vmatpush1.bf16.msra.mxu0 %v1795
    %1993 = vmatprep.subr.bf16.mxu0 %v1800
    %1994 = vmatpush1.bf16.msra.mxu0 %v1799
    %1995 = vmatprep.subr.bf16.mxu0 %v1804
    %1996 = vmatpush1.bf16.msra.mxu0 %v1803
    %1997 = vmatprep.subr.bf16.mxu0 %v1808
    %1998 = vmatpush1.bf16.msra.mxu0 %v1807
    %1999 = vmatprep.subr.bf16.mxu0 %v1812
    %2000 = vmatpush1.bf16.msra.mxu0 %v1811
    %2001 = vmatprep.subr.bf16.mxu0 %v1816
    %2002 = vmatpush1.bf16.msra.mxu0 %v1815
    %2003 = vmatprep.subr.bf16.mxu0 %v1820
    %2004 = vmatpush1.bf16.msra.mxu0 %v1819
    %2005 = vmatprep.subr.bf16.mxu0 %v1824
    %2006 = vmatpush1.bf16.msra.mxu0 %v1823
    %2007 = vmatprep.subr.bf16.mxu0 %v1828
    %2008 = vmatpush1.bf16.msra.mxu0 %v1827
    %2009 = vmatprep.mubr.bf16.mxu0 %v1508
    %2010 = vmatmul.mubr.bf16.gmra.mrb[0].mxu0 %v1507
    %v2011 = vpop.f32.mrb[0].mxu0
    %v2012 = vadd.f32 %v1971, %v2011
    %v2013 = vpop.f32.mrb[0].mxu0
    %v2014 = vadd.f32 %v1973, %v2013
    %v2015 = vpop.f32.mrb[0].mxu0
    %v2016 = vpop.f32.mrb[0].mxu0
    %2017 = vdwg.mxu0
    %2018 = vmatprep.subr.bf16.mxu0 %v1832
    %2019 = vmatpush1.bf16.msra.mxu0 %v1831
    %2020 = vmatprep.subr.bf16.mxu0 %v1836
    %2021 = vmatpush1.bf16.msra.mxu0 %v1835
    %2022 = vmatprep.subr.bf16.mxu0 %v1840
    %2023 = vmatpush1.bf16.msra.mxu0 %v1839
    %2024 = vmatprep.subr.bf16.mxu0 %v1844
    %2025 = vmatpush1.bf16.msra.mxu0 %v1843
    %2026 = vmatprep.subr.bf16.mxu0 %v1848
    %2027 = vmatpush1.bf16.msra.mxu0 %v1847
    %2028 = vmatprep.subr.bf16.mxu0 %v1852
    %2029 = vmatpush1.bf16.msra.mxu0 %v1851
    %2030 = vmatprep.subr.bf16.mxu0 %v1856
    %2031 = vmatpush1.bf16.msra.mxu0 %v1855
    %2032 = vmatprep.subr.bf16.mxu0 %v1860
    %2033 = vmatpush1.bf16.msra.mxu0 %v1859
    %2034 = vmatprep.subr.bf16.mxu0 %v1864
    %2035 = vmatpush1.bf16.msra.mxu0 %v1863
    %2036 = vmatprep.subr.bf16.mxu0 %v1868
    %2037 = vmatpush1.bf16.msra.mxu0 %v1867
    %2038 = vmatprep.subr.bf16.mxu0 %v1872
    %2039 = vmatpush1.bf16.msra.mxu0 %v1871
    %2040 = vmatprep.subr.bf16.mxu0 %v1876
    %2041 = vmatpush1.bf16.msra.mxu0 %v1875
    %2042 = vmatprep.subr.bf16.mxu0 %v1880
    %2043 = vmatpush1.bf16.msra.mxu0 %v1879
    %2044 = vmatprep.subr.bf16.mxu0 %v1884
    %2045 = vmatpush1.bf16.msra.mxu0 %v1883
    %2046 = vmatprep.subr.bf16.mxu0 %v1888
    %2047 = vmatpush1.bf16.msra.mxu0 %v1887
    %2048 = vmatprep.subr.bf16.mxu0 %v1892
    %2049 = vmatpush1.bf16.msra.mxu0 %v1891
    %2050 = vmatprep.mubr.bf16.mxu0 %v1510
    %2051 = vmatmul.mubr.bf16.gmra.mrb[0].mxu0 %v1509
    %v2052 = vpop.f32.mrb[0].mxu0
    %v2053 = vadd.f32 %v2012, %v2052
    %v2054 = vpop.f32.mrb[0].mxu0
    %v2055 = vadd.f32 %v2014, %v2054
    %v2056 = vpop.f32.mrb[0].mxu0
    %v2057 = vpop.f32.mrb[0].mxu0
    %2058 = vdwg.mxu0
    %2059 = vmatprep.subr.bf16.mxu0 %v1642
    %2060 = vmatpush1.bf16.msra.mxu0 %v1641
    %2061 = vmatprep.subr.bf16.mxu0 %v1646
    %2062 = vmatpush1.bf16.msra.mxu0 %v1645
    %2063 = vmatprep.subr.bf16.mxu0 %v1650
    %2064 = vmatpush1.bf16.msra.mxu0 %v1649
    %2065 = vmatprep.subr.bf16.mxu0 %v1654
    %2066 = vmatpush1.bf16.msra.mxu0 %v1653
    %2067 = vmatprep.subr.bf16.mxu0 %v1658
    %2068 = vmatpush1.bf16.msra.mxu0 %v1657
    %2069 = vmatprep.subr.bf16.mxu0 %v1662
    %2070 = vmatpush1.bf16.msra.mxu0 %v1661
    %2071 = vmatprep.subr.bf16.mxu0 %v1666
    %2072 = vmatpush1.bf16.msra.mxu0 %v1665
    %2073 = vmatprep.subr.bf16.mxu0 %v1670
    %2074 = vmatpush1.bf16.msra.mxu0 %v1669
    %2075 = vmatprep.subr.bf16.mxu0 %v1674
    %2076 = vmatpush1.bf16.msra.mxu0 %v1673
    %2077 = vmatprep.subr.bf16.mxu0 %v1678
    %2078 = vmatpush1.bf16.msra.mxu0 %v1677
    %2079 = vmatprep.subr.bf16.mxu0 %v1682
    %2080 = vmatpush1.bf16.msra.mxu0 %v1681
    %2081 = vmatprep.subr.bf16.mxu0 %v1686
    %2082 = vmatpush1.bf16.msra.mxu0 %v1685
    %2083 = vmatprep.subr.bf16.mxu0 %v1690
    %2084 = vmatpush1.bf16.msra.mxu0 %v1689
    %2085 = vmatprep.subr.bf16.mxu0 %v1694
    %2086 = vmatpush1.bf16.msra.mxu0 %v1693
    %2087 = vmatprep.subr.bf16.mxu0 %v1698
    %2088 = vmatpush1.bf16.msra.mxu0 %v1697
    %2089 = vmatprep.subr.bf16.mxu0 %v1702
    %2090 = vmatpush1.bf16.msra.mxu0 %v1701
    %2091 = vmatprep.mubr.bf16.mxu0 %v1504
    %2092 = vmatmul.mubr.bf16.gmra.mrb[0].mxu0 %v1503
    %v2093 = vpop.f32.mrb[0].mxu0
    %v2094 = vadd.f32 0.0, %v2093
    %v2095 = vpop.f32.mrb[0].mxu0
    %v2096 = vadd.f32 0.0, %v2095
    %v2097 = vpop.f32.mrb[0].mxu0
    %v2098 = vpop.f32.mrb[0].mxu0
    %2099 = vdwg.mxu0
    %2100 = vmatprep.subr.bf16.mxu0 %v1706
    %2101 = vmatpush1.bf16.msra.mxu0 %v1705
    %2102 = vmatprep.subr.bf16.mxu0 %v1710
    %2103 = vmatpush1.bf16.msra.mxu0 %v1709
    %2104 = vmatprep.subr.bf16.mxu0 %v1714
    %2105 = vmatpush1.bf16.msra.mxu0 %v1713
    %2106 = vmatprep.subr.bf16.mxu0 %v1718
    %2107 = vmatpush1.bf16.msra.mxu0 %v1717
    %2108 = vmatprep.subr.bf16.mxu0 %v1722
    %2109 = vmatpush1.bf16.msra.mxu0 %v1721
    %2110 = vmatprep.subr.bf16.mxu0 %v1726
    %2111 = vmatpush1.bf16.msra.mxu0 %v1725
    %2112 = vmatprep.subr.bf16.mxu0 %v1730
    %2113 = vmatpush1.bf16.msra.mxu0 %v1729
    %2114 = vmatprep.subr.bf16.mxu0 %v1734
    %2115 = vmatpush1.bf16.msra.mxu0 %v1733
    %2116 = vmatprep.subr.bf16.mxu0 %v1738
    %2117 = vmatpush1.bf16.msra.mxu0 %v1737
    %2118 = vmatprep.subr.bf16.mxu0 %v1742
    %2119 = vmatpush1.bf16.msra.mxu0 %v1741
    %2120 = vmatprep.subr.bf16.mxu0 %v1746
    %2121 = vmatpush1.bf16.msra.mxu0 %v1745
    %2122 = vmatprep.subr.bf16.mxu0 %v1750
    %2123 = vmatpush1.bf16.msra.mxu0 %v1749
    %2124 = vmatprep.subr.bf16.mxu0 %v1754
    %2125 = vmatpush1.bf16.msra.mxu0 %v1753
    %2126 = vmatprep.subr.bf16.mxu0 %v1758
    %2127 = vmatpush1.bf16.msra.mxu0 %v1757
    %2128 = vmatprep.subr.bf16.mxu0 %v1762
    %2129 = vmatpush1.bf16.msra.mxu0 %v1761
    %2130 = vmatprep.subr.bf16.mxu0 %v1766
    %2131 = vmatpush1.bf16.msra.mxu0 %v1765
    %2132 = vmatprep.mubr.bf16.mxu0 %v1506
    %2133 = vmatmul.mubr.bf16.gmra.mrb[0].mxu0 %v1505
    %v2134 = vpop.f32.mrb[0].mxu0
    %v2135 = vadd.f32 %v2094, %v2134
    %v2136 = vpop.f32.mrb[0].mxu0
    %v2137 = vadd.f32 %v2096, %v2136
    %v2138 = vpop.f32.mrb[0].mxu0
    %v2139 = vpop.f32.mrb[0].mxu0
    %2140 = vdwg.mxu0
    %2141 = vmatprep.subr.bf16.mxu0 %v1770
    %2142 = vmatpush1.bf16.msra.mxu0 %v1769
    %2143 = vmatprep.subr.bf16.mxu0 %v1774
    %2144 = vmatpush1.bf16.msra.mxu0 %v1773
    %2145 = vmatprep.subr.bf16.mxu0 %v1778
    %2146 = vmatpush1.bf16.msra.mxu0 %v1777
    %2147 = vmatprep.subr.bf16.mxu0 %v1782
    %2148 = vmatpush1.bf16.msra.mxu0 %v1781
    %2149 = vmatprep.subr.bf16.mxu0 %v1786
    %2150 = vmatpush1.bf16.msra.mxu0 %v1785
    %2151 = vmatprep.subr.bf16.mxu0 %v1790
    %2152 = vmatpush1.bf16.msra.mxu0 %v1789
    %2153 = vmatprep.subr.bf16.mxu0 %v1794
    %2154 = vmatpush1.bf16.msra.mxu0 %v1793
    %2155 = vmatprep.subr.bf16.mxu0 %v1798
    %2156 = vmatpush1.bf16.msra.mxu0 %v1797
    %2157 = vmatprep.subr.bf16.mxu0 %v1802
    %2158 = vmatpush1.bf16.msra.mxu0 %v1801
    %2159 = vmatprep.subr.bf16.mxu0 %v1806
    %2160 = vmatpush1.bf16.msra.mxu0 %v1805
    %2161 = vmatprep.subr.bf16.mxu0 %v1810
    %2162 = vmatpush1.bf16.msra.mxu0 %v1809
    %2163 = vmatprep.subr.bf16.mxu0 %v1814
    %2164 = vmatpush1.bf16.msra.mxu0 %v1813
    %2165 = vmatprep.subr.bf16.mxu0 %v1818
    %2166 = vmatpush1.bf16.msra.mxu0 %v1817
    %2167 = vmatprep.subr.bf16.mxu0 %v1822
    %2168 = vmatpush1.bf16.msra.mxu0 %v1821
    %2169 = vmatprep.subr.bf16.mxu0 %v1826
    %2170 = vmatpush1.bf16.msra.mxu0 %v1825
    %2171 = vmatprep.subr.bf16.mxu0 %v1830
    %2172 = vmatpush1.bf16.msra.mxu0 %v1829
    %2173 = vmatprep.mubr.bf16.mxu0 %v1508
    %2174 = vmatmul.mubr.bf16.gmra.mrb[0].mxu0 %v1507
    %v2175 = vpop.f32.mrb[0].mxu0
    %v2176 = vadd.f32 %v2135, %v2175
    %v2177 = vpop.f32.mrb[0].mxu0
    %v2178 = vadd.f32 %v2137, %v2177
    %v2179 = vpop.f32.mrb[0].mxu0
    %v2180 = vpop.f32.mrb[0].mxu0
    %2181 = vdwg.mxu0
    %2182 = vmatprep.subr.bf16.mxu0 %v1834
    %2183 = vmatpush1.bf16.msra.mxu0 %v1833
    %2184 = vmatprep.subr.bf16.mxu0 %v1838
    %2185 = vmatpush1.bf16.msra.mxu0 %v1837
    %2186 = vmatprep.subr.bf16.mxu0 %v1842
    %2187 = vmatpush1.bf16.msra.mxu0 %v1841
    %2188 = vmatprep.subr.bf16.mxu0 %v1846
    %2189 = vmatpush1.bf16.msra.mxu0 %v1845
    %2190 = vmatprep.subr.bf16.mxu0 %v1850
    %2191 = vmatpush1.bf16.msra.mxu0 %v1849
    %2192 = vmatprep.subr.bf16.mxu0 %v1854
    %2193 = vmatpush1.bf16.msra.mxu0 %v1853
    %2194 = vmatprep.subr.bf16.mxu0 %v1858
    %2195 = vmatpush1.bf16.msra.mxu0 %v1857
    %2196 = vmatprep.subr.bf16.mxu0 %v1862
    %2197 = vmatpush1.bf16.msra.mxu0 %v1861
    %2198 = vmatprep.subr.bf16.mxu0 %v1866
    %2199 = vmatpush1.bf16.msra.mxu0 %v1865
    %2200 = vmatprep.subr.bf16.mxu0 %v1870
    %2201 = vmatpush1.bf16.msra.mxu0 %v1869
    %2202 = vmatprep.subr.bf16.mxu0 %v1874
    %2203 = vmatpush1.bf16.msra.mxu0 %v1873
    %2204 = vmatprep.subr.bf16.mxu0 %v1878
    %2205 = vmatpush1.bf16.msra.mxu0 %v1877
    %2206 = vmatprep.subr.bf16.mxu0 %v1882
    %2207 = vmatpush1.bf16.msra.mxu0 %v1881
    %2208 = vmatprep.subr.bf16.mxu0 %v1886
    %2209 = vmatpush1.bf16.msra.mxu0 %v1885
    %2210 = vmatprep.subr.bf16.mxu0 %v1890
    %2211 = vmatpush1.bf16.msra.mxu0 %v1889
    %2212 = vmatprep.subr.bf16.mxu0 %v1894
    %2213 = vmatpush1.bf16.msra.mxu0 %v1893
    %2214 = vmatprep.mubr.bf16.mxu0 %v1510
    %2215 = vmatmul.mubr.bf16.gmra.mrb[0].mxu0 %v1509
    %v2216 = vpop.f32.mrb[0].mxu0
    %v2217 = vadd.f32 %v2176, %v2216
    %v2218 = vpop.f32.mrb[0].mxu0
    %v2219 = vadd.f32 %v2178, %v2218
    %v2220 = vpop.f32.mrb[0].mxu0
    %v2221 = vpop.f32.mrb[0].mxu0
    %2222 = vdwg.mxu0
    %v2223 = vld [vmem:[#allocation17 + $0x18] sm:$0xf]
    %v2225 = vlaneseq
    %v2226 = vshrl.u32 %v2225, 7
    %v2227 = vsub.s32 0, %v2226
    %v2228 = vrot.slane %v2223, %v2227
    %v2229 = vlaneseq
    %v2230 = vshrl.u32 %v2229, 7
    %v2231 = vsub.s32 1, %v2230
    %v2232 = vrot.slane %v2223, %v2231
    %v2233 = vlaneseq
    %v2234 = vshrl.u32 %v2233, 7
    %v2235 = vsub.s32 2, %v2234
    %v2236 = vrot.slane %v2223, %v2235
    %v2237 = vlaneseq
    %v2238 = vshrl.u32 %v2237, 7
    %v2239 = vsub.s32 3, %v2238
    %v2240 = vrot.slane %v2223, %v2239
    %v2245 = vmul.f32 %v2053, %v2228
    %v2246 = vmul.f32 %v2055, %v2232
    %v2247 = vmul.f32 %v2217, %v2236
    %v2248 = vmul.f32 %v2219, %v2240
    %v2249 = vrot.slane %v2245, 4
    %v2250 = vadd.f32 %v2245, %v2249
    %v2251 = vrot.slane %v2250, 2
    %v2252 = vadd.f32 %v2250, %v2251
    %v2253 = vrot.slane %v2252, 1
    %v2254 = vadd.f32 %v2252, %v2253
    %v2255 = vrot.slane %v2246, 4
    %v2256 = vadd.f32 %v2246, %v2255
    %v2257 = vrot.slane %v2256, 2
    %v2258 = vadd.f32 %v2256, %v2257
    %v2259 = vrot.slane %v2258, 1
    %v2260 = vadd.f32 %v2258, %v2259
    %v2261 = vrot.slane %v2247, 4
    %v2262 = vadd.f32 %v2247, %v2261
    %v2263 = vrot.slane %v2262, 2
    %v2264 = vadd.f32 %v2262, %v2263
    %v2265 = vrot.slane %v2264, 1
    %v2266 = vadd.f32 %v2264, %v2265
    %v2267 = vrot.slane %v2248, 4
    %v2268 = vadd.f32 %v2248, %v2267
    %v2269 = vrot.slane %v2268, 2
    %v2270 = vadd.f32 %v2268, %v2269
    %v2271 = vrot.slane %v2270, 1
    %v2272 = vadd.f32 %v2270, %v2271
    %v2273 = vmul.f32 %v2254, %v1250
    %v2274 = vmul.f32 %v2260, %v1250
    %v2275 = vmul.f32 %v2266, %v1250
    %v2276 = vmul.f32 %v2272, %v1250
    %v2277 = vmul.f32 %v2245, %v2245
    %v2278 = vmul.f32 %v2246, %v2246
    %v2279 = vmul.f32 %v2247, %v2247
    %v2280 = vmul.f32 %v2248, %v2248
    %v2281 = vrot.slane %v2277, 4
    %v2282 = vadd.f32 %v2277, %v2281
    %v2283 = vrot.slane %v2282, 2
    %v2284 = vadd.f32 %v2282, %v2283
    %v2285 = vrot.slane %v2284, 1
    %v2286 = vadd.f32 %v2284, %v2285
    %v2287 = vrot.slane %v2278, 4
    %v2288 = vadd.f32 %v2278, %v2287
    %v2289 = vrot.slane %v2288, 2
    %v2290 = vadd.f32 %v2288, %v2289
    %v2291 = vrot.slane %v2290, 1
    %v2292 = vadd.f32 %v2290, %v2291
    %v2293 = vrot.slane %v2279, 4
    %v2294 = vadd.f32 %v2279, %v2293
    %v2295 = vrot.slane %v2294, 2
    %v2296 = vadd.f32 %v2294, %v2295
    %v2297 = vrot.slane %v2296, 1
    %v2298 = vadd.f32 %v2296, %v2297
    %v2299 = vrot.slane %v2280, 4
    %v2300 = vadd.f32 %v2280, %v2299
    %v2301 = vrot.slane %v2300, 2
    %v2302 = vadd.f32 %v2300, %v2301
    %v2303 = vrot.slane %v2302, 1
    %v2304 = vadd.f32 %v2302, %v2303
    %v2305 = vmul.f32 %v2286, %v1250
    %v2306 = vmul.f32 %v2292, %v1250
    %v2307 = vmul.f32 %v2298, %v1250
    %v2308 = vmul.f32 %v2304, %v1250
    %v2309 = vmul.f32 %v2273, %v2273
    %v2310 = vmul.f32 %v2274, %v2274
    %v2311 = vmul.f32 %v2275, %v2275
    %v2312 = vmul.f32 %v2276, %v2276
    %v2313 = vsub.f32 %v2305, %v2309
    %v2314 = vsub.f32 %v2306, %v2310
    %v2315 = vsub.f32 %v2307, %v2311
    %v2316 = vsub.f32 %v2308, %v2312
    %v2317 = vmax.f32 %v2313, 0.0
    %v2318 = vmax.f32 %v2314, 0.0
    %v2319 = vmax.f32 %v2315, 0.0
    %v2320 = vmax.f32 %v2316, 0.0
    %v2321 = vsub.f32 %v2245, %v2273
    %v2322 = vsub.f32 %v2246, %v2274
    %v2323 = vsub.f32 %v2247, %v2275
    %v2324 = vsub.f32 %v2248, %v2276
    %v2325 = vadd.f32 %v2317, 1e-05
    %v2326 = vadd.f32 %v2318, 1e-05
    %v2327 = vadd.f32 %v2319, 1e-05
    %v2328 = vadd.f32 %v2320, 1e-05
    %v2329 = vrsqrt.pop %v2325
    %v2330 = vrsqrt.pop %v2326
    %v2331 = vrsqrt.pop %v2327
    %v2332 = vrsqrt.pop %v2328
    %v2333 = vmul.f32 %v2321, %v2329
    %v2334 = vmul.f32 %v2322, %v2330
    %v2335 = vmul.f32 %v2323, %v2331
    %v2336 = vmul.f32 %v2324, %v2332
    %v2337 = vld [vmem:[#allocation17 + $0x1c] sm:$0xf]
    %v2339 = vlaneseq
    %v2340 = vshrl.u32 %v2339, 7
    %v2341 = vsub.s32 0, %v2340
    %v2342 = vrot.slane %v2337, %v2341
    %v2343 = vlaneseq
    %v2344 = vshrl.u32 %v2343, 7
    %v2345 = vsub.s32 1, %v2344
    %v2346 = vrot.slane %v2337, %v2345
    %v2347 = vlaneseq
    %v2348 = vshrl.u32 %v2347, 7
    %v2349 = vsub.s32 2, %v2348
    %v2350 = vrot.slane %v2337, %v2349
    %v2351 = vlaneseq
    %v2352 = vshrl.u32 %v2351, 7
    %v2353 = vsub.s32 3, %v2352
    %v2354 = vrot.slane %v2337, %v2353
    %v2359 = vmul.f32 %v2333, %v2342
    %v2360 = vmul.f32 %v2334, %v2346
    %v2361 = vmul.f32 %v2335, %v2350
    %v2362 = vmul.f32 %v2336, %v2354
    %v2363 = vld [vmem:[#allocation17 + $0x20] sm:$0xf]
    %v2365 = vlaneseq
    %v2366 = vshrl.u32 %v2365, 7
    %v2367 = vsub.s32 0, %v2366
    %v2368 = vrot.slane %v2363, %v2367
    %v2369 = vlaneseq
    %v2370 = vshrl.u32 %v2369, 7
    %v2371 = vsub.s32 1, %v2370
    %v2372 = vrot.slane %v2363, %v2371
    %v2373 = vlaneseq
    %v2374 = vshrl.u32 %v2373, 7
    %v2375 = vsub.s32 2, %v2374
    %v2376 = vrot.slane %v2363, %v2375
    %v2377 = vlaneseq
    %v2378 = vshrl.u32 %v2377, 7
    %v2379 = vsub.s32 3, %v2378
    %v2380 = vrot.slane %v2363, %v2379
    %v2385 = vadd.f32 %v2359, %v2368
    %v2386 = vadd.f32 %v2360, %v2372
    %v2387 = vadd.f32 %v2361, %v2376
    %v2388 = vadd.f32 %v2362, %v2380
    %vm2389 = vcmp.gt.f32.partialorder %v2385, 0.0
    %vm2390 = vcmp.gt.f32.partialorder %v2386, 0.0
    %vm2391 = vcmp.gt.f32.partialorder %v2387, 0.0
    %vm2392 = vcmp.gt.f32.partialorder %v2388, 0.0
    %v2393 = vmul.f32 %v2385, 0.01
    %v2394 = vmul.f32 %v2386, 0.01
    %v2395 = vmul.f32 %v2387, 0.01
    %v2396 = vmul.f32 %v2388, 0.01
    %v2397 = vsel %vm2389, %v2385, %v2393
    %v2398 = vsel %vm2390, %v2386, %v2394
    %v2399 = vsel %vm2391, %v2387, %v2395
    %v2400 = vsel %vm2392, %v2388, %v2396
    %v2401 = vpack.c.bf16 %v2397, %v2397
    %v2402 = vpack.c.bf16 %v2398, %v2398
    %v2403 = vpack.c.bf16 %v2399, %v2399
    %v2404 = vpack.c.bf16 %v2400, %v2400
    %v2405 = vld [vmem:[#allocation10] sm:$0xff]
    %v2406 = vld [vmem:[#allocation10 + $0x8] sm:$0xff]
    %v2407 = vld [vmem:[#allocation10 + $0x10] sm:$0xff]
    %v2408 = vld [vmem:[#allocation10 + $0x18] sm:$0xff]
    %v2409 = vld [vmem:[#allocation10 + $0x20] sm:$0xff]
    %v2410 = vld [vmem:[#allocation10 + $0x28] sm:$0xff]
    %v2411 = vld [vmem:[#allocation10 + $0x30] sm:$0xff]
    %v2412 = vld [vmem:[#allocation10 + $0x38] sm:$0xff]
    %v2413 = vld [vmem:[#allocation10 + $0x40] sm:$0xff]
    %v2414 = vld [vmem:[#allocation10 + $0x48] sm:$0xff]
    %v2415 = vld [vmem:[#allocation10 + $0x50] sm:$0xff]
    %v2416 = vld [vmem:[#allocation10 + $0x58] sm:$0xff]
    %v2417 = vld [vmem:[#allocation10 + $0x60] sm:$0xff]
    %v2418 = vld [vmem:[#allocation10 + $0x68] sm:$0xff]
    %v2419 = vld [vmem:[#allocation10 + $0x70] sm:$0xff]
    %v2420 = vld [vmem:[#allocation10 + $0x78] sm:$0xff]
    %v2421 = vld [vmem:[#allocation10 + $0x80] sm:$0xff]
    %v2422 = vld [vmem:[#allocation10 + $0x88] sm:$0xff]
    %v2423 = vld [vmem:[#allocation10 + $0x90] sm:$0xff]
    %v2424 = vld [vmem:[#allocation10 + $0x98] sm:$0xff]
    %v2425 = vld [vmem:[#allocation10 + $0xa0] sm:$0xff]
    %v2426 = vld [vmem:[#allocation10 + $0xa8] sm:$0xff]
    %v2427 = vld [vmem:[#allocation10 + $0xb0] sm:$0xff]
    %v2428 = vld [vmem:[#allocation10 + $0xb8] sm:$0xff]
    %v2429 = vld [vmem:[#allocation10 + $0xc0] sm:$0xff]
    %v2430 = vld [vmem:[#allocation10 + $0xc8] sm:$0xff]
    %v2431 = vld [vmem:[#allocation10 + $0xd0] sm:$0xff]
    %v2432 = vld [vmem:[#allocation10 + $0xd8] sm:$0xff]
    %v2433 = vld [vmem:[#allocation10 + $0xe0] sm:$0xff]
    %v2434 = vld [vmem:[#allocation10 + $0xe8] sm:$0xff]
    %v2435 = vld [vmem:[#allocation10 + $0xf0] sm:$0xff]
    %v2436 = vld [vmem:[#allocation10 + $0xf8] sm:$0xff]
    %v2437 = vunpack.c.l.s8.bf16 %v2405
    %v2438 = vunpack.c.l.s8.bf16 %v2406
    %v2439 = vunpack.c.h.s8.bf16 %v2405
    %v2440 = vunpack.c.h.s8.bf16 %v2406
    %v2441 = vunpack.c.l.s8.bf16 %v2407
    %v2442 = vunpack.c.l.s8.bf16 %v2408
    %v2443 = vunpack.c.h.s8.bf16 %v2407
    %v2444 = vunpack.c.h.s8.bf16 %v2408
    %v2445 = vunpack.c.l.s8.bf16 %v2409
    %v2446 = vunpack.c.l.s8.bf16 %v2410
    %v2447 = vunpack.c.h.s8.bf16 %v2409
    %v2448 = vunpack.c.h.s8.bf16 %v2410
    %v2449 = vunpack.c.l.s8.bf16 %v2411
    %v2450 = vunpack.c.l.s8.bf16 %v2412
    %v2451 = vunpack.c.h.s8.bf16 %v2411
    %v2452 = vunpack.c.h.s8.bf16 %v2412
    %v2453 = vunpack.c.l.s8.bf16 %v2413
    %v2454 = vunpack.c.l.s8.bf16 %v2414
    %v2455 = vunpack.c.h.s8.bf16 %v2413
    %v2456 = vunpack.c.h.s8.bf16 %v2414
    %v2457 = vunpack.c.l.s8.bf16 %v2415
    %v2458 = vunpack.c.l.s8.bf16 %v2416
    %v2459 = vunpack.c.h.s8.bf16 %v2415
    %v2460 = vunpack.c.h.s8.bf16 %v2416
    %v2461 = vunpack.c.l.s8.bf16 %v2417
    %v2462 = vunpack.c.l.s8.bf16 %v2418
    %v2463 = vunpack.c.h.s8.bf16 %v2417
    %v2464 = vunpack.c.h.s8.bf16 %v2418
    %v2465 = vunpack.c.l.s8.bf16 %v2419
    %v2466 = vunpack.c.l.s8.bf16 %v2420
    %v2467 = vunpack.c.h.s8.bf16 %v2419
    %v2468 = vunpack.c.h.s8.bf16 %v2420
    %v2469 = vunpack.c.l.s8.bf16 %v2421
    %v2470 = vunpack.c.l.s8.bf16 %v2422
    %v2471 = vunpack.c.h.s8.bf16 %v2421
    %v2472 = vunpack.c.h.s8.bf16 %v2422
    %v2473 = vunpack.c.l.s8.bf16 %v2423
    %v2474 = vunpack.c.l.s8.bf16 %v2424
    %v2475 = vunpack.c.h.s8.bf16 %v2423
    %v2476 = vunpack.c.h.s8.bf16 %v2424
    %v2477 = vunpack.c.l.s8.bf16 %v2425
    %v2478 = vunpack.c.l.s8.bf16 %v2426
    %v2479 = vunpack.c.h.s8.bf16 %v2425
    %v2480 = vunpack.c.h.s8.bf16 %v2426
    %v2481 = vunpack.c.l.s8.bf16 %v2427
    %v2482 = vunpack.c.l.s8.bf16 %v2428
    %v2483 = vunpack.c.h.s8.bf16 %v2427
    %v2484 = vunpack.c.h.s8.bf16 %v2428
    %v2485 = vunpack.c.l.s8.bf16 %v2429
    %v2486 = vunpack.c.l.s8.bf16 %v2430
    %v2487 = vunpack.c.h.s8.bf16 %v2429
    %v2488 = vunpack.c.h.s8.bf16 %v2430
    %v2489 = vunpack.c.l.s8.bf16 %v2431
    %v2490 = vunpack.c.l.s8.bf16 %v2432
    %v2491 = vunpack.c.h.s8.bf16 %v2431
    %v2492 = vunpack.c.h.s8.bf16 %v2432
    %v2493 = vunpack.c.l.s8.bf16 %v2433
    %v2494 = vunpack.c.l.s8.bf16 %v2434
    %v2495 = vunpack.c.h.s8.bf16 %v2433
    %v2496 = vunpack.c.h.s8.bf16 %v2434
    %v2497 = vunpack.c.l.s8.bf16 %v2435
    %v2498 = vunpack.c.l.s8.bf16 %v2436
    %v2499 = vunpack.c.h.s8.bf16 %v2435
    %v2500 = vunpack.c.h.s8.bf16 %v2436
    %2501 = vmatprep.subr.bf16.mxu0 %v2438
    %2502 = vmatpush1.bf16.msra.mxu0 %v2437
    %2503 = vmatprep.subr.bf16.mxu0 %v2440
    %2504 = vmatpush1.bf16.msra.mxu0 %v2439
    %2505 = vmatprep.subr.bf16.mxu0 %v2442
    %2506 = vmatpush1.bf16.msra.mxu0 %v2441
    %2507 = vmatprep.subr.bf16.mxu0 %v2444
    %2508 = vmatpush1.bf16.msra.mxu0 %v2443
    %2509 = vmatprep.subr.bf16.mxu0 %v2446
    %2510 = vmatpush1.bf16.msra.mxu0 %v2445
    %2511 = vmatprep.subr.bf16.mxu0 %v2448
    %2512 = vmatpush1.bf16.msra.mxu0 %v2447
    %2513 = vmatprep.subr.bf16.mxu0 %v2450
    %2514 = vmatpush1.bf16.msra.mxu0 %v2449
    %2515 = vmatprep.subr.bf16.mxu0 %v2452
    %2516 = vmatpush1.bf16.msra.mxu0 %v2451
    %2517 = vmatprep.subr.bf16.mxu0 %v2454
    %2518 = vmatpush1.bf16.msra.mxu0 %v2453
    %2519 = vmatprep.subr.bf16.mxu0 %v2456
    %2520 = vmatpush1.bf16.msra.mxu0 %v2455
    %2521 = vmatprep.subr.bf16.mxu0 %v2458
    %2522 = vmatpush1.bf16.msra.mxu0 %v2457
    %2523 = vmatprep.subr.bf16.mxu0 %v2460
    %2524 = vmatpush1.bf16.msra.mxu0 %v2459
    %2525 = vmatprep.subr.bf16.mxu0 %v2462
    %2526 = vmatpush1.bf16.msra.mxu0 %v2461
    %2527 = vmatprep.subr.bf16.mxu0 %v2464
    %2528 = vmatpush1.bf16.msra.mxu0 %v2463
    %2529 = vmatprep.subr.bf16.mxu0 %v2466
    %2530 = vmatpush1.bf16.msra.mxu0 %v2465
    %2531 = vmatprep.subr.bf16.mxu0 %v2468
    %2532 = vmatpush1.bf16.msra.mxu0 %v2467
    %2533 = vmatprep.mubr.bf16.mxu0 %v2402
    %2534 = vmatmul.mubr.bf16.gmra.mrb[0].mxu0 %v2401
    %v2535 = vpop.f32.mrb[0].mxu0
    %v2536 = vadd.f32 0.0, %v2535
    %v2537 = vpop.f32.mrb[0].mxu0
    %v2538 = vadd.f32 0.0, %v2537
    %v2539 = vpop.f32.mrb[0].mxu0
    %v2540 = vpop.f32.mrb[0].mxu0
    %2541 = vdwg.mxu0
    %2542 = vmatprep.subr.bf16.mxu0 %v2470
    %2543 = vmatpush1.bf16.msra.mxu0 %v2469
    %2544 = vmatprep.subr.bf16.mxu0 %v2472
    %2545 = vmatpush1.bf16.msra.mxu0 %v2471
    %2546 = vmatprep.subr.bf16.mxu0 %v2474
    %2547 = vmatpush1.bf16.msra.mxu0 %v2473
    %2548 = vmatprep.subr.bf16.mxu0 %v2476
    %2549 = vmatpush1.bf16.msra.mxu0 %v2475
    %2550 = vmatprep.subr.bf16.mxu0 %v2478
    %2551 = vmatpush1.bf16.msra.mxu0 %v2477
    %2552 = vmatprep.subr.bf16.mxu0 %v2480
    %2553 = vmatpush1.bf16.msra.mxu0 %v2479
    %2554 = vmatprep.subr.bf16.mxu0 %v2482
    %2555 = vmatpush1.bf16.msra.mxu0 %v2481
    %2556 = vmatprep.subr.bf16.mxu0 %v2484
    %2557 = vmatpush1.bf16.msra.mxu0 %v2483
    %2558 = vmatprep.subr.bf16.mxu0 %v2486
    %2559 = vmatpush1.bf16.msra.mxu0 %v2485
    %2560 = vmatprep.subr.bf16.mxu0 %v2488
    %2561 = vmatpush1.bf16.msra.mxu0 %v2487
    %2562 = vmatprep.subr.bf16.mxu0 %v2490
    %2563 = vmatpush1.bf16.msra.mxu0 %v2489
    %2564 = vmatprep.subr.bf16.mxu0 %v2492
    %2565 = vmatpush1.bf16.msra.mxu0 %v2491
    %2566 = vmatprep.subr.bf16.mxu0 %v2494
    %2567 = vmatpush1.bf16.msra.mxu0 %v2493
    %2568 = vmatprep.subr.bf16.mxu0 %v2496
    %2569 = vmatpush1.bf16.msra.mxu0 %v2495
    %2570 = vmatprep.subr.bf16.mxu0 %v2498
    %2571 = vmatpush1.bf16.msra.mxu0 %v2497
    %2572 = vmatprep.subr.bf16.mxu0 %v2500
    %2573 = vmatpush1.bf16.msra.mxu0 %v2499
    %2574 = vmatprep.mubr.bf16.mxu0 %v2404
    %2575 = vmatmul.mubr.bf16.gmra.mrb[0].mxu0 %v2403
    %v2576 = vpop.f32.mrb[0].mxu0
    %v2577 = vadd.f32 %v2536, %v2576
    %v2578 = vpop.f32.mrb[0].mxu0
    %v2579 = vadd.f32 %v2538, %v2578
    %v2580 = vpop.f32.mrb[0].mxu0
    %v2581 = vpop.f32.mrb[0].mxu0
    %2582 = vdwg.mxu0
    %v2583 = vld [vmem:[#allocation17 + $0x24] sm:$0x3]
    %v2585 = vlaneseq
    %v2586 = vshrl.u32 %v2585, 7
    %v2587 = vsub.s32 0, %v2586
    %v2588 = vrot.slane %v2583, %v2587
    %v2589 = vlaneseq
    %v2590 = vshrl.u32 %v2589, 7
    %v2591 = vsub.s32 1, %v2590
    %v2592 = vrot.slane %v2583, %v2591
    %v2595 = vmul.f32 %v2577, %v2588
    %v2596 = vmul.f32 %v2579, %v2592
    %v2597 = vld [vmem:[#allocation17 + $0x26] sm:$0x3]
    %v2599 = vlaneseq
    %v2600 = vshrl.u32 %v2599, 7
    %v2601 = vsub.s32 0, %v2600
    %v2602 = vrot.slane %v2597, %v2601
    %v2603 = vlaneseq
    %v2604 = vshrl.u32 %v2603, 7
    %v2605 = vsub.s32 1, %v2604
    %v2606 = vrot.slane %v2597, %v2605
    %v2609 = vadd.f32 %v2595, %v2602
    %v2610 = vadd.f32 %v2596, %v2606
    %v2611 = vxor.u32 %v2609, 2147483648
    %v2612 = vmul.f32 %v2611, 1.442695
    %v2613 = vpow.pop %v2612
    %v2614 = vadd.f32 %v2613, 1.0
    %v2615 = vrcp.pop %v2614
    %v2616 = vmul.f32 1.0, %v2615
    %v2617 = vld [vmem:[#allocation5] sm:$0xff]
    %v2618 = vmul.f32 %v2610, 0.5
    %v2619 = vmul.f32 %v2618, 1.442695
    %v2620 = vpow.pop %v2619
    %v2621 = vmul.f32 %v2617, %v2620
    %v2622 = vadd.f32 %v2621, %v2616
    %v2623 = vpack.c.bf16 %v2622, %v2622
    %v2624 = vld [vmem:[#allocation11] sm:$0xff]
    %v2625 = vld [vmem:[#allocation11 + $0x8] sm:$0xff]
    %v2626 = vld [vmem:[#allocation11 + $0x10] sm:$0xff]
    %v2627 = vld [vmem:[#allocation11 + $0x18] sm:$0xff]
    %v2628 = vld [vmem:[#allocation11 + $0x20] sm:$0xff]
    %v2629 = vld [vmem:[#allocation11 + $0x28] sm:$0xff]
    %v2630 = vld [vmem:[#allocation11 + $0x30] sm:$0xff]
    %v2631 = vld [vmem:[#allocation11 + $0x38] sm:$0xff]
    %v2632 = vunpack.c.l.s8.bf16 %v2624
    %v2633 = vunpack.c.l.s8.bf16 %v2625
    %v2634 = vunpack.c.h.s8.bf16 %v2624
    %v2635 = vunpack.c.h.s8.bf16 %v2625
    %v2636 = vunpack.c.l.s8.bf16 %v2626
    %v2637 = vunpack.c.l.s8.bf16 %v2627
    %v2638 = vunpack.c.h.s8.bf16 %v2626
    %v2639 = vunpack.c.h.s8.bf16 %v2627
    %v2640 = vunpack.c.l.s8.bf16 %v2628
    %v2641 = vunpack.c.l.s8.bf16 %v2629
    %v2642 = vunpack.c.h.s8.bf16 %v2628
    %v2643 = vunpack.c.h.s8.bf16 %v2629
    %v2644 = vunpack.c.l.s8.bf16 %v2630
    %v2645 = vunpack.c.l.s8.bf16 %v2631
    %v2646 = vunpack.c.h.s8.bf16 %v2630
    %v2647 = vunpack.c.h.s8.bf16 %v2631
    %2648 = vmatprep.subr.bf16.mxu0 %v2633
    %2649 = vmatpush1.bf16.msra.mxu0 %v2632
    %2650 = vmatprep.subr.bf16.mxu0 %v2635
    %2651 = vmatpush1.bf16.msra.mxu0 %v2634
    %2652 = vmatprep.subr.bf16.mxu0 %v2637
    %2653 = vmatpush1.bf16.msra.mxu0 %v2636
    %2654 = vmatprep.subr.bf16.mxu0 %v2639
    %2655 = vmatpush1.bf16.msra.mxu0 %v2638
    %2656 = vmatprep.subr.bf16.mxu0 %v2641
    %2657 = vmatpush1.bf16.msra.mxu0 %v2640
    %2658 = vmatprep.subr.bf16.mxu0 %v2643
    %2659 = vmatpush1.bf16.msra.mxu0 %v2642
    %2660 = vmatprep.subr.bf16.mxu0 %v2645
    %2661 = vmatpush1.bf16.msra.mxu0 %v2644
    %2662 = vmatprep.subr.bf16.mxu0 %v2647
    %2663 = vmatpush1.bf16.msra.mxu0 %v2646
    %2664 = vmatprep.subr.bf16.mxu0 0
    %2665 = vmatpush1.bf16.msra.mxu0 0
    %2666 = vmatprep.subr.bf16.mxu0 0
    %2667 = vmatpush1.bf16.msra.mxu0 0
    %2668 = vmatprep.subr.bf16.mxu0 0
    %2669 = vmatpush1.bf16.msra.mxu0 0
    %2670 = vmatprep.subr.bf16.mxu0 0
    %2671 = vmatpush1.bf16.msra.mxu0 0
    %2672 = vmatprep.subr.bf16.mxu0 0
    %2673 = vmatpush1.bf16.msra.mxu0 0
    %2674 = vmatprep.subr.bf16.mxu0 0
    %2675 = vmatpush1.bf16.msra.mxu0 0
    %2676 = vmatprep.subr.bf16.mxu0 0
    %2677 = vmatpush1.bf16.msra.mxu0 0
    %2678 = vmatprep.subr.bf16.mxu0 0
    %2679 = vmatpush1.bf16.msra.mxu0 0
    %2680 = vmatprep.mubr.bf16.mxu0 0
    %2681 = vmatmul.mubr.bf16.gmra.mrb[0].mxu0 %v2623
    %v2682 = vpop.f32.mrb[0].mxu0
    %v2683 = vadd.f32 0.0, %v2682
    %v2684 = vpop.f32.mrb[0].mxu0
    %v2685 = vadd.f32 0.0, %v2684
    %v2686 = vpop.f32.mrb[0].mxu0
    %v2687 = vpop.f32.mrb[0].mxu0
    %2688 = vdwg.mxu0
    %v2689 = vld [vmem:[#allocation17 + $0x28] sm:$0x3]
    %v2691 = vlaneseq
    %v2692 = vshrl.u32 %v2691, 7
    %v2693 = vsub.s32 0, %v2692
    %v2694 = vrot.slane %v2689, %v2693
    %v2695 = vlaneseq
    %v2696 = vshrl.u32 %v2695, 7
    %v2697 = vsub.s32 1, %v2696
    %v2698 = vrot.slane %v2689, %v2697
    %v2701 = vmul.f32 %v2683, %v2694
    %v2702 = vmul.f32 %v2685, %v2698
    %v2703 = vrot.slane %v2701, 4
    %v2704 = vadd.f32 %v2701, %v2703
    %v2705 = vrot.slane %v2704, 2
    %v2706 = vadd.f32 %v2704, %v2705
    %v2707 = vrot.slane %v2706, 1
    %v2708 = vadd.f32 %v2706, %v2707
    %v2709 = vrot.slane %v2702, 4
    %v2710 = vadd.f32 %v2702, %v2709
    %v2711 = vrot.slane %v2710, 2
    %v2712 = vadd.f32 %v2710, %v2711
    %v2713 = vrot.slane %v2712, 1
    %v2714 = vadd.f32 %v2712, %v2713
    %v2715 = vmul.f32 %v2708, %v1250
    %v2716 = vmul.f32 %v2714, %v1250
    %v2717 = vmul.f32 %v2701, %v2701
    %v2718 = vmul.f32 %v2702, %v2702
    %v2719 = vrot.slane %v2717, 4
    %v2720 = vadd.f32 %v2717, %v2719
    %v2721 = vrot.slane %v2720, 2
    %v2722 = vadd.f32 %v2720, %v2721
    %v2723 = vrot.slane %v2722, 1
    %v2724 = vadd.f32 %v2722, %v2723
    %v2725 = vrot.slane %v2718, 4
    %v2726 = vadd.f32 %v2718, %v2725
    %v2727 = vrot.slane %v2726, 2
    %v2728 = vadd.f32 %v2726, %v2727
    %v2729 = vrot.slane %v2728, 1
    %v2730 = vadd.f32 %v2728, %v2729
    %v2731 = vmul.f32 %v2724, %v1250
    %v2732 = vmul.f32 %v2730, %v1250
    %v2733 = vmul.f32 %v2715, %v2715
    %v2734 = vmul.f32 %v2716, %v2716
    %v2735 = vsub.f32 %v2731, %v2733
    %v2736 = vsub.f32 %v2732, %v2734
    %v2737 = vmax.f32 %v2735, 0.0
    %v2738 = vmax.f32 %v2736, 0.0
    %v2739 = vsub.f32 %v2701, %v2715
    %v2740 = vsub.f32 %v2702, %v2716
    %v2741 = vadd.f32 %v2737, 1e-05
    %v2742 = vadd.f32 %v2738, 1e-05
    %v2743 = vrsqrt.pop %v2741
    %v2744 = vrsqrt.pop %v2742
    %v2745 = vmul.f32 %v2739, %v2743
    %v2746 = vmul.f32 %v2740, %v2744
    %v2747 = vld [vmem:[#allocation17 + $0x2a] sm:$0x3]
    %v2749 = vlaneseq
    %v2750 = vshrl.u32 %v2749, 7
    %v2751 = vsub.s32 0, %v2750
    %v2752 = vrot.slane %v2747, %v2751
    %v2753 = vlaneseq
    %v2754 = vshrl.u32 %v2753, 7
    %v2755 = vsub.s32 1, %v2754
    %v2756 = vrot.slane %v2747, %v2755
    %v2759 = vmul.f32 %v2745, %v2752
    %v2760 = vmul.f32 %v2746, %v2756
    %v2761 = vld [vmem:[#allocation17 + $0x2c] sm:$0x3]
    %v2763 = vlaneseq
    %v2764 = vshrl.u32 %v2763, 7
    %v2765 = vsub.s32 0, %v2764
    %v2766 = vrot.slane %v2761, %v2765
    %v2767 = vlaneseq
    %v2768 = vshrl.u32 %v2767, 7
    %v2769 = vsub.s32 1, %v2768
    %v2770 = vrot.slane %v2761, %v2769
    %v2773 = vadd.f32 %v2759, %v2766
    %v2774 = vadd.f32 %v2760, %v2770
    %vm2775 = vcmp.gt.f32.partialorder %v2773, 0.0
    %vm2776 = vcmp.gt.f32.partialorder %v2774, 0.0
    %v2777 = vmul.f32 %v2773, 0.01
    %v2778 = vmul.f32 %v2774, 0.01
    %v2779 = vsel %vm2775, %v2773, %v2777
    %v2780 = vsel %vm2776, %v2774, %v2778
    %v2781 = vpack.c.bf16 %v2779, %v2779
    %v2782 = vpack.c.bf16 %v2780, %v2780
    %v2783 = vld [vmem:[#allocation13] sm:$0xff]
    %v2784 = vld [vmem:[#allocation13 + $0x8] sm:$0xff]
    %v2785 = vld [vmem:[#allocation13 + $0x10] sm:$0xff]
    %v2786 = vld [vmem:[#allocation13 + $0x18] sm:$0xff]
    %v2787 = vld [vmem:[#allocation13 + $0x20] sm:$0xff]
    %v2788 = vld [vmem:[#allocation13 + $0x28] sm:$0xff]
    %v2789 = vld [vmem:[#allocation13 + $0x30] sm:$0xff]
    %v2790 = vld [vmem:[#allocation13 + $0x38] sm:$0xff]
    %v2791 = vld [vmem:[#allocation13 + $0x40] sm:$0xff]
    %v2792 = vld [vmem:[#allocation13 + $0x48] sm:$0xff]
    %v2793 = vld [vmem:[#allocation13 + $0x50] sm:$0xff]
    %v2794 = vld [vmem:[#allocation13 + $0x58] sm:$0xff]
    %v2795 = vld [vmem:[#allocation13 + $0x60] sm:$0xff]
    %v2796 = vld [vmem:[#allocation13 + $0x68] sm:$0xff]
    %v2797 = vld [vmem:[#allocation13 + $0x70] sm:$0xff]
    %v2798 = vld [vmem:[#allocation13 + $0x78] sm:$0xff]
    %v2799 = vld [vmem:[#allocation13 + $0x80] sm:$0xff]
    %v2800 = vld [vmem:[#allocation13 + $0x88] sm:$0xff]
    %v2801 = vld [vmem:[#allocation13 + $0x90] sm:$0xff]
    %v2802 = vld [vmem:[#allocation13 + $0x98] sm:$0xff]
    %v2803 = vld [vmem:[#allocation13 + $0xa0] sm:$0xff]
    %v2804 = vld [vmem:[#allocation13 + $0xa8] sm:$0xff]
    %v2805 = vld [vmem:[#allocation13 + $0xb0] sm:$0xff]
    %v2806 = vld [vmem:[#allocation13 + $0xb8] sm:$0xff]
    %v2807 = vld [vmem:[#allocation13 + $0xc0] sm:$0xff]
    %v2808 = vld [vmem:[#allocation13 + $0xc8] sm:$0xff]
    %v2809 = vld [vmem:[#allocation13 + $0xd0] sm:$0xff]
    %v2810 = vld [vmem:[#allocation13 + $0xd8] sm:$0xff]
    %v2811 = vld [vmem:[#allocation13 + $0xe0] sm:$0xff]
    %v2812 = vld [vmem:[#allocation13 + $0xe8] sm:$0xff]
    %v2813 = vld [vmem:[#allocation13 + $0xf0] sm:$0xff]
    %v2814 = vld [vmem:[#allocation13 + $0xf8] sm:$0xff]
    %v2815 = vunpack.c.l.s8.bf16 %v2783
    %v2816 = vunpack.c.l.s8.bf16 %v2784
    %v2817 = vunpack.c.l.s8.bf16 %v2785
    %v2818 = vunpack.c.l.s8.bf16 %v2786
    %v2819 = vunpack.c.h.s8.bf16 %v2783
    %v2820 = vunpack.c.h.s8.bf16 %v2784
    %v2821 = vunpack.c.h.s8.bf16 %v2785
    %v2822 = vunpack.c.h.s8.bf16 %v2786
    %v2823 = vunpack.c.l.s8.bf16 %v2787
    %v2824 = vunpack.c.l.s8.bf16 %v2788
    %v2825 = vunpack.c.l.s8.bf16 %v2789
    %v2826 = vunpack.c.l.s8.bf16 %v2790
    %v2827 = vunpack.c.h.s8.bf16 %v2787
    %v2828 = vunpack.c.h.s8.bf16 %v2788
    %v2829 = vunpack.c.h.s8.bf16 %v2789
    %v2830 = vunpack.c.h.s8.bf16 %v2790
    %v2831 = vunpack.c.l.s8.bf16 %v2791
    %v2832 = vunpack.c.l.s8.bf16 %v2792
    %v2833 = vunpack.c.l.s8.bf16 %v2793
    %v2834 = vunpack.c.l.s8.bf16 %v2794
    %v2835 = vunpack.c.h.s8.bf16 %v2791
    %v2836 = vunpack.c.h.s8.bf16 %v2792
    %v2837 = vunpack.c.h.s8.bf16 %v2793
    %v2838 = vunpack.c.h.s8.bf16 %v2794
    %v2839 = vunpack.c.l.s8.bf16 %v2795
    %v2840 = vunpack.c.l.s8.bf16 %v2796
    %v2841 = vunpack.c.l.s8.bf16 %v2797
    %v2842 = vunpack.c.l.s8.bf16 %v2798
    %v2843 = vunpack.c.h.s8.bf16 %v2795
    %v2844 = vunpack.c.h.s8.bf16 %v2796
    %v2845 = vunpack.c.h.s8.bf16 %v2797
    %v2846 = vunpack.c.h.s8.bf16 %v2798
    %v2847 = vunpack.c.l.s8.bf16 %v2799
    %v2848 = vunpack.c.l.s8.bf16 %v2800
    %v2849 = vunpack.c.l.s8.bf16 %v2801
    %v2850 = vunpack.c.l.s8.bf16 %v2802
    %v2851 = vunpack.c.h.s8.bf16 %v2799
    %v2852 = vunpack.c.h.s8.bf16 %v2800
    %v2853 = vunpack.c.h.s8.bf16 %v2801
    %v2854 = vunpack.c.h.s8.bf16 %v2802
    %v2855 = vunpack.c.l.s8.bf16 %v2803
    %v2856 = vunpack.c.l.s8.bf16 %v2804
    %v2857 = vunpack.c.l.s8.bf16 %v2805
    %v2858 = vunpack.c.l.s8.bf16 %v2806
    %v2859 = vunpack.c.h.s8.bf16 %v2803
    %v2860 = vunpack.c.h.s8.bf16 %v2804
    %v2861 = vunpack.c.h.s8.bf16 %v2805
    %v2862 = vunpack.c.h.s8.bf16 %v2806
    %v2863 = vunpack.c.l.s8.bf16 %v2807
    %v2864 = vunpack.c.l.s8.bf16 %v2808
    %v2865 = vunpack.c.l.s8.bf16 %v2809
    %v2866 = vunpack.c.l.s8.bf16 %v2810
    %v2867 = vunpack.c.h.s8.bf16 %v2807
    %v2868 = vunpack.c.h.s8.bf16 %v2808
    %v2869 = vunpack.c.h.s8.bf16 %v2809
    %v2870 = vunpack.c.h.s8.bf16 %v2810
    %v2871 = vunpack.c.l.s8.bf16 %v2811
    %v2872 = vunpack.c.l.s8.bf16 %v2812
    %v2873 = vunpack.c.l.s8.bf16 %v2813
    %v2874 = vunpack.c.l.s8.bf16 %v2814
    %v2875 = vunpack.c.h.s8.bf16 %v2811
    %v2876 = vunpack.c.h.s8.bf16 %v2812
    %v2877 = vunpack.c.h.s8.bf16 %v2813
    %v2878 = vunpack.c.h.s8.bf16 %v2814
    %2879 = vmatprep.subr.bf16.mxu0 %v2816
    %2880 = vmatpush1.bf16.msra.mxu0 %v2815
    %2881 = vmatprep.subr.bf16.mxu0 %v2820
    %2882 = vmatpush1.bf16.msra.mxu0 %v2819
    %2883 = vmatprep.subr.bf16.mxu0 %v2824
    %2884 = vmatpush1.bf16.msra.mxu0 %v2823
    %2885 = vmatprep.subr.bf16.mxu0 %v2828
    %2886 = vmatpush1.bf16.msra.mxu0 %v2827
    %2887 = vmatprep.subr.bf16.mxu0 %v2832
    %2888 = vmatpush1.bf16.msra.mxu0 %v2831
    %2889 = vmatprep.subr.bf16.mxu0 %v2836
    %2890 = vmatpush1.bf16.msra.mxu0 %v2835
    %2891 = vmatprep.subr.bf16.mxu0 %v2840
    %2892 = vmatpush1.bf16.msra.mxu0 %v2839
    %2893 = vmatprep.subr.bf16.mxu0 %v2844
    %2894 = vmatpush1.bf16.msra.mxu0 %v2843
    %2895 = vmatprep.subr.bf16.mxu0 %v2848
    %2896 = vmatpush1.bf16.msra.mxu0 %v2847
    %2897 = vmatprep.subr.bf16.mxu0 %v2852
    %2898 = vmatpush1.bf16.msra.mxu0 %v2851
    %2899 = vmatprep.subr.bf16.mxu0 %v2856
    %2900 = vmatpush1.bf16.msra.mxu0 %v2855
    %2901 = vmatprep.subr.bf16.mxu0 %v2860
    %2902 = vmatpush1.bf16.msra.mxu0 %v2859
    %2903 = vmatprep.subr.bf16.mxu0 %v2864
    %2904 = vmatpush1.bf16.msra.mxu0 %v2863
    %2905 = vmatprep.subr.bf16.mxu0 %v2868
    %2906 = vmatpush1.bf16.msra.mxu0 %v2867
    %2907 = vmatprep.subr.bf16.mxu0 %v2872
    %2908 = vmatpush1.bf16.msra.mxu0 %v2871
    %2909 = vmatprep.subr.bf16.mxu0 %v2876
    %2910 = vmatpush1.bf16.msra.mxu0 %v2875
    %2911 = vmatprep.mubr.bf16.mxu0 %v2782
    %2912 = vmatmul.mubr.bf16.gmra.mrb[0].mxu0 %v2781
    %v2913 = vpop.f32.mrb[0].mxu0
    %v2914 = vadd.f32 0.0, %v2913
    %v2915 = vpop.f32.mrb[0].mxu0
    %v2916 = vadd.f32 0.0, %v2915
    %v2917 = vpop.f32.mrb[0].mxu0
    %v2918 = vpop.f32.mrb[0].mxu0
    %2919 = vdwg.mxu0
    %2920 = vmatprep.subr.bf16.mxu0 %v2818
    %2921 = vmatpush1.bf16.msra.mxu0 %v2817
    %2922 = vmatprep.subr.bf16.mxu0 %v2822
    %2923 = vmatpush1.bf16.msra.mxu0 %v2821
    %2924 = vmatprep.subr.bf16.mxu0 %v2826
    %2925 = vmatpush1.bf16.msra.mxu0 %v2825
    %2926 = vmatprep.subr.bf16.mxu0 %v2830
    %2927 = vmatpush1.bf16.msra.mxu0 %v2829
    %2928 = vmatprep.subr.bf16.mxu0 %v2834
    %2929 = vmatpush1.bf16.msra.mxu0 %v2833
    %2930 = vmatprep.subr.bf16.mxu0 %v2838
    %2931 = vmatpush1.bf16.msra.mxu0 %v2837
    %2932 = vmatprep.subr.bf16.mxu0 %v2842
    %2933 = vmatpush1.bf16.msra.mxu0 %v2841
    %2934 = vmatprep.subr.bf16.mxu0 %v2846
    %2935 = vmatpush1.bf16.msra.mxu0 %v2845
    %2936 = vmatprep.subr.bf16.mxu0 %v2850
    %2937 = vmatpush1.bf16.msra.mxu0 %v2849
    %2938 = vmatprep.subr.bf16.mxu0 %v2854
    %2939 = vmatpush1.bf16.msra.mxu0 %v2853
    %2940 = vmatprep.subr.bf16.mxu0 %v2858
    %2941 = vmatpush1.bf16.msra.mxu0 %v2857
    %2942 = vmatprep.subr.bf16.mxu0 %v2862
    %2943 = vmatpush1.bf16.msra.mxu0 %v2861
    %2944 = vmatprep.subr.bf16.mxu0 %v2866
    %2945 = vmatpush1.bf16.msra.mxu0 %v2865
    %2946 = vmatprep.subr.bf16.mxu0 %v2870
    %2947 = vmatpush1.bf16.msra.mxu0 %v2869
    %2948 = vmatprep.subr.bf16.mxu0 %v2874
    %2949 = vmatpush1.bf16.msra.mxu0 %v2873
    %2950 = vmatprep.subr.bf16.mxu0 %v2878
    %2951 = vmatpush1.bf16.msra.mxu0 %v2877
    %2952 = vmatprep.mubr.bf16.mxu0 %v2782
    %2953 = vmatmul.mubr.bf16.gmra.mrb[0].mxu0 %v2781
    %v2954 = vpop.f32.mrb[0].mxu0
    %v2955 = vadd.f32 0.0, %v2954
    %v2956 = vpop.f32.mrb[0].mxu0
    %v2957 = vadd.f32 0.0, %v2956
    %v2958 = vpop.f32.mrb[0].mxu0
    %v2959 = vpop.f32.mrb[0].mxu0
    %2960 = vdwg.mxu0
    %v2961 = vld [vmem:[#allocation17 + $0x2e] sm:$0xf]
    %v2963 = vlaneseq
    %v2964 = vshrl.u32 %v2963, 7
    %v2965 = vsub.s32 0, %v2964
    %v2966 = vrot.slane %v2961, %v2965
    %v2967 = vlaneseq
    %v2968 = vshrl.u32 %v2967, 7
    %v2969 = vsub.s32 1, %v2968
    %v2970 = vrot.slane %v2961, %v2969
    %v2971 = vlaneseq
    %v2972 = vshrl.u32 %v2971, 7
    %v2973 = vsub.s32 2, %v2972
    %v2974 = vrot.slane %v2961, %v2973
    %v2975 = vlaneseq
    %v2976 = vshrl.u32 %v2975, 7
    %v2977 = vsub.s32 3, %v2976
    %v2978 = vrot.slane %v2961, %v2977
    %v2983 = vmul.f32 %v2914, %v2966
    %v2984 = vmul.f32 %v2916, %v2970
    %v2985 = vmul.f32 %v2955, %v2974
    %v2986 = vmul.f32 %v2957, %v2978
    %v2987 = vrot.slane %v2983, 4
    %v2988 = vadd.f32 %v2983, %v2987
    %v2989 = vrot.slane %v2988, 2
    %v2990 = vadd.f32 %v2988, %v2989
    %v2991 = vrot.slane %v2990, 1
    %v2992 = vadd.f32 %v2990, %v2991
    %v2993 = vrot.slane %v2984, 4
    %v2994 = vadd.f32 %v2984, %v2993
    %v2995 = vrot.slane %v2994, 2
    %v2996 = vadd.f32 %v2994, %v2995
    %v2997 = vrot.slane %v2996, 1
    %v2998 = vadd.f32 %v2996, %v2997
    %v2999 = vrot.slane %v2985, 4
    %v3000 = vadd.f32 %v2985, %v2999
    %v3001 = vrot.slane %v3000, 2
    %v3002 = vadd.f32 %v3000, %v3001
    %v3003 = vrot.slane %v3002, 1
    %v3004 = vadd.f32 %v3002, %v3003
    %v3005 = vrot.slane %v2986, 4
    %v3006 = vadd.f32 %v2986, %v3005
    %v3007 = vrot.slane %v3006, 2
    %v3008 = vadd.f32 %v3006, %v3007
    %v3009 = vrot.slane %v3008, 1
    %v3010 = vadd.f32 %v3008, %v3009
    %v3011 = vmul.f32 %v2992, %v1250
    %v3012 = vmul.f32 %v2998, %v1250
    %v3013 = vmul.f32 %v3004, %v1250
    %v3014 = vmul.f32 %v3010, %v1250
    %v3015 = vmul.f32 %v2983, %v2983
    %v3016 = vmul.f32 %v2984, %v2984
    %v3017 = vmul.f32 %v2985, %v2985
    %v3018 = vmul.f32 %v2986, %v2986
    %v3019 = vrot.slane %v3015, 4
    %v3020 = vadd.f32 %v3015, %v3019
    %v3021 = vrot.slane %v3020, 2
    %v3022 = vadd.f32 %v3020, %v3021
    %v3023 = vrot.slane %v3022, 1
    %v3024 = vadd.f32 %v3022, %v3023
    %v3025 = vrot.slane %v3016, 4
    %v3026 = vadd.f32 %v3016, %v3025
    %v3027 = vrot.slane %v3026, 2
    %v3028 = vadd.f32 %v3026, %v3027
    %v3029 = vrot.slane %v3028, 1
    %v3030 = vadd.f32 %v3028, %v3029
    %v3031 = vrot.slane %v3017, 4
    %v3032 = vadd.f32 %v3017, %v3031
    %v3033 = vrot.slane %v3032, 2
    %v3034 = vadd.f32 %v3032, %v3033
    %v3035 = vrot.slane %v3034, 1
    %v3036 = vadd.f32 %v3034, %v3035
    %v3037 = vrot.slane %v3018, 4
    %v3038 = vadd.f32 %v3018, %v3037
    %v3039 = vrot.slane %v3038, 2
    %v3040 = vadd.f32 %v3038, %v3039
    %v3041 = vrot.slane %v3040, 1
    %v3042 = vadd.f32 %v3040, %v3041
    %v3043 = vmul.f32 %v3024, %v1250
    %v3044 = vmul.f32 %v3030, %v1250
    %v3045 = vmul.f32 %v3036, %v1250
    %v3046 = vmul.f32 %v3042, %v1250
    %v3047 = vmul.f32 %v3011, %v3011
    %v3048 = vmul.f32 %v3012, %v3012
    %v3049 = vmul.f32 %v3013, %v3013
    %v3050 = vmul.f32 %v3014, %v3014
    %v3051 = vsub.f32 %v3043, %v3047
    %v3052 = vsub.f32 %v3044, %v3048
    %v3053 = vsub.f32 %v3045, %v3049
    %v3054 = vsub.f32 %v3046, %v3050
    %v3055 = vmax.f32 %v3051, 0.0
    %v3056 = vmax.f32 %v3052, 0.0
    %v3057 = vmax.f32 %v3053, 0.0
    %v3058 = vmax.f32 %v3054, 0.0
    %v3059 = vsub.f32 %v2983, %v3011
    %v3060 = vsub.f32 %v2984, %v3012
    %v3061 = vsub.f32 %v2985, %v3013
    %v3062 = vsub.f32 %v2986, %v3014
    %v3063 = vadd.f32 %v3055, 1e-05
    %v3064 = vadd.f32 %v3056, 1e-05
    %v3065 = vadd.f32 %v3057, 1e-05
    %v3066 = vadd.f32 %v3058, 1e-05
    %v3067 = vrsqrt.pop %v3063
    %v3068 = vrsqrt.pop %v3064
    %v3069 = vrsqrt.pop %v3065
    %v3070 = vrsqrt.pop %v3066
    %v3071 = vmul.f32 %v3059, %v3067
    %v3072 = vmul.f32 %v3060, %v3068
    %v3073 = vmul.f32 %v3061, %v3069
    %v3074 = vmul.f32 %v3062, %v3070
    %v3075 = vld [vmem:[#allocation17 + $0x32] sm:$0xf]
    %v3077 = vlaneseq
    %v3078 = vshrl.u32 %v3077, 7
    %v3079 = vsub.s32 0, %v3078
    %v3080 = vrot.slane %v3075, %v3079
    %v3081 = vlaneseq
    %v3082 = vshrl.u32 %v3081, 7
    %v3083 = vsub.s32 1, %v3082
    %v3084 = vrot.slane %v3075, %v3083
    %v3085 = vlaneseq
    %v3086 = vshrl.u32 %v3085, 7
    %v3087 = vsub.s32 2, %v3086
    %v3088 = vrot.slane %v3075, %v3087
    %v3089 = vlaneseq
    %v3090 = vshrl.u32 %v3089, 7
    %v3091 = vsub.s32 3, %v3090
    %v3092 = vrot.slane %v3075, %v3091
    %v3097 = vmul.f32 %v3071, %v3080
    %v3098 = vmul.f32 %v3072, %v3084
    %v3099 = vmul.f32 %v3073, %v3088
    %v3100 = vmul.f32 %v3074, %v3092
    %v3101 = vld [vmem:[#allocation17 + $0x36] sm:$0xf]
    %v3103 = vlaneseq
    %v3104 = vshrl.u32 %v3103, 7
    %v3105 = vsub.s32 0, %v3104
    %v3106 = vrot.slane %v3101, %v3105
    %v3107 = vlaneseq
    %v3108 = vshrl.u32 %v3107, 7
    %v3109 = vsub.s32 1, %v3108
    %v3110 = vrot.slane %v3101, %v3109
    %v3111 = vlaneseq
    %v3112 = vshrl.u32 %v3111, 7
    %v3113 = vsub.s32 2, %v3112
    %v3114 = vrot.slane %v3101, %v3113
    %v3115 = vlaneseq
    %v3116 = vshrl.u32 %v3115, 7
    %v3117 = vsub.s32 3, %v3116
    %v3118 = vrot.slane %v3101, %v3117
    %v3123 = vadd.f32 %v3097, %v3106
    %v3124 = vadd.f32 %v3098, %v3110
    %v3125 = vadd.f32 %v3099, %v3114
    %v3126 = vadd.f32 %v3100, %v3118
    %vm3127 = vcmp.gt.f32.partialorder %v3123, 0.0
    %vm3128 = vcmp.gt.f32.partialorder %v3124, 0.0
    %vm3129 = vcmp.gt.f32.partialorder %v3125, 0.0
    %vm3130 = vcmp.gt.f32.partialorder %v3126, 0.0
    %v3131 = vmul.f32 %v3123, 0.01
    %v3132 = vmul.f32 %v3124, 0.01
    %v3133 = vmul.f32 %v3125, 0.01
    %v3134 = vmul.f32 %v3126, 0.01
    %v3135 = vsel %vm3127, %v3123, %v3131
    %v3136 = vsel %vm3128, %v3124, %v3132
    %v3137 = vsel %vm3129, %v3125, %v3133
    %v3138 = vsel %vm3130, %v3126, %v3134
    %v3139 = vpack.c.bf16 %v3135, %v3135
    %v3140 = vpack.c.bf16 %v3136, %v3136
    %v3141 = vpack.c.bf16 %v3137, %v3137
    %v3142 = vpack.c.bf16 %v3138, %v3138
    %v3143 = vld [vmem:[#allocation14] sm:$0xff]
    %v3144 = vld [vmem:[#allocation14 + $0x8] sm:$0xff]
    %v3145 = vld [vmem:[#allocation14 + $0x10] sm:$0xff]
    %v3146 = vld [vmem:[#allocation14 + $0x18] sm:$0xff]
    %v3147 = vld [vmem:[#allocation14 + $0x20] sm:$0xff]
    %v3148 = vld [vmem:[#allocation14 + $0x28] sm:$0xff]
    %v3149 = vld [vmem:[#allocation14 + $0x30] sm:$0xff]
    %v3150 = vld [vmem:[#allocation14 + $0x38] sm:$0xff]
    %v3151 = vld [vmem:[#allocation14 + $0x40] sm:$0xff]
    %v3152 = vld [vmem:[#allocation14 + $0x48] sm:$0xff]
    %v3153 = vld [vmem:[#allocation14 + $0x50] sm:$0xff]
    %v3154 = vld [vmem:[#allocation14 + $0x58] sm:$0xff]
    %v3155 = vld [vmem:[#allocation14 + $0x60] sm:$0xff]
    %v3156 = vld [vmem:[#allocation14 + $0x68] sm:$0xff]
    %v3157 = vld [vmem:[#allocation14 + $0x70] sm:$0xff]
    %v3158 = vld [vmem:[#allocation14 + $0x78] sm:$0xff]
    %v3159 = vld [vmem:[#allocation14 + $0x80] sm:$0xff]
    %v3160 = vld [vmem:[#allocation14 + $0x88] sm:$0xff]
    %v3161 = vld [vmem:[#allocation14 + $0x90] sm:$0xff]
    %v3162 = vld [vmem:[#allocation14 + $0x98] sm:$0xff]
    %v3163 = vld [vmem:[#allocation14 + $0xa0] sm:$0xff]
    %v3164 = vld [vmem:[#allocation14 + $0xa8] sm:$0xff]
    %v3165 = vld [vmem:[#allocation14 + $0xb0] sm:$0xff]
    %v3166 = vld [vmem:[#allocation14 + $0xb8] sm:$0xff]
    %v3167 = vld [vmem:[#allocation14 + $0xc0] sm:$0xff]
    %v3168 = vld [vmem:[#allocation14 + $0xc8] sm:$0xff]
    %v3169 = vld [vmem:[#allocation14 + $0xd0] sm:$0xff]
    %v3170 = vld [vmem:[#allocation14 + $0xd8] sm:$0xff]
    %v3171 = vld [vmem:[#allocation14 + $0xe0] sm:$0xff]
    %v3172 = vld [vmem:[#allocation14 + $0xe8] sm:$0xff]
    %v3173 = vld [vmem:[#allocation14 + $0xf0] sm:$0xff]
    %v3174 = vld [vmem:[#allocation14 + $0xf8] sm:$0xff]
    %v3175 = vld [vmem:[#allocation14 + $0x100] sm:$0xff]
    %v3176 = vld [vmem:[#allocation14 + $0x108] sm:$0xff]
    %v3177 = vld [vmem:[#allocation14 + $0x110] sm:$0xff]
    %v3178 = vld [vmem:[#allocation14 + $0x118] sm:$0xff]
    %v3179 = vld [vmem:[#allocation14 + $0x120] sm:$0xff]
    %v3180 = vld [vmem:[#allocation14 + $0x128] sm:$0xff]
    %v3181 = vld [vmem:[#allocation14 + $0x130] sm:$0xff]
    %v3182 = vld [vmem:[#allocation14 + $0x138] sm:$0xff]
    %v3183 = vld [vmem:[#allocation14 + $0x140] sm:$0xff]
    %v3184 = vld [vmem:[#allocation14 + $0x148] sm:$0xff]
    %v3185 = vld [vmem:[#allocation14 + $0x150] sm:$0xff]
    %v3186 = vld [vmem:[#allocation14 + $0x158] sm:$0xff]
    %v3187 = vld [vmem:[#allocation14 + $0x160] sm:$0xff]
    %v3188 = vld [vmem:[#allocation14 + $0x168] sm:$0xff]
    %v3189 = vld [vmem:[#allocation14 + $0x170] sm:$0xff]
    %v3190 = vld [vmem:[#allocation14 + $0x178] sm:$0xff]
    %v3191 = vld [vmem:[#allocation14 + $0x180] sm:$0xff]
    %v3192 = vld [vmem:[#allocation14 + $0x188] sm:$0xff]
    %v3193 = vld [vmem:[#allocation14 + $0x190] sm:$0xff]
    %v3194 = vld [vmem:[#allocation14 + $0x198] sm:$0xff]
    %v3195 = vld [vmem:[#allocation14 + $0x1a0] sm:$0xff]
    %v3196 = vld [vmem:[#allocation14 + $0x1a8] sm:$0xff]
    %v3197 = vld [vmem:[#allocation14 + $0x1b0] sm:$0xff]
    %v3198 = vld [vmem:[#allocation14 + $0x1b8] sm:$0xff]
    %v3199 = vld [vmem:[#allocation14 + $0x1c0] sm:$0xff]
    %v3200 = vld [vmem:[#allocation14 + $0x1c8] sm:$0xff]
    %v3201 = vld [vmem:[#allocation14 + $0x1d0] sm:$0xff]
    %v3202 = vld [vmem:[#allocation14 + $0x1d8] sm:$0xff]
    %v3203 = vld [vmem:[#allocation14 + $0x1e0] sm:$0xff]
    %v3204 = vld [vmem:[#allocation14 + $0x1e8] sm:$0xff]
    %v3205 = vld [vmem:[#allocation14 + $0x1f0] sm:$0xff]
    %v3206 = vld [vmem:[#allocation14 + $0x1f8] sm:$0xff]
    %v3207 = vld [vmem:[#allocation14 + $0x200] sm:$0xff]
    %v3208 = vld [vmem:[#allocation14 + $0x208] sm:$0xff]
    %v3209 = vld [vmem:[#allocation14 + $0x210] sm:$0xff]
    %v3210 = vld [vmem:[#allocation14 + $0x218] sm:$0xff]
    %v3211 = vld [vmem:[#allocation14 + $0x220] sm:$0xff]
    %v3212 = vld [vmem:[#allocation14 + $0x228] sm:$0xff]
    %v3213 = vld [vmem:[#allocation14 + $0x230] sm:$0xff]
    %v3214 = vld [vmem:[#allocation14 + $0x238] sm:$0xff]
    %v3215 = vld [vmem:[#allocation14 + $0x240] sm:$0xff]
    %v3216 = vld [vmem:[#allocation14 + $0x248] sm:$0xff]
    %v3217 = vld [vmem:[#allocation14 + $0x250] sm:$0xff]
    %v3218 = vld [vmem:[#allocation14 + $0x258] sm:$0xff]
    %v3219 = vld [vmem:[#allocation14 + $0x260] sm:$0xff]
    %v3220 = vld [vmem:[#allocation14 + $0x268] sm:$0xff]
    %v3221 = vld [vmem:[#allocation14 + $0x270] sm:$0xff]
    %v3222 = vld [vmem:[#allocation14 + $0x278] sm:$0xff]
    %v3223 = vld [vmem:[#allocation14 + $0x280] sm:$0xff]
    %v3224 = vld [vmem:[#allocation14 + $0x288] sm:$0xff]
    %v3225 = vld [vmem:[#allocation14 + $0x290] sm:$0xff]
    %v3226 = vld [vmem:[#allocation14 + $0x298] sm:$0xff]
    %v3227 = vld [vmem:[#allocation14 + $0x2a0] sm:$0xff]
    %v3228 = vld [vmem:[#allocation14 + $0x2a8] sm:$0xff]
    %v3229 = vld [vmem:[#allocation14 + $0x2b0] sm:$0xff]
    %v3230 = vld [vmem:[#allocation14 + $0x2b8] sm:$0xff]
    %v3231 = vld [vmem:[#allocation14 + $0x2c0] sm:$0xff]
    %v3232 = vld [vmem:[#allocation14 + $0x2c8] sm:$0xff]
    %v3233 = vld [vmem:[#allocation14 + $0x2d0] sm:$0xff]
    %v3234 = vld [vmem:[#allocation14 + $0x2d8] sm:$0xff]
    %v3235 = vld [vmem:[#allocation14 + $0x2e0] sm:$0xff]
    %v3236 = vld [vmem:[#allocation14 + $0x2e8] sm:$0xff]
    %v3237 = vld [vmem:[#allocation14 + $0x2f0] sm:$0xff]
    %v3238 = vld [vmem:[#allocation14 + $0x2f8] sm:$0xff]
    %v3239 = vld [vmem:[#allocation14 + $0x300] sm:$0xff]
    %v3240 = vld [vmem:[#allocation14 + $0x308] sm:$0xff]
    %v3241 = vld [vmem:[#allocation14 + $0x310] sm:$0xff]
    %v3242 = vld [vmem:[#allocation14 + $0x318] sm:$0xff]
    %v3243 = vld [vmem:[#allocation14 + $0x320] sm:$0xff]
    %v3244 = vld [vmem:[#allocation14 + $0x328] sm:$0xff]
    %v3245 = vld [vmem:[#allocation14 + $0x330] sm:$0xff]
    %v3246 = vld [vmem:[#allocation14 + $0x338] sm:$0xff]
    %v3247 = vld [vmem:[#allocation14 + $0x340] sm:$0xff]
    %v3248 = vld [vmem:[#allocation14 + $0x348] sm:$0xff]
    %v3249 = vld [vmem:[#allocation14 + $0x350] sm:$0xff]
    %v3250 = vld [vmem:[#allocation14 + $0x358] sm:$0xff]
    %v3251 = vld [vmem:[#allocation14 + $0x360] sm:$0xff]
    %v3252 = vld [vmem:[#allocation14 + $0x368] sm:$0xff]
    %v3253 = vld [vmem:[#allocation14 + $0x370] sm:$0xff]
    %v3254 = vld [vmem:[#allocation14 + $0x378] sm:$0xff]
    %v3255 = vld [vmem:[#allocation14 + $0x380] sm:$0xff]
    %v3256 = vld [vmem:[#allocation14 + $0x388] sm:$0xff]
    %v3257 = vld [vmem:[#allocation14 + $0x390] sm:$0xff]
    %v3258 = vld [vmem:[#allocation14 + $0x398] sm:$0xff]
    %v3259 = vld [vmem:[#allocation14 + $0x3a0] sm:$0xff]
    %v3260 = vld [vmem:[#allocation14 + $0x3a8] sm:$0xff]
    %v3261 = vld [vmem:[#allocation14 + $0x3b0] sm:$0xff]
    %v3262 = vld [vmem:[#allocation14 + $0x3b8] sm:$0xff]
    %v3263 = vld [vmem:[#allocation14 + $0x3c0] sm:$0xff]
    %v3264 = vld [vmem:[#allocation14 + $0x3c8] sm:$0xff]
    %v3265 = vld [vmem:[#allocation14 + $0x3d0] sm:$0xff]
    %v3266 = vld [vmem:[#allocation14 + $0x3d8] sm:$0xff]
    %v3267 = vld [vmem:[#allocation14 + $0x3e0] sm:$0xff]
    %v3268 = vld [vmem:[#allocation14 + $0x3e8] sm:$0xff]
    %v3269 = vld [vmem:[#allocation14 + $0x3f0] sm:$0xff]
    %v3270 = vld [vmem:[#allocation14 + $0x3f8] sm:$0xff]
    %v3271 = vunpack.c.l.s8.bf16 %v3143
    %v3272 = vunpack.c.l.s8.bf16 %v3144
    %v3273 = vunpack.c.l.s8.bf16 %v3145
    %v3274 = vunpack.c.l.s8.bf16 %v3146
    %v3275 = vunpack.c.l.s8.bf16 %v3147
    %v3276 = vunpack.c.l.s8.bf16 %v3148
    %v3277 = vunpack.c.l.s8.bf16 %v3149
    %v3278 = vunpack.c.l.s8.bf16 %v3150
    %v3279 = vunpack.c.h.s8.bf16 %v3143
    %v3280 = vunpack.c.h.s8.bf16 %v3144
    %v3281 = vunpack.c.h.s8.bf16 %v3145
    %v3282 = vunpack.c.h.s8.bf16 %v3146
    %v3283 = vunpack.c.h.s8.bf16 %v3147
    %v3284 = vunpack.c.h.s8.bf16 %v3148
    %v3285 = vunpack.c.h.s8.bf16 %v3149
    %v3286 = vunpack.c.h.s8.bf16 %v3150
    %v3287 = vunpack.c.l.s8.bf16 %v3151
    %v3288 = vunpack.c.l.s8.bf16 %v3152
    %v3289 = vunpack.c.l.s8.bf16 %v3153
    %v3290 = vunpack.c.l.s8.bf16 %v3154
    %v3291 = vunpack.c.l.s8.bf16 %v3155
    %v3292 = vunpack.c.l.s8.bf16 %v3156
    %v3293 = vunpack.c.l.s8.bf16 %v3157
    %v3294 = vunpack.c.l.s8.bf16 %v3158
    %v3295 = vunpack.c.h.s8.bf16 %v3151
    %v3296 = vunpack.c.h.s8.bf16 %v3152
    %v3297 = vunpack.c.h.s8.bf16 %v3153
    %v3298 = vunpack.c.h.s8.bf16 %v3154
    %v3299 = vunpack.c.h.s8.bf16 %v3155
    %v3300 = vunpack.c.h.s8.bf16 %v3156
    %v3301 = vunpack.c.h.s8.bf16 %v3157
    %v3302 = vunpack.c.h.s8.bf16 %v3158
    %v3303 = vunpack.c.l.s8.bf16 %v3159
    %v3304 = vunpack.c.l.s8.bf16 %v3160
    %v3305 = vunpack.c.l.s8.bf16 %v3161
    %v3306 = vunpack.c.l.s8.bf16 %v3162
    %v3307 = vunpack.c.l.s8.bf16 %v3163
    %v3308 = vunpack.c.l.s8.bf16 %v3164
    %v3309 = vunpack.c.l.s8.bf16 %v3165
    %v3310 = vunpack.c.l.s8.bf16 %v3166
    %v3311 = vunpack.c.h.s8.bf16 %v3159
    %v3312 = vunpack.c.h.s8.bf16 %v3160
    %v3313 = vunpack.c.h.s8.bf16 %v3161
    %v3314 = vunpack.c.h.s8.bf16 %v3162
    %v3315 = vunpack.c.h.s8.bf16 %v3163
    %v3316 = vunpack.c.h.s8.bf16 %v3164
    %v3317 = vunpack.c.h.s8.bf16 %v3165
    %v3318 = vunpack.c.h.s8.bf16 %v3166
    %v3319 = vunpack.c.l.s8.bf16 %v3167
    %v3320 = vunpack.c.l.s8.bf16 %v3168
    %v3321 = vunpack.c.l.s8.bf16 %v3169
    %v3322 = vunpack.c.l.s8.bf16 %v3170
    %v3323 = vunpack.c.l.s8.bf16 %v3171
    %v3324 = vunpack.c.l.s8.bf16 %v3172
    %v3325 = vunpack.c.l.s8.bf16 %v3173
    %v3326 = vunpack.c.l.s8.bf16 %v3174
    %v3327 = vunpack.c.h.s8.bf16 %v3167
    %v3328 = vunpack.c.h.s8.bf16 %v3168
    %v3329 = vunpack.c.h.s8.bf16 %v3169
    %v3330 = vunpack.c.h.s8.bf16 %v3170
    %v3331 = vunpack.c.h.s8.bf16 %v3171
    %v3332 = vunpack.c.h.s8.bf16 %v3172
    %v3333 = vunpack.c.h.s8.bf16 %v3173
    %v3334 = vunpack.c.h.s8.bf16 %v3174
    %v3335 = vunpack.c.l.s8.bf16 %v3175
    %v3336 = vunpack.c.l.s8.bf16 %v3176
    %v3337 = vunpack.c.l.s8.bf16 %v3177
    %v3338 = vunpack.c.l.s8.bf16 %v3178
    %v3339 = vunpack.c.l.s8.bf16 %v3179
    %v3340 = vunpack.c.l.s8.bf16 %v3180
    %v3341 = vunpack.c.l.s8.bf16 %v3181
    %v3342 = vunpack.c.l.s8.bf16 %v3182
    %v3343 = vunpack.c.h.s8.bf16 %v3175
    %v3344 = vunpack.c.h.s8.bf16 %v3176
    %v3345 = vunpack.c.h.s8.bf16 %v3177
    %v3346 = vunpack.c.h.s8.bf16 %v3178
    %v3347 = vunpack.c.h.s8.bf16 %v3179
    %v3348 = vunpack.c.h.s8.bf16 %v3180
    %v3349 = vunpack.c.h.s8.bf16 %v3181
    %v3350 = vunpack.c.h.s8.bf16 %v3182
    %v3351 = vunpack.c.l.s8.bf16 %v3183
    %v3352 = vunpack.c.l.s8.bf16 %v3184
    %v3353 = vunpack.c.l.s8.bf16 %v3185
    %v3354 = vunpack.c.l.s8.bf16 %v3186
    %v3355 = vunpack.c.l.s8.bf16 %v3187
    %v3356 = vunpack.c.l.s8.bf16 %v3188
    %v3357 = vunpack.c.l.s8.bf16 %v3189
    %v3358 = vunpack.c.l.s8.bf16 %v3190
    %v3359 = vunpack.c.h.s8.bf16 %v3183
    %v3360 = vunpack.c.h.s8.bf16 %v3184
    %v3361 = vunpack.c.h.s8.bf16 %v3185
    %v3362 = vunpack.c.h.s8.bf16 %v3186
    %v3363 = vunpack.c.h.s8.bf16 %v3187
    %v3364 = vunpack.c.h.s8.bf16 %v3188
    %v3365 = vunpack.c.h.s8.bf16 %v3189
    %v3366 = vunpack.c.h.s8.bf16 %v3190
    %v3367 = vunpack.c.l.s8.bf16 %v3191
    %v3368 = vunpack.c.l.s8.bf16 %v3192
    %v3369 = vunpack.c.l.s8.bf16 %v3193
    %v3370 = vunpack.c.l.s8.bf16 %v3194
    %v3371 = vunpack.c.l.s8.bf16 %v3195
    %v3372 = vunpack.c.l.s8.bf16 %v3196
    %v3373 = vunpack.c.l.s8.bf16 %v3197
    %v3374 = vunpack.c.l.s8.bf16 %v3198
    %v3375 = vunpack.c.h.s8.bf16 %v3191
    %v3376 = vunpack.c.h.s8.bf16 %v3192
    %v3377 = vunpack.c.h.s8.bf16 %v3193
    %v3378 = vunpack.c.h.s8.bf16 %v3194
    %v3379 = vunpack.c.h.s8.bf16 %v3195
    %v3380 = vunpack.c.h.s8.bf16 %v3196
    %v3381 = vunpack.c.h.s8.bf16 %v3197
    %v3382 = vunpack.c.h.s8.bf16 %v3198
    %v3383 = vunpack.c.l.s8.bf16 %v3199
    %v3384 = vunpack.c.l.s8.bf16 %v3200
    %v3385 = vunpack.c.l.s8.bf16 %v3201
    %v3386 = vunpack.c.l.s8.bf16 %v3202
    %v3387 = vunpack.c.l.s8.bf16 %v3203
    %v3388 = vunpack.c.l.s8.bf16 %v3204
    %v3389 = vunpack.c.l.s8.bf16 %v3205
    %v3390 = vunpack.c.l.s8.bf16 %v3206
    %v3391 = vunpack.c.h.s8.bf16 %v3199
    %v3392 = vunpack.c.h.s8.bf16 %v3200
    %v3393 = vunpack.c.h.s8.bf16 %v3201
    %v3394 = vunpack.c.h.s8.bf16 %v3202
    %v3395 = vunpack.c.h.s8.bf16 %v3203
    %v3396 = vunpack.c.h.s8.bf16 %v3204
    %v3397 = vunpack.c.h.s8.bf16 %v3205
    %v3398 = vunpack.c.h.s8.bf16 %v3206
    %v3399 = vunpack.c.l.s8.bf16 %v3207
    %v3400 = vunpack.c.l.s8.bf16 %v3208
    %v3401 = vunpack.c.l.s8.bf16 %v3209
    %v3402 = vunpack.c.l.s8.bf16 %v3210
    %v3403 = vunpack.c.l.s8.bf16 %v3211
    %v3404 = vunpack.c.l.s8.bf16 %v3212
    %v3405 = vunpack.c.l.s8.bf16 %v3213
    %v3406 = vunpack.c.l.s8.bf16 %v3214
    %v3407 = vunpack.c.h.s8.bf16 %v3207
    %v3408 = vunpack.c.h.s8.bf16 %v3208
    %v3409 = vunpack.c.h.s8.bf16 %v3209
    %v3410 = vunpack.c.h.s8.bf16 %v3210
    %v3411 = vunpack.c.h.s8.bf16 %v3211
    %v3412 = vunpack.c.h.s8.bf16 %v3212
    %v3413 = vunpack.c.h.s8.bf16 %v3213
    %v3414 = vunpack.c.h.s8.bf16 %v3214
    %v3415 = vunpack.c.l.s8.bf16 %v3215
    %v3416 = vunpack.c.l.s8.bf16 %v3216
    %v3417 = vunpack.c.l.s8.bf16 %v3217
    %v3418 = vunpack.c.l.s8.bf16 %v3218
    %v3419 = vunpack.c.l.s8.bf16 %v3219
    %v3420 = vunpack.c.l.s8.bf16 %v3220
    %v3421 = vunpack.c.l.s8.bf16 %v3221
    %v3422 = vunpack.c.l.s8.bf16 %v3222
    %v3423 = vunpack.c.h.s8.bf16 %v3215
    %v3424 = vunpack.c.h.s8.bf16 %v3216
    %v3425 = vunpack.c.h.s8.bf16 %v3217
    %v3426 = vunpack.c.h.s8.bf16 %v3218
    %v3427 = vunpack.c.h.s8.bf16 %v3219
    %v3428 = vunpack.c.h.s8.bf16 %v3220
    %v3429 = vunpack.c.h.s8.bf16 %v3221
    %v3430 = vunpack.c.h.s8.bf16 %v3222
    %v3431 = vunpack.c.l.s8.bf16 %v3223
    %v3432 = vunpack.c.l.s8.bf16 %v3224
    %v3433 = vunpack.c.l.s8.bf16 %v3225
    %v3434 = vunpack.c.l.s8.bf16 %v3226
    %v3435 = vunpack.c.l.s8.bf16 %v3227
    %v3436 = vunpack.c.l.s8.bf16 %v3228
    %v3437 = vunpack.c.l.s8.bf16 %v3229
    %v3438 = vunpack.c.l.s8.bf16 %v3230
    %v3439 = vunpack.c.h.s8.bf16 %v3223
    %v3440 = vunpack.c.h.s8.bf16 %v3224
    %v3441 = vunpack.c.h.s8.bf16 %v3225
    %v3442 = vunpack.c.h.s8.bf16 %v3226
    %v3443 = vunpack.c.h.s8.bf16 %v3227
    %v3444 = vunpack.c.h.s8.bf16 %v3228
    %v3445 = vunpack.c.h.s8.bf16 %v3229
    %v3446 = vunpack.c.h.s8.bf16 %v3230
    %v3447 = vunpack.c.l.s8.bf16 %v3231
    %v3448 = vunpack.c.l.s8.bf16 %v3232
    %v3449 = vunpack.c.l.s8.bf16 %v3233
    %v3450 = vunpack.c.l.s8.bf16 %v3234
    %v3451 = vunpack.c.l.s8.bf16 %v3235
    %v3452 = vunpack.c.l.s8.bf16 %v3236
    %v3453 = vunpack.c.l.s8.bf16 %v3237
    %v3454 = vunpack.c.l.s8.bf16 %v3238
    %v3455 = vunpack.c.h.s8.bf16 %v3231
    %v3456 = vunpack.c.h.s8.bf16 %v3232
    %v3457 = vunpack.c.h.s8.bf16 %v3233
    %v3458 = vunpack.c.h.s8.bf16 %v3234
    %v3459 = vunpack.c.h.s8.bf16 %v3235
    %v3460 = vunpack.c.h.s8.bf16 %v3236
    %v3461 = vunpack.c.h.s8.bf16 %v3237
    %v3462 = vunpack.c.h.s8.bf16 %v3238
    %v3463 = vunpack.c.l.s8.bf16 %v3239
    %v3464 = vunpack.c.l.s8.bf16 %v3240
    %v3465 = vunpack.c.l.s8.bf16 %v3241
    %v3466 = vunpack.c.l.s8.bf16 %v3242
    %v3467 = vunpack.c.l.s8.bf16 %v3243
    %v3468 = vunpack.c.l.s8.bf16 %v3244
    %v3469 = vunpack.c.l.s8.bf16 %v3245
    %v3470 = vunpack.c.l.s8.bf16 %v3246
    %v3471 = vunpack.c.h.s8.bf16 %v3239
    %v3472 = vunpack.c.h.s8.bf16 %v3240
    %v3473 = vunpack.c.h.s8.bf16 %v3241
    %v3474 = vunpack.c.h.s8.bf16 %v3242
    %v3475 = vunpack.c.h.s8.bf16 %v3243
    %v3476 = vunpack.c.h.s8.bf16 %v3244
    %v3477 = vunpack.c.h.s8.bf16 %v3245
    %v3478 = vunpack.c.h.s8.bf16 %v3246
    %v3479 = vunpack.c.l.s8.bf16 %v3247
    %v3480 = vunpack.c.l.s8.bf16 %v3248
    %v3481 = vunpack.c.l.s8.bf16 %v3249
    %v3482 = vunpack.c.l.s8.bf16 %v3250
    %v3483 = vunpack.c.l.s8.bf16 %v3251
    %v3484 = vunpack.c.l.s8.bf16 %v3252
    %v3485 = vunpack.c.l.s8.bf16 %v3253
    %v3486 = vunpack.c.l.s8.bf16 %v3254
    %v3487 = vunpack.c.h.s8.bf16 %v3247
    %v3488 = vunpack.c.h.s8.bf16 %v3248
    %v3489 = vunpack.c.h.s8.bf16 %v3249
    %v3490 = vunpack.c.h.s8.bf16 %v3250
    %v3491 = vunpack.c.h.s8.bf16 %v3251
    %v3492 = vunpack.c.h.s8.bf16 %v3252
    %v3493 = vunpack.c.h.s8.bf16 %v3253
    %v3494 = vunpack.c.h.s8.bf16 %v3254
    %v3495 = vunpack.c.l.s8.bf16 %v3255
    %v3496 = vunpack.c.l.s8.bf16 %v3256
    %v3497 = vunpack.c.l.s8.bf16 %v3257
    %v3498 = vunpack.c.l.s8.bf16 %v3258
    %v3499 = vunpack.c.l.s8.bf16 %v3259
    %v3500 = vunpack.c.l.s8.bf16 %v3260
    %v3501 = vunpack.c.l.s8.bf16 %v3261
    %v3502 = vunpack.c.l.s8.bf16 %v3262
    %v3503 = vunpack.c.h.s8.bf16 %v3255
    %v3504 = vunpack.c.h.s8.bf16 %v3256
    %v3505 = vunpack.c.h.s8.bf16 %v3257
    %v3506 = vunpack.c.h.s8.bf16 %v3258
    %v3507 = vunpack.c.h.s8.bf16 %v3259
    %v3508 = vunpack.c.h.s8.bf16 %v3260
    %v3509 = vunpack.c.h.s8.bf16 %v3261
    %v3510 = vunpack.c.h.s8.bf16 %v3262
    %v3511 = vunpack.c.l.s8.bf16 %v3263
    %v3512 = vunpack.c.l.s8.bf16 %v3264
    %v3513 = vunpack.c.l.s8.bf16 %v3265
    %v3514 = vunpack.c.l.s8.bf16 %v3266
    %v3515 = vunpack.c.l.s8.bf16 %v3267
    %v3516 = vunpack.c.l.s8.bf16 %v3268
    %v3517 = vunpack.c.l.s8.bf16 %v3269
    %v3518 = vunpack.c.l.s8.bf16 %v3270
    %v3519 = vunpack.c.h.s8.bf16 %v3263
    %v3520 = vunpack.c.h.s8.bf16 %v3264
    %v3521 = vunpack.c.h.s8.bf16 %v3265
    %v3522 = vunpack.c.h.s8.bf16 %v3266
    %v3523 = vunpack.c.h.s8.bf16 %v3267
    %v3524 = vunpack.c.h.s8.bf16 %v3268
    %v3525 = vunpack.c.h.s8.bf16 %v3269
    %v3526 = vunpack.c.h.s8.bf16 %v3270
    %3527 = vmatprep.subr.bf16.mxu0 %v3272
    %3528 = vmatpush1.bf16.msra.mxu0 %v3271
    %3529 = vmatprep.subr.bf16.mxu0 %v3280
    %3530 = vmatpush1.bf16.msra.mxu0 %v3279
    %3531 = vmatprep.subr.bf16.mxu0 %v3288
    %3532 = vmatpush1.bf16.msra.mxu0 %v3287
    %3533 = vmatprep.subr.bf16.mxu0 %v3296
    %3534 = vmatpush1.bf16.msra.mxu0 %v3295
    %3535 = vmatprep.subr.bf16.mxu0 %v3304
    %3536 = vmatpush1.bf16.msra.mxu0 %v3303
    %3537 = vmatprep.subr.bf16.mxu0 %v3312
    %3538 = vmatpush1.bf16.msra.mxu0 %v3311
    %3539 = vmatprep.subr.bf16.mxu0 %v3320
    %3540 = vmatpush1.bf16.msra.mxu0 %v3319
    %3541 = vmatprep.subr.bf16.mxu0 %v3328
    %3542 = vmatpush1.bf16.msra.mxu0 %v3327
    %3543 = vmatprep.subr.bf16.mxu0 %v3336
    %3544 = vmatpush1.bf16.msra.mxu0 %v3335
    %3545 = vmatprep.subr.bf16.mxu0 %v3344
    %3546 = vmatpush1.bf16.msra.mxu0 %v3343
    %3547 = vmatprep.subr.bf16.mxu0 %v3352
    %3548 = vmatpush1.bf16.msra.mxu0 %v3351
    %3549 = vmatprep.subr.bf16.mxu0 %v3360
    %3550 = vmatpush1.bf16.msra.mxu0 %v3359
    %3551 = vmatprep.subr.bf16.mxu0 %v3368
    %3552 = vmatpush1.bf16.msra.mxu0 %v3367
    %3553 = vmatprep.subr.bf16.mxu0 %v3376
    %3554 = vmatpush1.bf16.msra.mxu0 %v3375
    %3555 = vmatprep.subr.bf16.mxu0 %v3384
    %3556 = vmatpush1.bf16.msra.mxu0 %v3383
    %3557 = vmatprep.subr.bf16.mxu0 %v3392
    %3558 = vmatpush1.bf16.msra.mxu0 %v3391
    %3559 = vmatprep.mubr.bf16.mxu0 %v3140
    %3560 = vmatmul.mubr.bf16.gmra.mrb[0].mxu0 %v3139
    %v3561 = vpop.f32.mrb[0].mxu0
    %v3562 = vadd.f32 0.0, %v3561
    %v3563 = vpop.f32.mrb[0].mxu0
    %v3564 = vadd.f32 0.0, %v3563
    %v3565 = vpop.f32.mrb[0].mxu0
    %v3566 = vpop.f32.mrb[0].mxu0
    %3567 = vdwg.mxu0
    %3568 = vmatprep.subr.bf16.mxu0 %v3400
    %3569 = vmatpush1.bf16.msra.mxu0 %v3399
    %3570 = vmatprep.subr.bf16.mxu0 %v3408
    %3571 = vmatpush1.bf16.msra.mxu0 %v3407
    %3572 = vmatprep.subr.bf16.mxu0 %v3416
    %3573 = vmatpush1.bf16.msra.mxu0 %v3415
    %3574 = vmatprep.subr.bf16.mxu0 %v3424
    %3575 = vmatpush1.bf16.msra.mxu0 %v3423
    %3576 = vmatprep.subr.bf16.mxu0 %v3432
    %3577 = vmatpush1.bf16.msra.mxu0 %v3431
    %3578 = vmatprep.subr.bf16.mxu0 %v3440
    %3579 = vmatpush1.bf16.msra.mxu0 %v3439
    %3580 = vmatprep.subr.bf16.mxu0 %v3448
    %3581 = vmatpush1.bf16.msra.mxu0 %v3447
    %3582 = vmatprep.subr.bf16.mxu0 %v3456
    %3583 = vmatpush1.bf16.msra.mxu0 %v3455
    %3584 = vmatprep.subr.bf16.mxu0 %v3464
    %3585 = vmatpush1.bf16.msra.mxu0 %v3463
    %3586 = vmatprep.subr.bf16.mxu0 %v3472
    %3587 = vmatpush1.bf16.msra.mxu0 %v3471
    %3588 = vmatprep.subr.bf16.mxu0 %v3480
    %3589 = vmatpush1.bf16.msra.mxu0 %v3479
    %3590 = vmatprep.subr.bf16.mxu0 %v3488
    %3591 = vmatpush1.bf16.msra.mxu0 %v3487
    %3592 = vmatprep.subr.bf16.mxu0 %v3496
    %3593 = vmatpush1.bf16.msra.mxu0 %v3495
    %3594 = vmatprep.subr.bf16.mxu0 %v3504
    %3595 = vmatpush1.bf16.msra.mxu0 %v3503
    %3596 = vmatprep.subr.bf16.mxu0 %v3512
    %3597 = vmatpush1.bf16.msra.mxu0 %v3511
    %3598 = vmatprep.subr.bf16.mxu0 %v3520
    %3599 = vmatpush1.bf16.msra.mxu0 %v3519
    %3600 = vmatprep.mubr.bf16.mxu0 %v3142
    %3601 = vmatmul.mubr.bf16.gmra.mrb[0].mxu0 %v3141
    %v3602 = vpop.f32.mrb[0].mxu0
    %v3603 = vadd.f32 %v3562, %v3602
    %v3604 = vpop.f32.mrb[0].mxu0
    %v3605 = vadd.f32 %v3564, %v3604
    %v3606 = vpop.f32.mrb[0].mxu0
    %v3607 = vpop.f32.mrb[0].mxu0
    %3608 = vdwg.mxu0
    %3609 = vmatprep.subr.bf16.mxu0 %v3274
    %3610 = vmatpush1.bf16.msra.mxu0 %v3273
    %3611 = vmatprep.subr.bf16.mxu0 %v3282
    %3612 = vmatpush1.bf16.msra.mxu0 %v3281
    %3613 = vmatprep.subr.bf16.mxu0 %v3290
    %3614 = vmatpush1.bf16.msra.mxu0 %v3289
    %3615 = vmatprep.subr.bf16.mxu0 %v3298
    %3616 = vmatpush1.bf16.msra.mxu0 %v3297
    %3617 = vmatprep.subr.bf16.mxu0 %v3306
    %3618 = vmatpush1.bf16.msra.mxu0 %v3305
    %3619 = vmatprep.subr.bf16.mxu0 %v3314
    %3620 = vmatpush1.bf16.msra.mxu0 %v3313
    %3621 = vmatprep.subr.bf16.mxu0 %v3322
    %3622 = vmatpush1.bf16.msra.mxu0 %v3321
    %3623 = vmatprep.subr.bf16.mxu0 %v3330
    %3624 = vmatpush1.bf16.msra.mxu0 %v3329
    %3625 = vmatprep.subr.bf16.mxu0 %v3338
    %3626 = vmatpush1.bf16.msra.mxu0 %v3337
    %3627 = vmatprep.subr.bf16.mxu0 %v3346
    %3628 = vmatpush1.bf16.msra.mxu0 %v3345
    %3629 = vmatprep.subr.bf16.mxu0 %v3354
    %3630 = vmatpush1.bf16.msra.mxu0 %v3353
    %3631 = vmatprep.subr.bf16.mxu0 %v3362
    %3632 = vmatpush1.bf16.msra.mxu0 %v3361
    %3633 = vmatprep.subr.bf16.mxu0 %v3370
    %3634 = vmatpush1.bf16.msra.mxu0 %v3369
    %3635 = vmatprep.subr.bf16.mxu0 %v3378
    %3636 = vmatpush1.bf16.msra.mxu0 %v3377
    %3637 = vmatprep.subr.bf16.mxu0 %v3386
    %3638 = vmatpush1.bf16.msra.mxu0 %v3385
    %3639 = vmatprep.subr.bf16.mxu0 %v3394
    %3640 = vmatpush1.bf16.msra.mxu0 %v3393
    %3641 = vmatprep.mubr.bf16.mxu0 %v3140
    %3642 = vmatmul.mubr.bf16.gmra.mrb[0].mxu0 %v3139
    %v3643 = vpop.f32.mrb[0].mxu0
    %v3644 = vadd.f32 0.0, %v3643
    %v3645 = vpop.f32.mrb[0].mxu0
    %v3646 = vadd.f32 0.0, %v3645
    %v3647 = vpop.f32.mrb[0].mxu0
    %v3648 = vpop.f32.mrb[0].mxu0
    %3649 = vdwg.mxu0
    %3650 = vmatprep.subr.bf16.mxu0 %v3402
    %3651 = vmatpush1.bf16.msra.mxu0 %v3401
    %3652 = vmatprep.subr.bf16.mxu0 %v3410
    %3653 = vmatpush1.bf16.msra.mxu0 %v3409
    %3654 = vmatprep.subr.bf16.mxu0 %v3418
    %3655 = vmatpush1.bf16.msra.mxu0 %v3417
    %3656 = vmatprep.subr.bf16.mxu0 %v3426
    %3657 = vmatpush1.bf16.msra.mxu0 %v3425
    %3658 = vmatprep.subr.bf16.mxu0 %v3434
    %3659 = vmatpush1.bf16.msra.mxu0 %v3433
    %3660 = vmatprep.subr.bf16.mxu0 %v3442
    %3661 = vmatpush1.bf16.msra.mxu0 %v3441
    %3662 = vmatprep.subr.bf16.mxu0 %v3450
    %3663 = vmatpush1.bf16.msra.mxu0 %v3449
    %3664 = vmatprep.subr.bf16.mxu0 %v3458
    %3665 = vmatpush1.bf16.msra.mxu0 %v3457
    %3666 = vmatprep.subr.bf16.mxu0 %v3466
    %3667 = vmatpush1.bf16.msra.mxu0 %v3465
    %3668 = vmatprep.subr.bf16.mxu0 %v3474
    %3669 = vmatpush1.bf16.msra.mxu0 %v3473
    %3670 = vmatprep.subr.bf16.mxu0 %v3482
    %3671 = vmatpush1.bf16.msra.mxu0 %v3481
    %3672 = vmatprep.subr.bf16.mxu0 %v3490
    %3673 = vmatpush1.bf16.msra.mxu0 %v3489
    %3674 = vmatprep.subr.bf16.mxu0 %v3498
    %3675 = vmatpush1.bf16.msra.mxu0 %v3497
    %3676 = vmatprep.subr.bf16.mxu0 %v3506
    %3677 = vmatpush1.bf16.msra.mxu0 %v3505
    %3678 = vmatprep.subr.bf16.mxu0 %v3514
    %3679 = vmatpush1.bf16.msra.mxu0 %v3513
    %3680 = vmatprep.subr.bf16.mxu0 %v3522
    %3681 = vmatpush1.bf16.msra.mxu0 %v3521
    %3682 = vmatprep.mubr.bf16.mxu0 %v3142
    %3683 = vmatmul.mubr.bf16.gmra.mrb[0].mxu0 %v3141
    %v3684 = vpop.f32.mrb[0].mxu0
    %v3685 = vadd.f32 %v3644, %v3684
    %v3686 = vpop.f32.mrb[0].mxu0
    %v3687 = vadd.f32 %v3646, %v3686
    %v3688 = vpop.f32.mrb[0].mxu0
    %v3689 = vpop.f32.mrb[0].mxu0
    %3690 = vdwg.mxu0
    %3691 = vmatprep.subr.bf16.mxu0 %v3276
    %3692 = vmatpush1.bf16.msra.mxu0 %v3275
    %3693 = vmatprep.subr.bf16.mxu0 %v3284
    %3694 = vmatpush1.bf16.msra.mxu0 %v3283
    %3695 = vmatprep.subr.bf16.mxu0 %v3292
    %3696 = vmatpush1.bf16.msra.mxu0 %v3291
    %3697 = vmatprep.subr.bf16.mxu0 %v3300
    %3698 = vmatpush1.bf16.msra.mxu0 %v3299
    %3699 = vmatprep.subr.bf16.mxu0 %v3308
    %3700 = vmatpush1.bf16.msra.mxu0 %v3307
    %3701 = vmatprep.subr.bf16.mxu0 %v3316
    %3702 = vmatpush1.bf16.msra.mxu0 %v3315
    %3703 = vmatprep.subr.bf16.mxu0 %v3324
    %3704 = vmatpush1.bf16.msra.mxu0 %v3323
    %3705 = vmatprep.subr.bf16.mxu0 %v3332
    %3706 = vmatpush1.bf16.msra.mxu0 %v3331
    %3707 = vmatprep.subr.bf16.mxu0 %v3340
    %3708 = vmatpush1.bf16.msra.mxu0 %v3339
    %3709 = vmatprep.subr.bf16.mxu0 %v3348
    %3710 = vmatpush1.bf16.msra.mxu0 %v3347
    %3711 = vmatprep.subr.bf16.mxu0 %v3356
    %3712 = vmatpush1.bf16.msra.mxu0 %v3355
    %3713 = vmatprep.subr.bf16.mxu0 %v3364
    %3714 = vmatpush1.bf16.msra.mxu0 %v3363
    %3715 = vmatprep.subr.bf16.mxu0 %v3372
    %3716 = vmatpush1.bf16.msra.mxu0 %v3371
    %3717 = vmatprep.subr.bf16.mxu0 %v3380
    %3718 = vmatpush1.bf16.msra.mxu0 %v3379
    %3719 = vmatprep.subr.bf16.mxu0 %v3388
    %3720 = vmatpush1.bf16.msra.mxu0 %v3387
    %3721 = vmatprep.subr.bf16.mxu0 %v3396
    %3722 = vmatpush1.bf16.msra.mxu0 %v3395
    %3723 = vmatprep.mubr.bf16.mxu0 %v3140
    %3724 = vmatmul.mubr.bf16.gmra.mrb[0].mxu0 %v3139
    %v3725 = vpop.f32.mrb[0].mxu0
    %v3726 = vadd.f32 0.0, %v3725
    %v3727 = vpop.f32.mrb[0].mxu0
    %v3728 = vadd.f32 0.0, %v3727
    %v3729 = vpop.f32.mrb[0].mxu0
    %v3730 = vpop.f32.mrb[0].mxu0
    %3731 = vdwg.mxu0
    %3732 = vmatprep.subr.bf16.mxu0 %v3404
    %3733 = vmatpush1.bf16.msra.mxu0 %v3403
    %3734 = vmatprep.subr.bf16.mxu0 %v3412
    %3735 = vmatpush1.bf16.msra.mxu0 %v3411
    %3736 = vmatprep.subr.bf16.mxu0 %v3420
    %3737 = vmatpush1.bf16.msra.mxu0 %v3419
    %3738 = vmatprep.subr.bf16.mxu0 %v3428
    %3739 = vmatpush1.bf16.msra.mxu0 %v3427
    %3740 = vmatprep.subr.bf16.mxu0 %v3436
    %3741 = vmatpush1.bf16.msra.mxu0 %v3435
    %3742 = vmatprep.subr.bf16.mxu0 %v3444
    %3743 = vmatpush1.bf16.msra.mxu0 %v3443
    %3744 = vmatprep.subr.bf16.mxu0 %v3452
    %3745 = vmatpush1.bf16.msra.mxu0 %v3451
    %3746 = vmatprep.subr.bf16.mxu0 %v3460
    %3747 = vmatpush1.bf16.msra.mxu0 %v3459
    %3748 = vmatprep.subr.bf16.mxu0 %v3468
    %3749 = vmatpush1.bf16.msra.mxu0 %v3467
    %3750 = vmatprep.subr.bf16.mxu0 %v3476
    %3751 = vmatpush1.bf16.msra.mxu0 %v3475
    %3752 = vmatprep.subr.bf16.mxu0 %v3484
    %3753 = vmatpush1.bf16.msra.mxu0 %v3483
    %3754 = vmatprep.subr.bf16.mxu0 %v3492
    %3755 = vmatpush1.bf16.msra.mxu0 %v3491
    %3756 = vmatprep.subr.bf16.mxu0 %v3500
    %3757 = vmatpush1.bf16.msra.mxu0 %v3499
    %3758 = vmatprep.subr.bf16.mxu0 %v3508
    %3759 = vmatpush1.bf16.msra.mxu0 %v3507
    %3760 = vmatprep.subr.bf16.mxu0 %v3516
    %3761 = vmatpush1.bf16.msra.mxu0 %v3515
    %3762 = vmatprep.subr.bf16.mxu0 %v3524
    %3763 = vmatpush1.bf16.msra.mxu0 %v3523
    %3764 = vmatprep.mubr.bf16.mxu0 %v3142
    %3765 = vmatmul.mubr.bf16.gmra.mrb[0].mxu0 %v3141
    %v3766 = vpop.f32.mrb[0].mxu0
    %v3767 = vadd.f32 %v3726, %v3766
    %v3768 = vpop.f32.mrb[0].mxu0
    %v3769 = vadd.f32 %v3728, %v3768
    %v3770 = vpop.f32.mrb[0].mxu0
    %v3771 = vpop.f32.mrb[0].mxu0
    %3772 = vdwg.mxu0
    %3773 = vmatprep.subr.bf16.mxu0 %v3278
    %3774 = vmatpush1.bf16.msra.mxu0 %v3277
    %3775 = vmatprep.subr.bf16.mxu0 %v3286
    %3776 = vmatpush1.bf16.msra.mxu0 %v3285
    %3777 = vmatprep.subr.bf16.mxu0 %v3294
    %3778 = vmatpush1.bf16.msra.mxu0 %v3293
    %3779 = vmatprep.subr.bf16.mxu0 %v3302
    %3780 = vmatpush1.bf16.msra.mxu0 %v3301
    %3781 = vmatprep.subr.bf16.mxu0 %v3310
    %3782 = vmatpush1.bf16.msra.mxu0 %v3309
    %3783 = vmatprep.subr.bf16.mxu0 %v3318
    %3784 = vmatpush1.bf16.msra.mxu0 %v3317
    %3785 = vmatprep.subr.bf16.mxu0 %v3326
    %3786 = vmatpush1.bf16.msra.mxu0 %v3325
    %3787 = vmatprep.subr.bf16.mxu0 %v3334
    %3788 = vmatpush1.bf16.msra.mxu0 %v3333
    %3789 = vmatprep.subr.bf16.mxu0 %v3342
    %3790 = vmatpush1.bf16.msra.mxu0 %v3341
    %3791 = vmatprep.subr.bf16.mxu0 %v3350
    %3792 = vmatpush1.bf16.msra.mxu0 %v3349
    %3793 = vmatprep.subr.bf16.mxu0 %v3358
    %3794 = vmatpush1.bf16.msra.mxu0 %v3357
    %3795 = vmatprep.subr.bf16.mxu0 %v3366
    %3796 = vmatpush1.bf16.msra.mxu0 %v3365
    %3797 = vmatprep.subr.bf16.mxu0 %v3374
    %3798 = vmatpush1.bf16.msra.mxu0 %v3373
    %3799 = vmatprep.subr.bf16.mxu0 %v3382
    %3800 = vmatpush1.bf16.msra.mxu0 %v3381
    %3801 = vmatprep.subr.bf16.mxu0 %v3390
    %3802 = vmatpush1.bf16.msra.mxu0 %v3389
    %3803 = vmatprep.subr.bf16.mxu0 %v3398
    %3804 = vmatpush1.bf16.msra.mxu0 %v3397
    %3805 = vmatprep.mubr.bf16.mxu0 %v3140
    %3806 = vmatmul.mubr.bf16.gmra.mrb[0].mxu0 %v3139
    %v3807 = vpop.f32.mrb[0].mxu0
    %v3808 = vadd.f32 0.0, %v3807
    %v3809 = vpop.f32.mrb[0].mxu0
    %v3810 = vadd.f32 0.0, %v3809
    %v3811 = vpop.f32.mrb[0].mxu0
    %v3812 = vpop.f32.mrb[0].mxu0
    %3813 = vdwg.mxu0
    %3814 = vmatprep.subr.bf16.mxu0 %v3406
    %3815 = vmatpush1.bf16.msra.mxu0 %v3405
    %3816 = vmatprep.subr.bf16.mxu0 %v3414
    %3817 = vmatpush1.bf16.msra.mxu0 %v3413
    %3818 = vmatprep.subr.bf16.mxu0 %v3422
    %3819 = vmatpush1.bf16.msra.mxu0 %v3421
    %3820 = vmatprep.subr.bf16.mxu0 %v3430
    %3821 = vmatpush1.bf16.msra.mxu0 %v3429
    %3822 = vmatprep.subr.bf16.mxu0 %v3438
    %3823 = vmatpush1.bf16.msra.mxu0 %v3437
    %3824 = vmatprep.subr.bf16.mxu0 %v3446
    %3825 = vmatpush1.bf16.msra.mxu0 %v3445
    %3826 = vmatprep.subr.bf16.mxu0 %v3454
    %3827 = vmatpush1.bf16.msra.mxu0 %v3453
    %3828 = vmatprep.subr.bf16.mxu0 %v3462
    %3829 = vmatpush1.bf16.msra.mxu0 %v3461
    %3830 = vmatprep.subr.bf16.mxu0 %v3470
    %3831 = vmatpush1.bf16.msra.mxu0 %v3469
    %3832 = vmatprep.subr.bf16.mxu0 %v3478
    %3833 = vmatpush1.bf16.msra.mxu0 %v3477
    %3834 = vmatprep.subr.bf16.mxu0 %v3486
    %3835 = vmatpush1.bf16.msra.mxu0 %v3485
    %3836 = vmatprep.subr.bf16.mxu0 %v3494
    %3837 = vmatpush1.bf16.msra.mxu0 %v3493
    %3838 = vmatprep.subr.bf16.mxu0 %v3502
    %3839 = vmatpush1.bf16.msra.mxu0 %v3501
    %3840 = vmatprep.subr.bf16.mxu0 %v3510
    %3841 = vmatpush1.bf16.msra.mxu0 %v3509
    %3842 = vmatprep.subr.bf16.mxu0 %v3518
    %3843 = vmatpush1.bf16.msra.mxu0 %v3517
    %3844 = vmatprep.subr.bf16.mxu0 %v3526
    %3845 = vmatpush1.bf16.msra.mxu0 %v3525
    %3846 = vmatprep.mubr.bf16.mxu0 %v3142
    %3847 = vmatmul.mubr.bf16.gmra.mrb[0].mxu0 %v3141
    %v3848 = vpop.f32.mrb[0].mxu0
    %v3849 = vadd.f32 %v3808, %v3848
    %v3850 = vpop.f32.mrb[0].mxu0
    %v3851 = vadd.f32 %v3810, %v3850
    %v3852 = vpop.f32.mrb[0].mxu0
    %v3853 = vpop.f32.mrb[0].mxu0
    %3854 = vdwg.mxu0
    %v3855 = vld [vmem:[#allocation17 + $0x3a] sm:$0xff]
    %v3857 = vlaneseq
    %v3858 = vshrl.u32 %v3857, 7
    %v3859 = vsub.s32 0, %v3858
    %v3860 = vrot.slane %v3855, %v3859
    %v3861 = vlaneseq
    %v3862 = vshrl.u32 %v3861, 7
    %v3863 = vsub.s32 1, %v3862
    %v3864 = vrot.slane %v3855, %v3863
    %v3865 = vlaneseq
    %v3866 = vshrl.u32 %v3865, 7
    %v3867 = vsub.s32 2, %v3866
    %v3868 = vrot.slane %v3855, %v3867
    %v3869 = vlaneseq
    %v3870 = vshrl.u32 %v3869, 7
    %v3871 = vsub.s32 3, %v3870
    %v3872 = vrot.slane %v3855, %v3871
    %v3873 = vlaneseq
    %v3874 = vshrl.u32 %v3873, 7
    %v3875 = vsub.s32 4, %v3874
    %v3876 = vrot.slane %v3855, %v3875
    %v3877 = vlaneseq
    %v3878 = vshrl.u32 %v3877, 7
    %v3879 = vsub.s32 5, %v3878
    %v3880 = vrot.slane %v3855, %v3879
    %v3881 = vlaneseq
    %v3882 = vshrl.u32 %v3881, 7
    %v3883 = vsub.s32 6, %v3882
    %v3884 = vrot.slane %v3855, %v3883
    %v3885 = vlaneseq
    %v3886 = vshrl.u32 %v3885, 7
    %v3887 = vsub.s32 7, %v3886
    %v3888 = vrot.slane %v3855, %v3887
    %v3897 = vmul.f32 %v3603, %v3860
    %v3898 = vmul.f32 %v3605, %v3864
    %v3899 = vmul.f32 %v3685, %v3868
    %v3900 = vmul.f32 %v3687, %v3872
    %v3901 = vmul.f32 %v3767, %v3876
    %v3902 = vmul.f32 %v3769, %v3880
    %v3903 = vmul.f32 %v3849, %v3884
    %v3904 = vmul.f32 %v3851, %v3888
    %v3905 = vrot.slane %v3897, 4
    %v3906 = vadd.f32 %v3897, %v3905
    %v3907 = vrot.slane %v3906, 2
    %v3908 = vadd.f32 %v3906, %v3907
    %v3909 = vrot.slane %v3908, 1
    %v3910 = vadd.f32 %v3908, %v3909
    %v3911 = vrot.slane %v3898, 4
    %v3912 = vadd.f32 %v3898, %v3911
    %v3913 = vrot.slane %v3912, 2
    %v3914 = vadd.f32 %v3912, %v3913
    %v3915 = vrot.slane %v3914, 1
    %v3916 = vadd.f32 %v3914, %v3915
    %v3917 = vrot.slane %v3899, 4
    %v3918 = vadd.f32 %v3899, %v3917
    %v3919 = vrot.slane %v3918, 2
    %v3920 = vadd.f32 %v3918, %v3919
    %v3921 = vrot.slane %v3920, 1
    %v3922 = vadd.f32 %v3920, %v3921
    %v3923 = vrot.slane %v3900, 4
    %v3924 = vadd.f32 %v3900, %v3923
    %v3925 = vrot.slane %v3924, 2
    %v3926 = vadd.f32 %v3924, %v3925
    %v3927 = vrot.slane %v3926, 1
    %v3928 = vadd.f32 %v3926, %v3927
    %v3929 = vrot.slane %v3901, 4
    %v3930 = vadd.f32 %v3901, %v3929
    %v3931 = vrot.slane %v3930, 2
    %v3932 = vadd.f32 %v3930, %v3931
    %v3933 = vrot.slane %v3932, 1
    %v3934 = vadd.f32 %v3932, %v3933
    %v3935 = vrot.slane %v3902, 4
    %v3936 = vadd.f32 %v3902, %v3935
    %v3937 = vrot.slane %v3936, 2
    %v3938 = vadd.f32 %v3936, %v3937
    %v3939 = vrot.slane %v3938, 1
    %v3940 = vadd.f32 %v3938, %v3939
    %v3941 = vrot.slane %v3903, 4
    %v3942 = vadd.f32 %v3903, %v3941
    %v3943 = vrot.slane %v3942, 2
    %v3944 = vadd.f32 %v3942, %v3943
    %v3945 = vrot.slane %v3944, 1
    %v3946 = vadd.f32 %v3944, %v3945
    %v3947 = vrot.slane %v3904, 4
    %v3948 = vadd.f32 %v3904, %v3947
    %v3949 = vrot.slane %v3948, 2
    %v3950 = vadd.f32 %v3948, %v3949
    %v3951 = vrot.slane %v3950, 1
    %v3952 = vadd.f32 %v3950, %v3951
    %v3953 = vmul.f32 %v3910, %v1250
    %v3954 = vmul.f32 %v3916, %v1250
    %v3955 = vmul.f32 %v3922, %v1250
    %v3956 = vmul.f32 %v3928, %v1250
    %v3957 = vmul.f32 %v3934, %v1250
    %v3958 = vmul.f32 %v3940, %v1250
    %v3959 = vmul.f32 %v3946, %v1250
    %v3960 = vmul.f32 %v3952, %v1250
    %v3961 = vmul.f32 %v3897, %v3897
    %v3962 = vmul.f32 %v3898, %v3898
    %v3963 = vmul.f32 %v3899, %v3899
    %v3964 = vmul.f32 %v3900, %v3900
    %v3965 = vmul.f32 %v3901, %v3901
    %v3966 = vmul.f32 %v3902, %v3902
    %v3967 = vmul.f32 %v3903, %v3903
    %v3968 = vmul.f32 %v3904, %v3904
    %v3969 = vrot.slane %v3961, 4
    %v3970 = vadd.f32 %v3961, %v3969
    %v3971 = vrot.slane %v3970, 2
    %v3972 = vadd.f32 %v3970, %v3971
    %v3973 = vrot.slane %v3972, 1
    %v3974 = vadd.f32 %v3972, %v3973
    %v3975 = vrot.slane %v3962, 4
    %v3976 = vadd.f32 %v3962, %v3975
    %v3977 = vrot.slane %v3976, 2
    %v3978 = vadd.f32 %v3976, %v3977
    %v3979 = vrot.slane %v3978, 1
    %v3980 = vadd.f32 %v3978, %v3979
    %v3981 = vrot.slane %v3963, 4
    %v3982 = vadd.f32 %v3963, %v3981
    %v3983 = vrot.slane %v3982, 2
    %v3984 = vadd.f32 %v3982, %v3983
    %v3985 = vrot.slane %v3984, 1
    %v3986 = vadd.f32 %v3984, %v3985
    %v3987 = vrot.slane %v3964, 4
    %v3988 = vadd.f32 %v3964, %v3987
    %v3989 = vrot.slane %v3988, 2
    %v3990 = vadd.f32 %v3988, %v3989
    %v3991 = vrot.slane %v3990, 1
    %v3992 = vadd.f32 %v3990, %v3991
    %v3993 = vrot.slane %v3965, 4
    %v3994 = vadd.f32 %v3965, %v3993
    %v3995 = vrot.slane %v3994, 2
    %v3996 = vadd.f32 %v3994, %v3995
    %v3997 = vrot.slane %v3996, 1
    %v3998 = vadd.f32 %v3996, %v3997
    %v3999 = vrot.slane %v3966, 4
    %v4000 = vadd.f32 %v3966, %v3999
    %v4001 = vrot.slane %v4000, 2
    %v4002 = vadd.f32 %v4000, %v4001
    %v4003 = vrot.slane %v4002, 1
    %v4004 = vadd.f32 %v4002, %v4003
    %v4005 = vrot.slane %v3967, 4
    %v4006 = vadd.f32 %v3967, %v4005
    %v4007 = vrot.slane %v4006, 2
    %v4008 = vadd.f32 %v4006, %v4007
    %v4009 = vrot.slane %v4008, 1
    %v4010 = vadd.f32 %v4008, %v4009
    %v4011 = vrot.slane %v3968, 4
    %v4012 = vadd.f32 %v3968, %v4011
    %v4013 = vrot.slane %v4012, 2
    %v4014 = vadd.f32 %v4012, %v4013
    %v4015 = vrot.slane %v4014, 1
    %v4016 = vadd.f32 %v4014, %v4015
    %v4017 = vmul.f32 %v3974, %v1250
    %v4018 = vmul.f32 %v3980, %v1250
    %v4019 = vmul.f32 %v3986, %v1250
    %v4020 = vmul.f32 %v3992, %v1250
    %v4021 = vmul.f32 %v3998, %v1250
    %v4022 = vmul.f32 %v4004, %v1250
    %v4023 = vmul.f32 %v4010, %v1250
    %v4024 = vmul.f32 %v4016, %v1250
    %v4025 = vmul.f32 %v3953, %v3953
    %v4026 = vmul.f32 %v3954, %v3954
    %v4027 = vmul.f32 %v3955, %v3955
    %v4028 = vmul.f32 %v3956, %v3956
    %v4029 = vmul.f32 %v3957, %v3957
    %v4030 = vmul.f32 %v3958, %v3958
    %v4031 = vmul.f32 %v3959, %v3959
    %v4032 = vmul.f32 %v3960, %v3960
    %v4033 = vsub.f32 %v4017, %v4025
    %v4034 = vsub.f32 %v4018, %v4026
    %v4035 = vsub.f32 %v4019, %v4027
    %v4036 = vsub.f32 %v4020, %v4028
    %v4037 = vsub.f32 %v4021, %v4029
    %v4038 = vsub.f32 %v4022, %v4030
    %v4039 = vsub.f32 %v4023, %v4031
    %v4040 = vsub.f32 %v4024, %v4032
    %v4041 = vmax.f32 %v4033, 0.0
    %v4042 = vmax.f32 %v4034, 0.0
    %v4043 = vmax.f32 %v4035, 0.0
    %v4044 = vmax.f32 %v4036, 0.0
    %v4045 = vmax.f32 %v4037, 0.0
    %v4046 = vmax.f32 %v4038, 0.0
    %v4047 = vmax.f32 %v4039, 0.0
    %v4048 = vmax.f32 %v4040, 0.0
    %v4049 = vsub.f32 %v3897, %v3953
    %v4050 = vsub.f32 %v3898, %v3954
    %v4051 = vsub.f32 %v3899, %v3955
    %v4052 = vsub.f32 %v3900, %v3956
    %v4053 = vsub.f32 %v3901, %v3957
    %v4054 = vsub.f32 %v3902, %v3958
    %v4055 = vsub.f32 %v3903, %v3959
    %v4056 = vsub.f32 %v3904, %v3960
    %v4057 = vadd.f32 %v4041, 1e-05
    %v4058 = vadd.f32 %v4042, 1e-05
    %v4059 = vadd.f32 %v4043, 1e-05
    %v4060 = vadd.f32 %v4044, 1e-05
    %v4061 = vadd.f32 %v4045, 1e-05
    %v4062 = vadd.f32 %v4046, 1e-05
    %v4063 = vadd.f32 %v4047, 1e-05
    %v4064 = vadd.f32 %v4048, 1e-05
    %v4065 = vrsqrt.pop %v4057
    %v4066 = vrsqrt.pop %v4058
    %v4067 = vrsqrt.pop %v4059
    %v4068 = vrsqrt.pop %v4060
    %v4069 = vrsqrt.pop %v4061
    %v4070 = vrsqrt.pop %v4062
    %v4071 = vrsqrt.pop %v4063
    %v4072 = vrsqrt.pop %v4064
    %v4073 = vmul.f32 %v4049, %v4065
    %v4074 = vmul.f32 %v4050, %v4066
    %v4075 = vmul.f32 %v4051, %v4067
    %v4076 = vmul.f32 %v4052, %v4068
    %v4077 = vmul.f32 %v4053, %v4069
    %v4078 = vmul.f32 %v4054, %v4070
    %v4079 = vmul.f32 %v4055, %v4071
    %v4080 = vmul.f32 %v4056, %v4072
    %v4081 = vld [vmem:[#allocation17 + $0x42] sm:$0xff]
    %v4083 = vlaneseq
    %v4084 = vshrl.u32 %v4083, 7
    %v4085 = vsub.s32 0, %v4084
    %v4086 = vrot.slane %v4081, %v4085
    %v4087 = vlaneseq
    %v4088 = vshrl.u32 %v4087, 7
    %v4089 = vsub.s32 1, %v4088
    %v4090 = vrot.slane %v4081, %v4089
    %v4091 = vlaneseq
    %v4092 = vshrl.u32 %v4091, 7
    %v4093 = vsub.s32 2, %v4092
    %v4094 = vrot.slane %v4081, %v4093
    %v4095 = vlaneseq
    %v4096 = vshrl.u32 %v4095, 7
    %v4097 = vsub.s32 3, %v4096
    %v4098 = vrot.slane %v4081, %v4097
    %v4099 = vlaneseq
    %v4100 = vshrl.u32 %v4099, 7
    %v4101 = vsub.s32 4, %v4100
    %v4102 = vrot.slane %v4081, %v4101
    %v4103 = vlaneseq
    %v4104 = vshrl.u32 %v4103, 7
    %v4105 = vsub.s32 5, %v4104
    %v4106 = vrot.slane %v4081, %v4105
    %v4107 = vlaneseq
    %v4108 = vshrl.u32 %v4107, 7
    %v4109 = vsub.s32 6, %v4108
    %v4110 = vrot.slane %v4081, %v4109
    %v4111 = vlaneseq
    %v4112 = vshrl.u32 %v4111, 7
    %v4113 = vsub.s32 7, %v4112
    %v4114 = vrot.slane %v4081, %v4113
    %v4123 = vmul.f32 %v4073, %v4086
    %v4124 = vmul.f32 %v4074, %v4090
    %v4125 = vmul.f32 %v4075, %v4094
    %v4126 = vmul.f32 %v4076, %v4098
    %v4127 = vmul.f32 %v4077, %v4102
    %v4128 = vmul.f32 %v4078, %v4106
    %v4129 = vmul.f32 %v4079, %v4110
    %v4130 = vmul.f32 %v4080, %v4114
    %v4131 = vld [vmem:[#allocation17 + $0x4a] sm:$0xff]
    %v4133 = vlaneseq
    %v4134 = vshrl.u32 %v4133, 7
    %v4135 = vsub.s32 0, %v4134
    %v4136 = vrot.slane %v4131, %v4135
    %v4137 = vlaneseq
    %v4138 = vshrl.u32 %v4137, 7
    %v4139 = vsub.s32 1, %v4138
    %v4140 = vrot.slane %v4131, %v4139
    %v4141 = vlaneseq
    %v4142 = vshrl.u32 %v4141, 7
    %v4143 = vsub.s32 2, %v4142
    %v4144 = vrot.slane %v4131, %v4143
    %v4145 = vlaneseq
    %v4146 = vshrl.u32 %v4145, 7
    %v4147 = vsub.s32 3, %v4146
    %v4148 = vrot.slane %v4131, %v4147
    %v4149 = vlaneseq
    %v4150 = vshrl.u32 %v4149, 7
    %v4151 = vsub.s32 4, %v4150
    %v4152 = vrot.slane %v4131, %v4151
    %v4153 = vlaneseq
    %v4154 = vshrl.u32 %v4153, 7
    %v4155 = vsub.s32 5, %v4154
    %v4156 = vrot.slane %v4131, %v4155
    %v4157 = vlaneseq
    %v4158 = vshrl.u32 %v4157, 7
    %v4159 = vsub.s32 6, %v4158
    %v4160 = vrot.slane %v4131, %v4159
    %v4161 = vlaneseq
    %v4162 = vshrl.u32 %v4161, 7
    %v4163 = vsub.s32 7, %v4162
    %v4164 = vrot.slane %v4131, %v4163
    %v4173 = vadd.f32 %v4123, %v4136
    %v4174 = vadd.f32 %v4124, %v4140
    %v4175 = vadd.f32 %v4125, %v4144
    %v4176 = vadd.f32 %v4126, %v4148
    %v4177 = vadd.f32 %v4127, %v4152
    %v4178 = vadd.f32 %v4128, %v4156
    %v4179 = vadd.f32 %v4129, %v4160
    %v4180 = vadd.f32 %v4130, %v4164
    %vm4181 = vcmp.gt.f32.partialorder %v4173, 0.0
    %vm4182 = vcmp.gt.f32.partialorder %v4174, 0.0
    %vm4183 = vcmp.gt.f32.partialorder %v4175, 0.0
    %vm4184 = vcmp.gt.f32.partialorder %v4176, 0.0
    %vm4185 = vcmp.gt.f32.partialorder %v4177, 0.0
    %vm4186 = vcmp.gt.f32.partialorder %v4178, 0.0
    %vm4187 = vcmp.gt.f32.partialorder %v4179, 0.0
    %vm4188 = vcmp.gt.f32.partialorder %v4180, 0.0
    %v4189 = vmul.f32 %v4173, 0.01
    %v4190 = vmul.f32 %v4174, 0.01
    %v4191 = vmul.f32 %v4175, 0.01
    %v4192 = vmul.f32 %v4176, 0.01
    %v4193 = vmul.f32 %v4177, 0.01
    %v4194 = vmul.f32 %v4178, 0.01
    %v4195 = vmul.f32 %v4179, 0.01
    %v4196 = vmul.f32 %v4180, 0.01
    %v4197 = vsel %vm4181, %v4173, %v4189
    %v4198 = vsel %vm4182, %v4174, %v4190
    %v4199 = vsel %vm4183, %v4175, %v4191
    %v4200 = vsel %vm4184, %v4176, %v4192
    %v4201 = vsel %vm4185, %v4177, %v4193
    %v4202 = vsel %vm4186, %v4178, %v4194
    %v4203 = vsel %vm4187, %v4179, %v4195
    %v4204 = vsel %vm4188, %v4180, %v4196
    %v4205 = vpack.c.bf16 %v4197, %v4197
    %v4206 = vpack.c.bf16 %v4198, %v4198
    %v4207 = vpack.c.bf16 %v4199, %v4199
    %v4208 = vpack.c.bf16 %v4200, %v4200
    %v4209 = vpack.c.bf16 %v4201, %v4201
    %v4210 = vpack.c.bf16 %v4202, %v4202
    %v4211 = vpack.c.bf16 %v4203, %v4203
    %v4212 = vpack.c.bf16 %v4204, %v4204
    %v4213 = vld [vmem:[#allocation16] sm:$0xff]
    %v4214 = vld [vmem:[#allocation16 + $0x8] sm:$0xff]
    %v4215 = vld [vmem:[#allocation16 + $0x10] sm:$0xff]
    %v4216 = vld [vmem:[#allocation16 + $0x18] sm:$0xff]
    %v4217 = vld [vmem:[#allocation16 + $0x20] sm:$0xff]
    %v4218 = vld [vmem:[#allocation16 + $0x28] sm:$0xff]
    %v4219 = vld [vmem:[#allocation16 + $0x30] sm:$0xff]
    %v4220 = vld [vmem:[#allocation16 + $0x38] sm:$0xff]
    %v4221 = vld [vmem:[#allocation16 + $0x40] sm:$0xff]
    %v4222 = vld [vmem:[#allocation16 + $0x48] sm:$0xff]
    %v4223 = vld [vmem:[#allocation16 + $0x50] sm:$0xff]
    %v4224 = vld [vmem:[#allocation16 + $0x58] sm:$0xff]
    %v4225 = vld [vmem:[#allocation16 + $0x60] sm:$0xff]
    %v4226 = vld [vmem:[#allocation16 + $0x68] sm:$0xff]
    %v4227 = vld [vmem:[#allocation16 + $0x70] sm:$0xff]
    %v4228 = vld [vmem:[#allocation16 + $0x78] sm:$0xff]
    %v4229 = vld [vmem:[#allocation16 + $0x80] sm:$0xff]
    %v4230 = vld [vmem:[#allocation16 + $0x88] sm:$0xff]
    %v4231 = vld [vmem:[#allocation16 + $0x90] sm:$0xff]
    %v4232 = vld [vmem:[#allocation16 + $0x98] sm:$0xff]
    %v4233 = vld [vmem:[#allocation16 + $0xa0] sm:$0xff]
    %v4234 = vld [vmem:[#allocation16 + $0xa8] sm:$0xff]
    %v4235 = vld [vmem:[#allocation16 + $0xb0] sm:$0xff]
    %v4236 = vld [vmem:[#allocation16 + $0xb8] sm:$0xff]
    %v4237 = vld [vmem:[#allocation16 + $0xc0] sm:$0xff]
    %v4238 = vld [vmem:[#allocation16 + $0xc8] sm:$0xff]
    %v4239 = vld [vmem:[#allocation16 + $0xd0] sm:$0xff]
    %v4240 = vld [vmem:[#allocation16 + $0xd8] sm:$0xff]
    %v4241 = vld [vmem:[#allocation16 + $0xe0] sm:$0xff]
    %v4242 = vld [vmem:[#allocation16 + $0xe8] sm:$0xff]
    %v4243 = vld [vmem:[#allocation16 + $0xf0] sm:$0xff]
    %v4244 = vld [vmem:[#allocation16 + $0xf8] sm:$0xff]
    %v4245 = vld [vmem:[#allocation16 + $0x100] sm:$0xff]
    %v4246 = vld [vmem:[#allocation16 + $0x108] sm:$0xff]
    %v4247 = vld [vmem:[#allocation16 + $0x110] sm:$0xff]
    %v4248 = vld [vmem:[#allocation16 + $0x118] sm:$0xff]
    %v4249 = vld [vmem:[#allocation16 + $0x120] sm:$0xff]
    %v4250 = vld [vmem:[#allocation16 + $0x128] sm:$0xff]
    %v4251 = vld [vmem:[#allocation16 + $0x130] sm:$0xff]
    %v4252 = vld [vmem:[#allocation16 + $0x138] sm:$0xff]
    %v4253 = vld [vmem:[#allocation16 + $0x140] sm:$0xff]
    %v4254 = vld [vmem:[#allocation16 + $0x148] sm:$0xff]
    %v4255 = vld [vmem:[#allocation16 + $0x150] sm:$0xff]
    %v4256 = vld [vmem:[#allocation16 + $0x158] sm:$0xff]
    %v4257 = vld [vmem:[#allocation16 + $0x160] sm:$0xff]
    %v4258 = vld [vmem:[#allocation16 + $0x168] sm:$0xff]
    %v4259 = vld [vmem:[#allocation16 + $0x170] sm:$0xff]
    %v4260 = vld [vmem:[#allocation16 + $0x178] sm:$0xff]
    %v4261 = vld [vmem:[#allocation16 + $0x180] sm:$0xff]
    %v4262 = vld [vmem:[#allocation16 + $0x188] sm:$0xff]
    %v4263 = vld [vmem:[#allocation16 + $0x190] sm:$0xff]
    %v4264 = vld [vmem:[#allocation16 + $0x198] sm:$0xff]
    %v4265 = vld [vmem:[#allocation16 + $0x1a0] sm:$0xff]
    %v4266 = vld [vmem:[#allocation16 + $0x1a8] sm:$0xff]
    %v4267 = vld [vmem:[#allocation16 + $0x1b0] sm:$0xff]
    %v4268 = vld [vmem:[#allocation16 + $0x1b8] sm:$0xff]
    %v4269 = vld [vmem:[#allocation16 + $0x1c0] sm:$0xff]
    %v4270 = vld [vmem:[#allocation16 + $0x1c8] sm:$0xff]
    %v4271 = vld [vmem:[#allocation16 + $0x1d0] sm:$0xff]
    %v4272 = vld [vmem:[#allocation16 + $0x1d8] sm:$0xff]
    %v4273 = vld [vmem:[#allocation16 + $0x1e0] sm:$0xff]
    %v4274 = vld [vmem:[#allocation16 + $0x1e8] sm:$0xff]
    %v4275 = vld [vmem:[#allocation16 + $0x1f0] sm:$0xff]
    %v4276 = vld [vmem:[#allocation16 + $0x1f8] sm:$0xff]
    %v4277 = vld [vmem:[#allocation16 + $0x200] sm:$0xff]
    %v4278 = vld [vmem:[#allocation16 + $0x208] sm:$0xff]
    %v4279 = vld [vmem:[#allocation16 + $0x210] sm:$0xff]
    %v4280 = vld [vmem:[#allocation16 + $0x218] sm:$0xff]
    %v4281 = vld [vmem:[#allocation16 + $0x220] sm:$0xff]
    %v4282 = vld [vmem:[#allocation16 + $0x228] sm:$0xff]
    %v4283 = vld [vmem:[#allocation16 + $0x230] sm:$0xff]
    %v4284 = vld [vmem:[#allocation16 + $0x238] sm:$0xff]
    %v4285 = vld [vmem:[#allocation16 + $0x240] sm:$0xff]
    %v4286 = vld [vmem:[#allocation16 + $0x248] sm:$0xff]
    %v4287 = vld [vmem:[#allocation16 + $0x250] sm:$0xff]
    %v4288 = vld [vmem:[#allocation16 + $0x258] sm:$0xff]
    %v4289 = vld [vmem:[#allocation16 + $0x260] sm:$0xff]
    %v4290 = vld [vmem:[#allocation16 + $0x268] sm:$0xff]
    %v4291 = vld [vmem:[#allocation16 + $0x270] sm:$0xff]
    %v4292 = vld [vmem:[#allocation16 + $0x278] sm:$0xff]
    %v4293 = vld [vmem:[#allocation16 + $0x280] sm:$0xff]
    %v4294 = vld [vmem:[#allocation16 + $0x288] sm:$0xff]
    %v4295 = vld [vmem:[#allocation16 + $0x290] sm:$0xff]
    %v4296 = vld [vmem:[#allocation16 + $0x298] sm:$0xff]
    %v4297 = vld [vmem:[#allocation16 + $0x2a0] sm:$0xff]
    %v4298 = vld [vmem:[#allocation16 + $0x2a8] sm:$0xff]
    %v4299 = vld [vmem:[#allocation16 + $0x2b0] sm:$0xff]
    %v4300 = vld [vmem:[#allocation16 + $0x2b8] sm:$0xff]
    %v4301 = vld [vmem:[#allocation16 + $0x2c0] sm:$0xff]
    %v4302 = vld [vmem:[#allocation16 + $0x2c8] sm:$0xff]
    %v4303 = vld [vmem:[#allocation16 + $0x2d0] sm:$0xff]
    %v4304 = vld [vmem:[#allocation16 + $0x2d8] sm:$0xff]
    %v4305 = vld [vmem:[#allocation16 + $0x2e0] sm:$0xff]
    %v4306 = vld [vmem:[#allocation16 + $0x2e8] sm:$0xff]
    %v4307 = vld [vmem:[#allocation16 + $0x2f0] sm:$0xff]
    %v4308 = vld [vmem:[#allocation16 + $0x2f8] sm:$0xff]
    %v4309 = vld [vmem:[#allocation16 + $0x300] sm:$0xff]
    %v4310 = vld [vmem:[#allocation16 + $0x308] sm:$0xff]
    %v4311 = vld [vmem:[#allocation16 + $0x310] sm:$0xff]
    %v4312 = vld [vmem:[#allocation16 + $0x318] sm:$0xff]
    %v4313 = vld [vmem:[#allocation16 + $0x320] sm:$0xff]
    %v4314 = vld [vmem:[#allocation16 + $0x328] sm:$0xff]
    %v4315 = vld [vmem:[#allocation16 + $0x330] sm:$0xff]
    %v4316 = vld [vmem:[#allocation16 + $0x338] sm:$0xff]
    %v4317 = vld [vmem:[#allocation16 + $0x340] sm:$0xff]
    %v4318 = vld [vmem:[#allocation16 + $0x348] sm:$0xff]
    %v4319 = vld [vmem:[#allocation16 + $0x350] sm:$0xff]
    %v4320 = vld [vmem:[#allocation16 + $0x358] sm:$0xff]
    %v4321 = vld [vmem:[#allocation16 + $0x360] sm:$0xff]
    %v4322 = vld [vmem:[#allocation16 + $0x368] sm:$0xff]
    %v4323 = vld [vmem:[#allocation16 + $0x370] sm:$0xff]
    %v4324 = vld [vmem:[#allocation16 + $0x378] sm:$0xff]
    %v4325 = vld [vmem:[#allocation16 + $0x380] sm:$0xff]
    %v4326 = vld [vmem:[#allocation16 + $0x388] sm:$0xff]
    %v4327 = vld [vmem:[#allocation16 + $0x390] sm:$0xff]
    %v4328 = vld [vmem:[#allocation16 + $0x398] sm:$0xff]
    %v4329 = vld [vmem:[#allocation16 + $0x3a0] sm:$0xff]
    %v4330 = vld [vmem:[#allocation16 + $0x3a8] sm:$0xff]
    %v4331 = vld [vmem:[#allocation16 + $0x3b0] sm:$0xff]
    %v4332 = vld [vmem:[#allocation16 + $0x3b8] sm:$0xff]
    %v4333 = vld [vmem:[#allocation16 + $0x3c0] sm:$0xff]
    %v4334 = vld [vmem:[#allocation16 + $0x3c8] sm:$0xff]
    %v4335 = vld [vmem:[#allocation16 + $0x3d0] sm:$0xff]
    %v4336 = vld [vmem:[#allocation16 + $0x3d8] sm:$0xff]
    %v4337 = vld [vmem:[#allocation16 + $0x3e0] sm:$0xff]
    %v4338 = vld [vmem:[#allocation16 + $0x3e8] sm:$0xff]
    %v4339 = vld [vmem:[#allocation16 + $0x3f0] sm:$0xff]
    %v4340 = vld [vmem:[#allocation16 + $0x3f8] sm:$0xff]
    %v4341 = vld [vmem:[#allocation16 + $0x400] sm:$0xff]
    %v4342 = vld [vmem:[#allocation16 + $0x408] sm:$0xff]
    %v4343 = vld [vmem:[#allocation16 + $0x410] sm:$0xff]
    %v4344 = vld [vmem:[#allocation16 + $0x418] sm:$0xff]
    %v4345 = vld [vmem:[#allocation16 + $0x420] sm:$0xff]
    %v4346 = vld [vmem:[#allocation16 + $0x428] sm:$0xff]
    %v4347 = vld [vmem:[#allocation16 + $0x430] sm:$0xff]
    %v4348 = vld [vmem:[#allocation16 + $0x438] sm:$0xff]
    %v4349 = vld [vmem:[#allocation16 + $0x440] sm:$0xff]
    %v4350 = vld [vmem:[#allocation16 + $0x448] sm:$0xff]
    %v4351 = vld [vmem:[#allocation16 + $0x450] sm:$0xff]
    %v4352 = vld [vmem:[#allocation16 + $0x458] sm:$0xff]
    %v4353 = vld [vmem:[#allocation16 + $0x460] sm:$0xff]
    %v4354 = vld [vmem:[#allocation16 + $0x468] sm:$0xff]
    %v4355 = vld [vmem:[#allocation16 + $0x470] sm:$0xff]
    %v4356 = vld [vmem:[#allocation16 + $0x478] sm:$0xff]
    %v4357 = vld [vmem:[#allocation16 + $0x480] sm:$0xff]
    %v4358 = vld [vmem:[#allocation16 + $0x488] sm:$0xff]
    %v4359 = vld [vmem:[#allocation16 + $0x490] sm:$0xff]
    %v4360 = vld [vmem:[#allocation16 + $0x498] sm:$0xff]
    %v4361 = vld [vmem:[#allocation16 + $0x4a0] sm:$0xff]
    %v4362 = vld [vmem:[#allocation16 + $0x4a8] sm:$0xff]
    %v4363 = vld [vmem:[#allocation16 + $0x4b0] sm:$0xff]
    %v4364 = vld [vmem:[#allocation16 + $0x4b8] sm:$0xff]
    %v4365 = vld [vmem:[#allocation16 + $0x4c0] sm:$0xff]
    %v4366 = vld [vmem:[#allocation16 + $0x4c8] sm:$0xff]
    %v4367 = vld [vmem:[#allocation16 + $0x4d0] sm:$0xff]
    %v4368 = vld [vmem:[#allocation16 + $0x4d8] sm:$0xff]
    %v4369 = vld [vmem:[#allocation16 + $0x4e0] sm:$0xff]
    %v4370 = vld [vmem:[#allocation16 + $0x4e8] sm:$0xff]
    %v4371 = vld [vmem:[#allocation16 + $0x4f0] sm:$0xff]
    %v4372 = vld [vmem:[#allocation16 + $0x4f8] sm:$0xff]
    %v4373 = vunpack.c.l.s8.bf16 %v4213
    %v4374 = vunpack.c.l.s8.bf16 %v4214
    %v4375 = vunpack.c.l.s8.bf16 %v4215
    %v4376 = vunpack.c.l.s8.bf16 %v4216
    %v4377 = vunpack.c.l.s8.bf16 %v4217
    %v4378 = vunpack.c.h.s8.bf16 %v4213
    %v4379 = vunpack.c.h.s8.bf16 %v4214
    %v4380 = vunpack.c.h.s8.bf16 %v4215
    %v4381 = vunpack.c.h.s8.bf16 %v4216
    %v4382 = vunpack.c.h.s8.bf16 %v4217
    %v4383 = vunpack.c.l.s8.bf16 %v4218
    %v4384 = vunpack.c.l.s8.bf16 %v4219
    %v4385 = vunpack.c.l.s8.bf16 %v4220
    %v4386 = vunpack.c.l.s8.bf16 %v4221
    %v4387 = vunpack.c.l.s8.bf16 %v4222
    %v4388 = vunpack.c.h.s8.bf16 %v4218
    %v4389 = vunpack.c.h.s8.bf16 %v4219
    %v4390 = vunpack.c.h.s8.bf16 %v4220
    %v4391 = vunpack.c.h.s8.bf16 %v4221
    %v4392 = vunpack.c.h.s8.bf16 %v4222
    %v4393 = vunpack.c.l.s8.bf16 %v4223
    %v4394 = vunpack.c.l.s8.bf16 %v4224
    %v4395 = vunpack.c.l.s8.bf16 %v4225
    %v4396 = vunpack.c.l.s8.bf16 %v4226
    %v4397 = vunpack.c.l.s8.bf16 %v4227
    %v4398 = vunpack.c.h.s8.bf16 %v4223
    %v4399 = vunpack.c.h.s8.bf16 %v4224
    %v4400 = vunpack.c.h.s8.bf16 %v4225
    %v4401 = vunpack.c.h.s8.bf16 %v4226
    %v4402 = vunpack.c.h.s8.bf16 %v4227
    %v4403 = vunpack.c.l.s8.bf16 %v4228
    %v4404 = vunpack.c.l.s8.bf16 %v4229
    %v4405 = vunpack.c.l.s8.bf16 %v4230
    %v4406 = vunpack.c.l.s8.bf16 %v4231
    %v4407 = vunpack.c.l.s8.bf16 %v4232
    %v4408 = vunpack.c.h.s8.bf16 %v4228
    %v4409 = vunpack.c.h.s8.bf16 %v4229
    %v4410 = vunpack.c.h.s8.bf16 %v4230
    %v4411 = vunpack.c.h.s8.bf16 %v4231
    %v4412 = vunpack.c.h.s8.bf16 %v4232
    %v4413 = vunpack.c.l.s8.bf16 %v4233
    %v4414 = vunpack.c.l.s8.bf16 %v4234
    %v4415 = vunpack.c.l.s8.bf16 %v4235
    %v4416 = vunpack.c.l.s8.bf16 %v4236
    %v4417 = vunpack.c.l.s8.bf16 %v4237
    %v4418 = vunpack.c.h.s8.bf16 %v4233
    %v4419 = vunpack.c.h.s8.bf16 %v4234
    %v4420 = vunpack.c.h.s8.bf16 %v4235
    %v4421 = vunpack.c.h.s8.bf16 %v4236
    %v4422 = vunpack.c.h.s8.bf16 %v4237
    %v4423 = vunpack.c.l.s8.bf16 %v4238
    %v4424 = vunpack.c.l.s8.bf16 %v4239
    %v4425 = vunpack.c.l.s8.bf16 %v4240
    %v4426 = vunpack.c.l.s8.bf16 %v4241
    %v4427 = vunpack.c.l.s8.bf16 %v4242
    %v4428 = vunpack.c.h.s8.bf16 %v4238
    %v4429 = vunpack.c.h.s8.bf16 %v4239
    %v4430 = vunpack.c.h.s8.bf16 %v4240
    %v4431 = vunpack.c.h.s8.bf16 %v4241
    %v4432 = vunpack.c.h.s8.bf16 %v4242
    %v4433 = vunpack.c.l.s8.bf16 %v4243
    %v4434 = vunpack.c.l.s8.bf16 %v4244
    %v4435 = vunpack.c.l.s8.bf16 %v4245
    %v4436 = vunpack.c.l.s8.bf16 %v4246
    %v4437 = vunpack.c.l.s8.bf16 %v4247
    %v4438 = vunpack.c.h.s8.bf16 %v4243
    %v4439 = vunpack.c.h.s8.bf16 %v4244
    %v4440 = vunpack.c.h.s8.bf16 %v4245
    %v4441 = vunpack.c.h.s8.bf16 %v4246
    %v4442 = vunpack.c.h.s8.bf16 %v4247
    %v4443 = vunpack.c.l.s8.bf16 %v4248
    %v4444 = vunpack.c.l.s8.bf16 %v4249
    %v4445 = vunpack.c.l.s8.bf16 %v4250
    %v4446 = vunpack.c.l.s8.bf16 %v4251
    %v4447 = vunpack.c.l.s8.bf16 %v4252
    %v4448 = vunpack.c.h.s8.bf16 %v4248
    %v4449 = vunpack.c.h.s8.bf16 %v4249
    %v4450 = vunpack.c.h.s8.bf16 %v4250
    %v4451 = vunpack.c.h.s8.bf16 %v4251
    %v4452 = vunpack.c.h.s8.bf16 %v4252
    %v4453 = vunpack.c.l.s8.bf16 %v4253
    %v4454 = vunpack.c.l.s8.bf16 %v4254
    %v4455 = vunpack.c.l.s8.bf16 %v4255
    %v4456 = vunpack.c.l.s8.bf16 %v4256
    %v4457 = vunpack.c.l.s8.bf16 %v4257
    %v4458 = vunpack.c.h.s8.bf16 %v4253
    %v4459 = vunpack.c.h.s8.bf16 %v4254
    %v4460 = vunpack.c.h.s8.bf16 %v4255
    %v4461 = vunpack.c.h.s8.bf16 %v4256
    %v4462 = vunpack.c.h.s8.bf16 %v4257
    %v4463 = vunpack.c.l.s8.bf16 %v4258
    %v4464 = vunpack.c.l.s8.bf16 %v4259
    %v4465 = vunpack.c.l.s8.bf16 %v4260
    %v4466 = vunpack.c.l.s8.bf16 %v4261
    %v4467 = vunpack.c.l.s8.bf16 %v4262
    %v4468 = vunpack.c.h.s8.bf16 %v4258
    %v4469 = vunpack.c.h.s8.bf16 %v4259
    %v4470 = vunpack.c.h.s8.bf16 %v4260
    %v4471 = vunpack.c.h.s8.bf16 %v4261
    %v4472 = vunpack.c.h.s8.bf16 %v4262
    %v4473 = vunpack.c.l.s8.bf16 %v4263
    %v4474 = vunpack.c.l.s8.bf16 %v4264
    %v4475 = vunpack.c.l.s8.bf16 %v4265
    %v4476 = vunpack.c.l.s8.bf16 %v4266
    %v4477 = vunpack.c.l.s8.bf16 %v4267
    %v4478 = vunpack.c.h.s8.bf16 %v4263
    %v4479 = vunpack.c.h.s8.bf16 %v4264
    %v4480 = vunpack.c.h.s8.bf16 %v4265
    %v4481 = vunpack.c.h.s8.bf16 %v4266
    %v4482 = vunpack.c.h.s8.bf16 %v4267
    %v4483 = vunpack.c.l.s8.bf16 %v4268
    %v4484 = vunpack.c.l.s8.bf16 %v4269
    %v4485 = vunpack.c.l.s8.bf16 %v4270
    %v4486 = vunpack.c.l.s8.bf16 %v4271
    %v4487 = vunpack.c.l.s8.bf16 %v4272
    %v4488 = vunpack.c.h.s8.bf16 %v4268
    %v4489 = vunpack.c.h.s8.bf16 %v4269
    %v4490 = vunpack.c.h.s8.bf16 %v4270
    %v4491 = vunpack.c.h.s8.bf16 %v4271
    %v4492 = vunpack.c.h.s8.bf16 %v4272
    %v4493 = vunpack.c.l.s8.bf16 %v4273
    %v4494 = vunpack.c.l.s8.bf16 %v4274
    %v4495 = vunpack.c.l.s8.bf16 %v4275
    %v4496 = vunpack.c.l.s8.bf16 %v4276
    %v4497 = vunpack.c.l.s8.bf16 %v4277
    %v4498 = vunpack.c.h.s8.bf16 %v4273
    %v4499 = vunpack.c.h.s8.bf16 %v4274
    %v4500 = vunpack.c.h.s8.bf16 %v4275
    %v4501 = vunpack.c.h.s8.bf16 %v4276
    %v4502 = vunpack.c.h.s8.bf16 %v4277
    %v4503 = vunpack.c.l.s8.bf16 %v4278
    %v4504 = vunpack.c.l.s8.bf16 %v4279
    %v4505 = vunpack.c.l.s8.bf16 %v4280
    %v4506 = vunpack.c.l.s8.bf16 %v4281
    %v4507 = vunpack.c.l.s8.bf16 %v4282
    %v4508 = vunpack.c.h.s8.bf16 %v4278
    %v4509 = vunpack.c.h.s8.bf16 %v4279
    %v4510 = vunpack.c.h.s8.bf16 %v4280
    %v4511 = vunpack.c.h.s8.bf16 %v4281
    %v4512 = vunpack.c.h.s8.bf16 %v4282
    %v4513 = vunpack.c.l.s8.bf16 %v4283
    %v4514 = vunpack.c.l.s8.bf16 %v4284
    %v4515 = vunpack.c.l.s8.bf16 %v4285
    %v4516 = vunpack.c.l.s8.bf16 %v4286
    %v4517 = vunpack.c.l.s8.bf16 %v4287
    %v4518 = vunpack.c.h.s8.bf16 %v4283
    %v4519 = vunpack.c.h.s8.bf16 %v4284
    %v4520 = vunpack.c.h.s8.bf16 %v4285
    %v4521 = vunpack.c.h.s8.bf16 %v4286
    %v4522 = vunpack.c.h.s8.bf16 %v4287
    %v4523 = vunpack.c.l.s8.bf16 %v4288
    %v4524 = vunpack.c.l.s8.bf16 %v4289
    %v4525 = vunpack.c.l.s8.bf16 %v4290
    %v4526 = vunpack.c.l.s8.bf16 %v4291
    %v4527 = vunpack.c.l.s8.bf16 %v4292
    %v4528 = vunpack.c.h.s8.bf16 %v4288
    %v4529 = vunpack.c.h.s8.bf16 %v4289
    %v4530 = vunpack.c.h.s8.bf16 %v4290
    %v4531 = vunpack.c.h.s8.bf16 %v4291
    %v4532 = vunpack.c.h.s8.bf16 %v4292
    %v4533 = vunpack.c.l.s8.bf16 %v4293
    %v4534 = vunpack.c.l.s8.bf16 %v4294
    %v4535 = vunpack.c.l.s8.bf16 %v4295
    %v4536 = vunpack.c.l.s8.bf16 %v4296
    %v4537 = vunpack.c.l.s8.bf16 %v4297
    %v4538 = vunpack.c.h.s8.bf16 %v4293
    %v4539 = vunpack.c.h.s8.bf16 %v4294
    %v4540 = vunpack.c.h.s8.bf16 %v4295
    %v4541 = vunpack.c.h.s8.bf16 %v4296
    %v4542 = vunpack.c.h.s8.bf16 %v4297
    %v4543 = vunpack.c.l.s8.bf16 %v4298
    %v4544 = vunpack.c.l.s8.bf16 %v4299
    %v4545 = vunpack.c.l.s8.bf16 %v4300
    %v4546 = vunpack.c.l.s8.bf16 %v4301
    %v4547 = vunpack.c.l.s8.bf16 %v4302
    %v4548 = vunpack.c.h.s8.bf16 %v4298
    %v4549 = vunpack.c.h.s8.bf16 %v4299
    %v4550 = vunpack.c.h.s8.bf16 %v4300
    %v4551 = vunpack.c.h.s8.bf16 %v4301
    %v4552 = vunpack.c.h.s8.bf16 %v4302
    %v4553 = vunpack.c.l.s8.bf16 %v4303
    %v4554 = vunpack.c.l.s8.bf16 %v4304
    %v4555 = vunpack.c.l.s8.bf16 %v4305
    %v4556 = vunpack.c.l.s8.bf16 %v4306
    %v4557 = vunpack.c.l.s8.bf16 %v4307
    %v4558 = vunpack.c.h.s8.bf16 %v4303
    %v4559 = vunpack.c.h.s8.bf16 %v4304
    %v4560 = vunpack.c.h.s8.bf16 %v4305
    %v4561 = vunpack.c.h.s8.bf16 %v4306
    %v4562 = vunpack.c.h.s8.bf16 %v4307
    %v4563 = vunpack.c.l.s8.bf16 %v4308
    %v4564 = vunpack.c.l.s8.bf16 %v4309
    %v4565 = vunpack.c.l.s8.bf16 %v4310
    %v4566 = vunpack.c.l.s8.bf16 %v4311
    %v4567 = vunpack.c.l.s8.bf16 %v4312
    %v4568 = vunpack.c.h.s8.bf16 %v4308
    %v4569 = vunpack.c.h.s8.bf16 %v4309
    %v4570 = vunpack.c.h.s8.bf16 %v4310
    %v4571 = vunpack.c.h.s8.bf16 %v4311
    %v4572 = vunpack.c.h.s8.bf16 %v4312
    %v4573 = vunpack.c.l.s8.bf16 %v4313
    %v4574 = vunpack.c.l.s8.bf16 %v4314
    %v4575 = vunpack.c.l.s8.bf16 %v4315
    %v4576 = vunpack.c.l.s8.bf16 %v4316
    %v4577 = vunpack.c.l.s8.bf16 %v4317
    %v4578 = vunpack.c.h.s8.bf16 %v4313
    %v4579 = vunpack.c.h.s8.bf16 %v4314
    %v4580 = vunpack.c.h.s8.bf16 %v4315
    %v4581 = vunpack.c.h.s8.bf16 %v4316
    %v4582 = vunpack.c.h.s8.bf16 %v4317
    %v4583 = vunpack.c.l.s8.bf16 %v4318
    %v4584 = vunpack.c.l.s8.bf16 %v4319
    %v4585 = vunpack.c.l.s8.bf16 %v4320
    %v4586 = vunpack.c.l.s8.bf16 %v4321
    %v4587 = vunpack.c.l.s8.bf16 %v4322
    %v4588 = vunpack.c.h.s8.bf16 %v4318
    %v4589 = vunpack.c.h.s8.bf16 %v4319
    %v4590 = vunpack.c.h.s8.bf16 %v4320
    %v4591 = vunpack.c.h.s8.bf16 %v4321
    %v4592 = vunpack.c.h.s8.bf16 %v4322
    %v4593 = vunpack.c.l.s8.bf16 %v4323
    %v4594 = vunpack.c.l.s8.bf16 %v4324
    %v4595 = vunpack.c.l.s8.bf16 %v4325
    %v4596 = vunpack.c.l.s8.bf16 %v4326
    %v4597 = vunpack.c.l.s8.bf16 %v4327
    %v4598 = vunpack.c.h.s8.bf16 %v4323
    %v4599 = vunpack.c.h.s8.bf16 %v4324
    %v4600 = vunpack.c.h.s8.bf16 %v4325
    %v4601 = vunpack.c.h.s8.bf16 %v4326
    %v4602 = vunpack.c.h.s8.bf16 %v4327
    %v4603 = vunpack.c.l.s8.bf16 %v4328
    %v4604 = vunpack.c.l.s8.bf16 %v4329
    %v4605 = vunpack.c.l.s8.bf16 %v4330
    %v4606 = vunpack.c.l.s8.bf16 %v4331
    %v4607 = vunpack.c.l.s8.bf16 %v4332
    %v4608 = vunpack.c.h.s8.bf16 %v4328
    %v4609 = vunpack.c.h.s8.bf16 %v4329
    %v4610 = vunpack.c.h.s8.bf16 %v4330
    %v4611 = vunpack.c.h.s8.bf16 %v4331
    %v4612 = vunpack.c.h.s8.bf16 %v4332
    %v4613 = vunpack.c.l.s8.bf16 %v4333
    %v4614 = vunpack.c.l.s8.bf16 %v4334
    %v4615 = vunpack.c.l.s8.bf16 %v4335
    %v4616 = vunpack.c.l.s8.bf16 %v4336
    %v4617 = vunpack.c.l.s8.bf16 %v4337
    %v4618 = vunpack.c.h.s8.bf16 %v4333
    %v4619 = vunpack.c.h.s8.bf16 %v4334
    %v4620 = vunpack.c.h.s8.bf16 %v4335
    %v4621 = vunpack.c.h.s8.bf16 %v4336
    %v4622 = vunpack.c.h.s8.bf16 %v4337
    %v4623 = vunpack.c.l.s8.bf16 %v4338
    %v4624 = vunpack.c.l.s8.bf16 %v4339
    %v4625 = vunpack.c.l.s8.bf16 %v4340
    %v4626 = vunpack.c.l.s8.bf16 %v4341
    %v4627 = vunpack.c.l.s8.bf16 %v4342
    %v4628 = vunpack.c.h.s8.bf16 %v4338
    %v4629 = vunpack.c.h.s8.bf16 %v4339
    %v4630 = vunpack.c.h.s8.bf16 %v4340
    %v4631 = vunpack.c.h.s8.bf16 %v4341
    %v4632 = vunpack.c.h.s8.bf16 %v4342
    %v4633 = vunpack.c.l.s8.bf16 %v4343
    %v4634 = vunpack.c.l.s8.bf16 %v4344
    %v4635 = vunpack.c.l.s8.bf16 %v4345
    %v4636 = vunpack.c.l.s8.bf16 %v4346
    %v4637 = vunpack.c.l.s8.bf16 %v4347
    %v4638 = vunpack.c.h.s8.bf16 %v4343
    %v4639 = vunpack.c.h.s8.bf16 %v4344
    %v4640 = vunpack.c.h.s8.bf16 %v4345
    %v4641 = vunpack.c.h.s8.bf16 %v4346
    %v4642 = vunpack.c.h.s8.bf16 %v4347
    %v4643 = vunpack.c.l.s8.bf16 %v4348
    %v4644 = vunpack.c.l.s8.bf16 %v4349
    %v4645 = vunpack.c.l.s8.bf16 %v4350
    %v4646 = vunpack.c.l.s8.bf16 %v4351
    %v4647 = vunpack.c.l.s8.bf16 %v4352
    %v4648 = vunpack.c.h.s8.bf16 %v4348
    %v4649 = vunpack.c.h.s8.bf16 %v4349
    %v4650 = vunpack.c.h.s8.bf16 %v4350
    %v4651 = vunpack.c.h.s8.bf16 %v4351
    %v4652 = vunpack.c.h.s8.bf16 %v4352
    %v4653 = vunpack.c.l.s8.bf16 %v4353
    %v4654 = vunpack.c.l.s8.bf16 %v4354
    %v4655 = vunpack.c.l.s8.bf16 %v4355
    %v4656 = vunpack.c.l.s8.bf16 %v4356
    %v4657 = vunpack.c.l.s8.bf16 %v4357
    %v4658 = vunpack.c.h.s8.bf16 %v4353
    %v4659 = vunpack.c.h.s8.bf16 %v4354
    %v4660 = vunpack.c.h.s8.bf16 %v4355
    %v4661 = vunpack.c.h.s8.bf16 %v4356
    %v4662 = vunpack.c.h.s8.bf16 %v4357
    %v4663 = vunpack.c.l.s8.bf16 %v4358
    %v4664 = vunpack.c.l.s8.bf16 %v4359
    %v4665 = vunpack.c.l.s8.bf16 %v4360
    %v4666 = vunpack.c.l.s8.bf16 %v4361
    %v4667 = vunpack.c.l.s8.bf16 %v4362
    %v4668 = vunpack.c.h.s8.bf16 %v4358
    %v4669 = vunpack.c.h.s8.bf16 %v4359
    %v4670 = vunpack.c.h.s8.bf16 %v4360
    %v4671 = vunpack.c.h.s8.bf16 %v4361
    %v4672 = vunpack.c.h.s8.bf16 %v4362
    %v4673 = vunpack.c.l.s8.bf16 %v4363
    %v4674 = vunpack.c.l.s8.bf16 %v4364
    %v4675 = vunpack.c.l.s8.bf16 %v4365
    %v4676 = vunpack.c.l.s8.bf16 %v4366
    %v4677 = vunpack.c.l.s8.bf16 %v4367
    %v4678 = vunpack.c.h.s8.bf16 %v4363
    %v4679 = vunpack.c.h.s8.bf16 %v4364
    %v4680 = vunpack.c.h.s8.bf16 %v4365
    %v4681 = vunpack.c.h.s8.bf16 %v4366
    %v4682 = vunpack.c.h.s8.bf16 %v4367
    %v4683 = vunpack.c.l.s8.bf16 %v4368
    %v4684 = vunpack.c.l.s8.bf16 %v4369
    %v4685 = vunpack.c.l.s8.bf16 %v4370
    %v4686 = vunpack.c.l.s8.bf16 %v4371
    %v4687 = vunpack.c.l.s8.bf16 %v4372
    %v4688 = vunpack.c.h.s8.bf16 %v4368
    %v4689 = vunpack.c.h.s8.bf16 %v4369
    %v4690 = vunpack.c.h.s8.bf16 %v4370
    %v4691 = vunpack.c.h.s8.bf16 %v4371
    %v4692 = vunpack.c.h.s8.bf16 %v4372
    %4693 = vmatprep.subr.bf16.mxu0 %v4374
    %4694 = vmatpush1.bf16.msra.mxu0 %v4373
    %4695 = vmatprep.subr.bf16.mxu0 %v4379
    %4696 = vmatpush1.bf16.msra.mxu0 %v4378
    %4697 = vmatprep.subr.bf16.mxu0 %v4384
    %4698 = vmatpush1.bf16.msra.mxu0 %v4383
    %4699 = vmatprep.subr.bf16.mxu0 %v4389
    %4700 = vmatpush1.bf16.msra.mxu0 %v4388
    %4701 = vmatprep.subr.bf16.mxu0 %v4394
    %4702 = vmatpush1.bf16.msra.mxu0 %v4393
    %4703 = vmatprep.subr.bf16.mxu0 %v4399
    %4704 = vmatpush1.bf16.msra.mxu0 %v4398
    %4705 = vmatprep.subr.bf16.mxu0 %v4404
    %4706 = vmatpush1.bf16.msra.mxu0 %v4403
    %4707 = vmatprep.subr.bf16.mxu0 %v4409
    %4708 = vmatpush1.bf16.msra.mxu0 %v4408
    %4709 = vmatprep.subr.bf16.mxu0 %v4414
    %4710 = vmatpush1.bf16.msra.mxu0 %v4413
    %4711 = vmatprep.subr.bf16.mxu0 %v4419
    %4712 = vmatpush1.bf16.msra.mxu0 %v4418
    %4713 = vmatprep.subr.bf16.mxu0 %v4424
    %4714 = vmatpush1.bf16.msra.mxu0 %v4423
    %4715 = vmatprep.subr.bf16.mxu0 %v4429
    %4716 = vmatpush1.bf16.msra.mxu0 %v4428
    %4717 = vmatprep.subr.bf16.mxu0 %v4434
    %4718 = vmatpush1.bf16.msra.mxu0 %v4433
    %4719 = vmatprep.subr.bf16.mxu0 %v4439
    %4720 = vmatpush1.bf16.msra.mxu0 %v4438
    %4721 = vmatprep.subr.bf16.mxu0 %v4444
    %4722 = vmatpush1.bf16.msra.mxu0 %v4443
    %4723 = vmatprep.subr.bf16.mxu0 %v4449
    %4724 = vmatpush1.bf16.msra.mxu0 %v4448
    %4725 = vmatprep.mubr.bf16.mxu0 %v4206
    %4726 = vmatmul.mubr.bf16.gmra.mrb[0].mxu0 %v4205
    %v4727 = vpop.f32.mrb[0].mxu0
    %v4728 = vadd.f32 0.0, %v4727
    %v4729 = vpop.f32.mrb[0].mxu0
    %v4730 = vadd.f32 0.0, %v4729
    %v4731 = vpop.f32.mrb[0].mxu0
    %v4732 = vpop.f32.mrb[0].mxu0
    %4733 = vdwg.mxu0
    %4734 = vmatprep.subr.bf16.mxu0 %v4454
    %4735 = vmatpush1.bf16.msra.mxu0 %v4453
    %4736 = vmatprep.subr.bf16.mxu0 %v4459
    %4737 = vmatpush1.bf16.msra.mxu0 %v4458
    %4738 = vmatprep.subr.bf16.mxu0 %v4464
    %4739 = vmatpush1.bf16.msra.mxu0 %v4463
    %4740 = vmatprep.subr.bf16.mxu0 %v4469
    %4741 = vmatpush1.bf16.msra.mxu0 %v4468
    %4742 = vmatprep.subr.bf16.mxu0 %v4474
    %4743 = vmatpush1.bf16.msra.mxu0 %v4473
    %4744 = vmatprep.subr.bf16.mxu0 %v4479
    %4745 = vmatpush1.bf16.msra.mxu0 %v4478
    %4746 = vmatprep.subr.bf16.mxu0 %v4484
    %4747 = vmatpush1.bf16.msra.mxu0 %v4483
    %4748 = vmatprep.subr.bf16.mxu0 %v4489
    %4749 = vmatpush1.bf16.msra.mxu0 %v4488
    %4750 = vmatprep.subr.bf16.mxu0 %v4494
    %4751 = vmatpush1.bf16.msra.mxu0 %v4493
    %4752 = vmatprep.subr.bf16.mxu0 %v4499
    %4753 = vmatpush1.bf16.msra.mxu0 %v4498
    %4754 = vmatprep.subr.bf16.mxu0 %v4504
    %4755 = vmatpush1.bf16.msra.mxu0 %v4503
    %4756 = vmatprep.subr.bf16.mxu0 %v4509
    %4757 = vmatpush1.bf16.msra.mxu0 %v4508
    %4758 = vmatprep.subr.bf16.mxu0 %v4514
    %4759 = vmatpush1.bf16.msra.mxu0 %v4513
    %4760 = vmatprep.subr.bf16.mxu0 %v4519
    %4761 = vmatpush1.bf16.msra.mxu0 %v4518
    %4762 = vmatprep.subr.bf16.mxu0 %v4524
    %4763 = vmatpush1.bf16.msra.mxu0 %v4523
    %4764 = vmatprep.subr.bf16.mxu0 %v4529
    %4765 = vmatpush1.bf16.msra.mxu0 %v4528
    %4766 = vmatprep.mubr.bf16.mxu0 %v4208
    %4767 = vmatmul.mubr.bf16.gmra.mrb[0].mxu0 %v4207
    %v4768 = vpop.f32.mrb[0].mxu0
    %v4769 = vadd.f32 %v4728, %v4768
    %v4770 = vpop.f32.mrb[0].mxu0
    %v4771 = vadd.f32 %v4730, %v4770
    %v4772 = vpop.f32.mrb[0].mxu0
    %v4773 = vpop.f32.mrb[0].mxu0
    %4774 = vdwg.mxu0
    %4775 = vmatprep.subr.bf16.mxu0 %v4534
    %4776 = vmatpush1.bf16.msra.mxu0 %v4533
    %4777 = vmatprep.subr.bf16.mxu0 %v4539
    %4778 = vmatpush1.bf16.msra.mxu0 %v4538
    %4779 = vmatprep.subr.bf16.mxu0 %v4544
    %4780 = vmatpush1.bf16.msra.mxu0 %v4543
    %4781 = vmatprep.subr.bf16.mxu0 %v4549
    %4782 = vmatpush1.bf16.msra.mxu0 %v4548
    %4783 = vmatprep.subr.bf16.mxu0 %v4554
    %4784 = vmatpush1.bf16.msra.mxu0 %v4553
    %4785 = vmatprep.subr.bf16.mxu0 %v4559
    %4786 = vmatpush1.bf16.msra.mxu0 %v4558
    %4787 = vmatprep.subr.bf16.mxu0 %v4564
    %4788 = vmatpush1.bf16.msra.mxu0 %v4563
    %4789 = vmatprep.subr.bf16.mxu0 %v4569
    %4790 = vmatpush1.bf16.msra.mxu0 %v4568
    %4791 = vmatprep.subr.bf16.mxu0 %v4574
    %4792 = vmatpush1.bf16.msra.mxu0 %v4573
    %4793 = vmatprep.subr.bf16.mxu0 %v4579
    %4794 = vmatpush1.bf16.msra.mxu0 %v4578
    %4795 = vmatprep.subr.bf16.mxu0 %v4584
    %4796 = vmatpush1.bf16.msra.mxu0 %v4583
    %4797 = vmatprep.subr.bf16.mxu0 %v4589
    %4798 = vmatpush1.bf16.msra.mxu0 %v4588
    %4799 = vmatprep.subr.bf16.mxu0 %v4594
    %4800 = vmatpush1.bf16.msra.mxu0 %v4593
    %4801 = vmatprep.subr.bf16.mxu0 %v4599
    %4802 = vmatpush1.bf16.msra.mxu0 %v4598
    %4803 = vmatprep.subr.bf16.mxu0 %v4604
    %4804 = vmatpush1.bf16.msra.mxu0 %v4603
    %4805 = vmatprep.subr.bf16.mxu0 %v4609
    %4806 = vmatpush1.bf16.msra.mxu0 %v4608
    %4807 = vmatprep.mubr.bf16.mxu0 %v4210
    %4808 = vmatmul.mubr.bf16.gmra.mrb[0].mxu0 %v4209
    %v4809 = vpop.f32.mrb[0].mxu0
    %v4810 = vadd.f32 %v4769, %v4809
    %v4811 = vpop.f32.mrb[0].mxu0
    %v4812 = vadd.f32 %v4771, %v4811
    %v4813 = vpop.f32.mrb[0].mxu0
    %v4814 = vpop.f32.mrb[0].mxu0
    %4815 = vdwg.mxu0
    %4816 = vmatprep.subr.bf16.mxu0 %v4614
    %4817 = vmatpush1.bf16.msra.mxu0 %v4613
    %4818 = vmatprep.subr.bf16.mxu0 %v4619
    %4819 = vmatpush1.bf16.msra.mxu0 %v4618
    %4820 = vmatprep.subr.bf16.mxu0 %v4624
    %4821 = vmatpush1.bf16.msra.mxu0 %v4623
    %4822 = vmatprep.subr.bf16.mxu0 %v4629
    %4823 = vmatpush1.bf16.msra.mxu0 %v4628
    %4824 = vmatprep.subr.bf16.mxu0 %v4634
    %4825 = vmatpush1.bf16.msra.mxu0 %v4633
    %4826 = vmatprep.subr.bf16.mxu0 %v4639
    %4827 = vmatpush1.bf16.msra.mxu0 %v4638
    %4828 = vmatprep.subr.bf16.mxu0 %v4644
    %4829 = vmatpush1.bf16.msra.mxu0 %v4643
    %4830 = vmatprep.subr.bf16.mxu0 %v4649
    %4831 = vmatpush1.bf16.msra.mxu0 %v4648
    %4832 = vmatprep.subr.bf16.mxu0 %v4654
    %4833 = vmatpush1.bf16.msra.mxu0 %v4653
    %4834 = vmatprep.subr.bf16.mxu0 %v4659
    %4835 = vmatpush1.bf16.msra.mxu0 %v4658
    %4836 = vmatprep.subr.bf16.mxu0 %v4664
    %4837 = vmatpush1.bf16.msra.mxu0 %v4663
    %4838 = vmatprep.subr.bf16.mxu0 %v4669
    %4839 = vmatpush1.bf16.msra.mxu0 %v4668
    %4840 = vmatprep.subr.bf16.mxu0 %v4674
    %4841 = vmatpush1.bf16.msra.mxu0 %v4673
    %4842 = vmatprep.subr.bf16.mxu0 %v4679
    %4843 = vmatpush1.bf16.msra.mxu0 %v4678
    %4844 = vmatprep.subr.bf16.mxu0 %v4684
    %4845 = vmatpush1.bf16.msra.mxu0 %v4683
    %4846 = vmatprep.subr.bf16.mxu0 %v4689
    %4847 = vmatpush1.bf16.msra.mxu0 %v4688
    %4848 = vmatprep.mubr.bf16.mxu0 %v4212
    %4849 = vmatmul.mubr.bf16.gmra.mrb[0].mxu0 %v4211
    %v4850 = vpop.f32.mrb[0].mxu0
    %v4851 = vadd.f32 %v4810, %v4850
    %v4852 = vpop.f32.mrb[0].mxu0
    %v4853 = vadd.f32 %v4812, %v4852
    %v4854 = vpop.f32.mrb[0].mxu0
    %v4855 = vpop.f32.mrb[0].mxu0
    %4856 = vdwg.mxu0
    %4857 = vmatprep.subr.bf16.mxu0 %v4376
    %4858 = vmatpush1.bf16.msra.mxu0 %v4375
    %4859 = vmatprep.subr.bf16.mxu0 %v4381
    %4860 = vmatpush1.bf16.msra.mxu0 %v4380
    %4861 = vmatprep.subr.bf16.mxu0 %v4386
    %4862 = vmatpush1.bf16.msra.mxu0 %v4385
    %4863 = vmatprep.subr.bf16.mxu0 %v4391
    %4864 = vmatpush1.bf16.msra.mxu0 %v4390
    %4865 = vmatprep.subr.bf16.mxu0 %v4396
    %4866 = vmatpush1.bf16.msra.mxu0 %v4395
    %4867 = vmatprep.subr.bf16.mxu0 %v4401
    %4868 = vmatpush1.bf16.msra.mxu0 %v4400
    %4869 = vmatprep.subr.bf16.mxu0 %v4406
    %4870 = vmatpush1.bf16.msra.mxu0 %v4405
    %4871 = vmatprep.subr.bf16.mxu0 %v4411
    %4872 = vmatpush1.bf16.msra.mxu0 %v4410
    %4873 = vmatprep.subr.bf16.mxu0 %v4416
    %4874 = vmatpush1.bf16.msra.mxu0 %v4415
    %4875 = vmatprep.subr.bf16.mxu0 %v4421
    %4876 = vmatpush1.bf16.msra.mxu0 %v4420
    %4877 = vmatprep.subr.bf16.mxu0 %v4426
    %4878 = vmatpush1.bf16.msra.mxu0 %v4425
    %4879 = vmatprep.subr.bf16.mxu0 %v4431
    %4880 = vmatpush1.bf16.msra.mxu0 %v4430
    %4881 = vmatprep.subr.bf16.mxu0 %v4436
    %4882 = vmatpush1.bf16.msra.mxu0 %v4435
    %4883 = vmatprep.subr.bf16.mxu0 %v4441
    %4884 = vmatpush1.bf16.msra.mxu0 %v4440
    %4885 = vmatprep.subr.bf16.mxu0 %v4446
    %4886 = vmatpush1.bf16.msra.mxu0 %v4445
    %4887 = vmatprep.subr.bf16.mxu0 %v4451
    %4888 = vmatpush1.bf16.msra.mxu0 %v4450
    %4889 = vmatprep.mubr.bf16.mxu0 %v4206
    %4890 = vmatmul.mubr.bf16.gmra.mrb[0].mxu0 %v4205
    %v4891 = vpop.f32.mrb[0].mxu0
    %v4892 = vadd.f32 0.0, %v4891
    %v4893 = vpop.f32.mrb[0].mxu0
    %v4894 = vadd.f32 0.0, %v4893
    %v4895 = vpop.f32.mrb[0].mxu0
    %v4896 = vpop.f32.mrb[0].mxu0
    %4897 = vdwg.mxu0
    %4898 = vmatprep.subr.bf16.mxu0 %v4456
    %4899 = vmatpush1.bf16.msra.mxu0 %v4455
    %4900 = vmatprep.subr.bf16.mxu0 %v4461
    %4901 = vmatpush1.bf16.msra.mxu0 %v4460
    %4902 = vmatprep.subr.bf16.mxu0 %v4466
    %4903 = vmatpush1.bf16.msra.mxu0 %v4465
    %4904 = vmatprep.subr.bf16.mxu0 %v4471
    %4905 = vmatpush1.bf16.msra.mxu0 %v4470
    %4906 = vmatprep.subr.bf16.mxu0 %v4476
    %4907 = vmatpush1.bf16.msra.mxu0 %v4475
    %4908 = vmatprep.subr.bf16.mxu0 %v4481
    %4909 = vmatpush1.bf16.msra.mxu0 %v4480
    %4910 = vmatprep.subr.bf16.mxu0 %v4486
    %4911 = vmatpush1.bf16.msra.mxu0 %v4485
    %4912 = vmatprep.subr.bf16.mxu0 %v4491
    %4913 = vmatpush1.bf16.msra.mxu0 %v4490
    %4914 = vmatprep.subr.bf16.mxu0 %v4496
    %4915 = vmatpush1.bf16.msra.mxu0 %v4495
    %4916 = vmatprep.subr.bf16.mxu0 %v4501
    %4917 = vmatpush1.bf16.msra.mxu0 %v4500
    %4918 = vmatprep.subr.bf16.mxu0 %v4506
    %4919 = vmatpush1.bf16.msra.mxu0 %v4505
    %4920 = vmatprep.subr.bf16.mxu0 %v4511
    %4921 = vmatpush1.bf16.msra.mxu0 %v4510
    %4922 = vmatprep.subr.bf16.mxu0 %v4516
    %4923 = vmatpush1.bf16.msra.mxu0 %v4515
    %4924 = vmatprep.subr.bf16.mxu0 %v4521
    %4925 = vmatpush1.bf16.msra.mxu0 %v4520
    %4926 = vmatprep.subr.bf16.mxu0 %v4526
    %4927 = vmatpush1.bf16.msra.mxu0 %v4525
    %4928 = vmatprep.subr.bf16.mxu0 %v4531
    %4929 = vmatpush1.bf16.msra.mxu0 %v4530
    %4930 = vmatprep.mubr.bf16.mxu0 %v4208
    %4931 = vmatmul.mubr.bf16.gmra.mrb[0].mxu0 %v4207
    %v4932 = vpop.f32.mrb[0].mxu0
    %v4933 = vadd.f32 %v4892, %v4932
    %v4934 = vpop.f32.mrb[0].mxu0
    %v4935 = vadd.f32 %v4894, %v4934
    %v4936 = vpop.f32.mrb[0].mxu0
    %v4937 = vpop.f32.mrb[0].mxu0
    %4938 = vdwg.mxu0
    %4939 = vmatprep.subr.bf16.mxu0 %v4536
    %4940 = vmatpush1.bf16.msra.mxu0 %v4535
    %4941 = vmatprep.subr.bf16.mxu0 %v4541
    %4942 = vmatpush1.bf16.msra.mxu0 %v4540
    %4943 = vmatprep.subr.bf16.mxu0 %v4546
    %4944 = vmatpush1.bf16.msra.mxu0 %v4545
    %4945 = vmatprep.subr.bf16.mxu0 %v4551
    %4946 = vmatpush1.bf16.msra.mxu0 %v4550
    %4947 = vmatprep.subr.bf16.mxu0 %v4556
    %4948 = vmatpush1.bf16.msra.mxu0 %v4555
    %4949 = vmatprep.subr.bf16.mxu0 %v4561
    %4950 = vmatpush1.bf16.msra.mxu0 %v4560
    %4951 = vmatprep.subr.bf16.mxu0 %v4566
    %4952 = vmatpush1.bf16.msra.mxu0 %v4565
    %4953 = vmatprep.subr.bf16.mxu0 %v4571
    %4954 = vmatpush1.bf16.msra.mxu0 %v4570
    %4955 = vmatprep.subr.bf16.mxu0 %v4576
    %4956 = vmatpush1.bf16.msra.mxu0 %v4575
    %4957 = vmatprep.subr.bf16.mxu0 %v4581
    %4958 = vmatpush1.bf16.msra.mxu0 %v4580
    %4959 = vmatprep.subr.bf16.mxu0 %v4586
    %4960 = vmatpush1.bf16.msra.mxu0 %v4585
    %4961 = vmatprep.subr.bf16.mxu0 %v4591
    %4962 = vmatpush1.bf16.msra.mxu0 %v4590
    %4963 = vmatprep.subr.bf16.mxu0 %v4596
    %4964 = vmatpush1.bf16.msra.mxu0 %v4595
    %4965 = vmatprep.subr.bf16.mxu0 %v4601
    %4966 = vmatpush1.bf16.msra.mxu0 %v4600
    %4967 = vmatprep.subr.bf16.mxu0 %v4606
    %4968 = vmatpush1.bf16.msra.mxu0 %v4605
    %4969 = vmatprep.subr.bf16.mxu0 %v4611
    %4970 = vmatpush1.bf16.msra.mxu0 %v4610
    %4971 = vmatprep.mubr.bf16.mxu0 %v4210
    %4972 = vmatmul.mubr.bf16.gmra.mrb[0].mxu0 %v4209
    %v4973 = vpop.f32.mrb[0].mxu0
    %v4974 = vadd.f32 %v4933, %v4973
    %v4975 = vpop.f32.mrb[0].mxu0
    %v4976 = vadd.f32 %v4935, %v4975
    %v4977 = vpop.f32.mrb[0].mxu0
    %v4978 = vpop.f32.mrb[0].mxu0
    %4979 = vdwg.mxu0
    %4980 = vmatprep.subr.bf16.mxu0 %v4616
    %4981 = vmatpush1.bf16.msra.mxu0 %v4615
    %4982 = vmatprep.subr.bf16.mxu0 %v4621
    %4983 = vmatpush1.bf16.msra.mxu0 %v4620
    %4984 = vmatprep.subr.bf16.mxu0 %v4626
    %4985 = vmatpush1.bf16.msra.mxu0 %v4625
    %4986 = vmatprep.subr.bf16.mxu0 %v4631
    %4987 = vmatpush1.bf16.msra.mxu0 %v4630
    %4988 = vmatprep.subr.bf16.mxu0 %v4636
    %4989 = vmatpush1.bf16.msra.mxu0 %v4635
    %4990 = vmatprep.subr.bf16.mxu0 %v4641
    %4991 = vmatpush1.bf16.msra.mxu0 %v4640
    %4992 = vmatprep.subr.bf16.mxu0 %v4646
    %4993 = vmatpush1.bf16.msra.mxu0 %v4645
    %4994 = vmatprep.subr.bf16.mxu0 %v4651
    %4995 = vmatpush1.bf16.msra.mxu0 %v4650
    %4996 = vmatprep.subr.bf16.mxu0 %v4656
    %4997 = vmatpush1.bf16.msra.mxu0 %v4655
    %4998 = vmatprep.subr.bf16.mxu0 %v4661
    %4999 = vmatpush1.bf16.msra.mxu0 %v4660
    %5000 = vmatprep.subr.bf16.mxu0 %v4666
    %5001 = vmatpush1.bf16.msra.mxu0 %v4665
    %5002 = vmatprep.subr.bf16.mxu0 %v4671
    %5003 = vmatpush1.bf16.msra.mxu0 %v4670
    %5004 = vmatprep.subr.bf16.mxu0 %v4676
    %5005 = vmatpush1.bf16.msra.mxu0 %v4675
    %5006 = vmatprep.subr.bf16.mxu0 %v4681
    %5007 = vmatpush1.bf16.msra.mxu0 %v4680
    %5008 = vmatprep.subr.bf16.mxu0 %v4686
    %5009 = vmatpush1.bf16.msra.mxu0 %v4685
    %5010 = vmatprep.subr.bf16.mxu0 %v4691
    %5011 = vmatpush1.bf16.msra.mxu0 %v4690
    %5012 = vmatprep.mubr.bf16.mxu0 %v4212
    %5013 = vmatmul.mubr.bf16.gmra.mrb[0].mxu0 %v4211
    %v5014 = vpop.f32.mrb[0].mxu0
    %v5015 = vadd.f32 %v4974, %v5014
    %v5016 = vpop.f32.mrb[0].mxu0
    %v5017 = vadd.f32 %v4976, %v5016
    %v5018 = vpop.f32.mrb[0].mxu0
    %v5019 = vpop.f32.mrb[0].mxu0
    %5020 = vdwg.mxu0
    %5021 = vmatprep.subr.bf16.mxu0 0
    %5022 = vmatpush1.bf16.msra.mxu0 %v4377
    %5023 = vmatprep.subr.bf16.mxu0 0
    %5024 = vmatpush1.bf16.msra.mxu0 %v4382
    %5025 = vmatprep.subr.bf16.mxu0 0
    %5026 = vmatpush1.bf16.msra.mxu0 %v4387
    %5027 = vmatprep.subr.bf16.mxu0 0
    %5028 = vmatpush1.bf16.msra.mxu0 %v4392
    %5029 = vmatprep.subr.bf16.mxu0 0
    %5030 = vmatpush1.bf16.msra.mxu0 %v4397
    %5031 = vmatprep.subr.bf16.mxu0 0
    %5032 = vmatpush1.bf16.msra.mxu0 %v4402
    %5033 = vmatprep.subr.bf16.mxu0 0
    %5034 = vmatpush1.bf16.msra.mxu0 %v4407
    %5035 = vmatprep.subr.bf16.mxu0 0
    %5036 = vmatpush1.bf16.msra.mxu0 %v4412
    %5037 = vmatprep.subr.bf16.mxu0 0
    %5038 = vmatpush1.bf16.msra.mxu0 %v4417
    %5039 = vmatprep.subr.bf16.mxu0 0
    %5040 = vmatpush1.bf16.msra.mxu0 %v4422
    %5041 = vmatprep.subr.bf16.mxu0 0
    %5042 = vmatpush1.bf16.msra.mxu0 %v4427
    %5043 = vmatprep.subr.bf16.mxu0 0
    %5044 = vmatpush1.bf16.msra.mxu0 %v4432
    %5045 = vmatprep.subr.bf16.mxu0 0
    %5046 = vmatpush1.bf16.msra.mxu0 %v4437
    %5047 = vmatprep.subr.bf16.mxu0 0
    %5048 = vmatpush1.bf16.msra.mxu0 %v4442
    %5049 = vmatprep.subr.bf16.mxu0 0
    %5050 = vmatpush1.bf16.msra.mxu0 %v4447
    %5051 = vmatprep.subr.bf16.mxu0 0
    %5052 = vmatpush1.bf16.msra.mxu0 %v4452
    %5053 = vmatprep.mubr.bf16.mxu0 %v4206
    %5054 = vmatmul.mubr.bf16.gmra.mrb[0].mxu0 %v4205
    %v5055 = vpop.f32.mrb[0].mxu0
    %v5056 = vadd.f32 0.0, %v5055
    %v5057 = vpop.f32.mrb[0].mxu0
    %v5058 = vpop.f32.mrb[0].mxu0
    %v5059 = vpop.f32.mrb[0].mxu0
    %5060 = vdwg.mxu0
    %5061 = vmatprep.subr.bf16.mxu0 0
    %5062 = vmatpush1.bf16.msra.mxu0 %v4457
    %5063 = vmatprep.subr.bf16.mxu0 0
    %5064 = vmatpush1.bf16.msra.mxu0 %v4462
    %5065 = vmatprep.subr.bf16.mxu0 0
    %5066 = vmatpush1.bf16.msra.mxu0 %v4467
    %5067 = vmatprep.subr.bf16.mxu0 0
    %5068 = vmatpush1.bf16.msra.mxu0 %v4472
    %5069 = vmatprep.subr.bf16.mxu0 0
    %5070 = vmatpush1.bf16.msra.mxu0 %v4477
    %5071 = vmatprep.subr.bf16.mxu0 0
    %5072 = vmatpush1.bf16.msra.mxu0 %v4482
    %5073 = vmatprep.subr.bf16.mxu0 0
    %5074 = vmatpush1.bf16.msra.mxu0 %v4487
    %5075 = vmatprep.subr.bf16.mxu0 0
    %5076 = vmatpush1.bf16.msra.mxu0 %v4492
    %5077 = vmatprep.subr.bf16.mxu0 0
    %5078 = vmatpush1.bf16.msra.mxu0 %v4497
    %5079 = vmatprep.subr.bf16.mxu0 0
    %5080 = vmatpush1.bf16.msra.mxu0 %v4502
    %5081 = vmatprep.subr.bf16.mxu0 0
    %5082 = vmatpush1.bf16.msra.mxu0 %v4507
    %5083 = vmatprep.subr.bf16.mxu0 0
    %5084 = vmatpush1.bf16.msra.mxu0 %v4512
    %5085 = vmatprep.subr.bf16.mxu0 0
    %5086 = vmatpush1.bf16.msra.mxu0 %v4517
    %5087 = vmatprep.subr.bf16.mxu0 0
    %5088 = vmatpush1.bf16.msra.mxu0 %v4522
    %5089 = vmatprep.subr.bf16.mxu0 0
    %5090 = vmatpush1.bf16.msra.mxu0 %v4527
    %5091 = vmatprep.subr.bf16.mxu0 0
    %5092 = vmatpush1.bf16.msra.mxu0 %v4532
    %5093 = vmatprep.mubr.bf16.mxu0 %v4208
    %5094 = vmatmul.mubr.bf16.gmra.mrb[0].mxu0 %v4207
    %v5095 = vpop.f32.mrb[0].mxu0
    %v5096 = vadd.f32 %v5056, %v5095
    %v5097 = vpop.f32.mrb[0].mxu0
    %v5098 = vpop.f32.mrb[0].mxu0
    %v5099 = vpop.f32.mrb[0].mxu0
    %5100 = vdwg.mxu0
    %5101 = vmatprep.subr.bf16.mxu0 0
    %5102 = vmatpush1.bf16.msra.mxu0 %v4537
    %5103 = vmatprep.subr.bf16.mxu0 0
    %5104 = vmatpush1.bf16.msra.mxu0 %v4542
    %5105 = vmatprep.subr.bf16.mxu0 0
    %5106 = vmatpush1.bf16.msra.mxu0 %v4547
    %5107 = vmatprep.subr.bf16.mxu0 0
    %5108 = vmatpush1.bf16.msra.mxu0 %v4552
    %5109 = vmatprep.subr.bf16.mxu0 0
    %5110 = vmatpush1.bf16.msra.mxu0 %v4557
    %5111 = vmatprep.subr.bf16.mxu0 0
    %5112 = vmatpush1.bf16.msra.mxu0 %v4562
    %5113 = vmatprep.subr.bf16.mxu0 0
    %5114 = vmatpush1.bf16.msra.mxu0 %v4567
    %5115 = vmatprep.subr.bf16.mxu0 0
    %5116 = vmatpush1.bf16.msra.mxu0 %v4572
    %5117 = vmatprep.subr.bf16.mxu0 0
    %5118 = vmatpush1.bf16.msra.mxu0 %v4577
    %5119 = vmatprep.subr.bf16.mxu0 0
    %5120 = vmatpush1.bf16.msra.mxu0 %v4582
    %5121 = vmatprep.subr.bf16.mxu0 0
    %5122 = vmatpush1.bf16.msra.mxu0 %v4587
    %5123 = vmatprep.subr.bf16.mxu0 0
    %5124 = vmatpush1.bf16.msra.mxu0 %v4592
    %5125 = vmatprep.subr.bf16.mxu0 0
    %5126 = vmatpush1.bf16.msra.mxu0 %v4597
    %5127 = vmatprep.subr.bf16.mxu0 0
    %5128 = vmatpush1.bf16.msra.mxu0 %v4602
    %5129 = vmatprep.subr.bf16.mxu0 0
    %5130 = vmatpush1.bf16.msra.mxu0 %v4607
    %5131 = vmatprep.subr.bf16.mxu0 0
    %5132 = vmatpush1.bf16.msra.mxu0 %v4612
    %5133 = vmatprep.mubr.bf16.mxu0 %v4210
    %5134 = vmatmul.mubr.bf16.gmra.mrb[0].mxu0 %v4209
    %v5135 = vpop.f32.mrb[0].mxu0
    %v5136 = vadd.f32 %v5096, %v5135
    %v5137 = vpop.f32.mrb[0].mxu0
    %v5138 = vpop.f32.mrb[0].mxu0
    %v5139 = vpop.f32.mrb[0].mxu0
    %5140 = vdwg.mxu0
    %5141 = vmatprep.subr.bf16.mxu0 0
    %5142 = vmatpush1.bf16.msra.mxu0 %v4617
    %5143 = vmatprep.subr.bf16.mxu0 0
    %5144 = vmatpush1.bf16.msra.mxu0 %v4622
    %5145 = vmatprep.subr.bf16.mxu0 0
    %5146 = vmatpush1.bf16.msra.mxu0 %v4627
    %5147 = vmatprep.subr.bf16.mxu0 0
    %5148 = vmatpush1.bf16.msra.mxu0 %v4632
    %5149 = vmatprep.subr.bf16.mxu0 0
    %5150 = vmatpush1.bf16.msra.mxu0 %v4637
    %5151 = vmatprep.subr.bf16.mxu0 0
    %5152 = vmatpush1.bf16.msra.mxu0 %v4642
    %5153 = vmatprep.subr.bf16.mxu0 0
    %5154 = vmatpush1.bf16.msra.mxu0 %v4647
    %5155 = vmatprep.subr.bf16.mxu0 0
    %5156 = vmatpush1.bf16.msra.mxu0 %v4652
    %5157 = vmatprep.subr.bf16.mxu0 0
    %5158 = vmatpush1.bf16.msra.mxu0 %v4657
    %5159 = vmatprep.subr.bf16.mxu0 0
    %5160 = vmatpush1.bf16.msra.mxu0 %v4662
    %5161 = vmatprep.subr.bf16.mxu0 0
    %5162 = vmatpush1.bf16.msra.mxu0 %v4667
    %5163 = vmatprep.subr.bf16.mxu0 0
    %5164 = vmatpush1.bf16.msra.mxu0 %v4672
    %5165 = vmatprep.subr.bf16.mxu0 0
    %5166 = vmatpush1.bf16.msra.mxu0 %v4677
    %5167 = vmatprep.subr.bf16.mxu0 0
    %5168 = vmatpush1.bf16.msra.mxu0 %v4682
    %5169 = vmatprep.subr.bf16.mxu0 0
    %5170 = vmatpush1.bf16.msra.mxu0 %v4687
    %5171 = vmatprep.subr.bf16.mxu0 0
    %5172 = vmatpush1.bf16.msra.mxu0 %v4692
    %5173 = vmatprep.mubr.bf16.mxu0 %v4212
    %5174 = vmatmul.mubr.bf16.gmra.mrb[0].mxu0 %v4211
    %v5175 = vpop.f32.mrb[0].mxu0
    %v5176 = vadd.f32 %v5136, %v5175
    %v5177 = vpop.f32.mrb[0].mxu0
    %v5178 = vpop.f32.mrb[0].mxu0
    %v5179 = vpop.f32.mrb[0].mxu0
    %5180 = vdwg.mxu0
    %v5181 = vld [vmem:[#allocation17 + $0x52] sm:$0x1f]
    %v5183 = vlaneseq
    %v5184 = vshrl.u32 %v5183, 7
    %v5185 = vsub.s32 0, %v5184
    %v5186 = vrot.slane %v5181, %v5185
    %v5187 = vlaneseq
    %v5188 = vshrl.u32 %v5187, 7
    %v5189 = vsub.s32 1, %v5188
    %v5190 = vrot.slane %v5181, %v5189
    %v5191 = vlaneseq
    %v5192 = vshrl.u32 %v5191, 7
    %v5193 = vsub.s32 2, %v5192
    %v5194 = vrot.slane %v5181, %v5193
    %v5195 = vlaneseq
    %v5196 = vshrl.u32 %v5195, 7
    %v5197 = vsub.s32 3, %v5196
    %v5198 = vrot.slane %v5181, %v5197
    %v5199 = vlaneseq
    %v5200 = vshrl.u32 %v5199, 7
    %v5201 = vsub.s32 4, %v5200
    %v5202 = vrot.slane %v5181, %v5201
    %v5208 = vmul.f32 %v4851, %v5186
    %v5209 = vmul.f32 %v4853, %v5190
    %v5210 = vmul.f32 %v5015, %v5194
    %v5211 = vmul.f32 %v5017, %v5198
    %v5212 = vmul.f32 %v5176, %v5202
    %v5213 = vld [vmem:[#allocation17 + $0x57] sm:$0x1f]
    %v5215 = vlaneseq
    %v5216 = vshrl.u32 %v5215, 7
    %v5217 = vsub.s32 0, %v5216
    %v5218 = vrot.slane %v5213, %v5217
    %v5219 = vlaneseq
    %v5220 = vshrl.u32 %v5219, 7
    %v5221 = vsub.s32 1, %v5220
    %v5222 = vrot.slane %v5213, %v5221
    %v5223 = vlaneseq
    %v5224 = vshrl.u32 %v5223, 7
    %v5225 = vsub.s32 2, %v5224
    %v5226 = vrot.slane %v5213, %v5225
    %v5227 = vlaneseq
    %v5228 = vshrl.u32 %v5227, 7
    %v5229 = vsub.s32 3, %v5228
    %v5230 = vrot.slane %v5213, %v5229
    %v5231 = vlaneseq
    %v5232 = vshrl.u32 %v5231, 7
    %v5233 = vsub.s32 4, %v5232
    %v5234 = vrot.slane %v5213, %v5233
    %v5240 = vadd.f32 %v5208, %v5218
    %v5241 = vadd.f32 %v5209, %v5222
    %v5242 = vadd.f32 %v5210, %v5226
    %v5243 = vadd.f32 %v5211, %v5230
    %v5244 = vadd.f32 %v5212, %v5234
    %v5245 = vtanh.pop %v5240
    %v5246 = vtanh.pop %v5241
    %v5247 = vtanh.pop %v5242
    %v5248 = vtanh.pop %v5243
    %v5249 = vtanh.pop %v5244
    %5250 = vst [vmem:[#allocation19] sm:$0xff] %v2622
    %5251 = vst [vmem:[#allocation19 + $0x8] sm:$0xff] %v2616
    %5252 = vst [vmem:[#allocation19 + $0x10] sm:$0xff] %v2610
    %5253 = vst [vmem:[#allocation20] sm:$0xff] %v5245
    %5254 = vst [vmem:[#allocation20 + $0x8] sm:$0xff] %v5246
    %5255 = vst [vmem:[#allocation20 + $0x10] sm:$0xff] %v5247
    %5256 = vst [vmem:[#allocation20 + $0x18] sm:$0xff] %v5248
    %5257 = vst [vmem:[#allocation20 + $0x20] sm:$0xff] %v5249
    // Predicated region
    $region82: #{tpu_custom_call.1} parent=1 // pred_check
      _
    $region83: #{tpu_custom_call.1} parent=1 // pred_check_branch
      %5259 = sbr.rel (0) target = $region85
    $region84: #{tpu_custom_call.1} parent=1 // pred_region
      %s5261 = ssub.s32 384, 384
      %5262 = vsyncadd [#allocation4], %s5261
      %s5264 = sshll.u32 [#allocation19], 4
      %s5265 = int_to_ptr.vmem [resolvable:$true] %s5264
      %5267 = dma.vmem_to_hbm [thread:$0]  %s5265, 384, %s10, [#allocation4]
    $region85: #{tpu_custom_call.1} parent=1 // pred_fallthru
      _
    // Predicated region
    $region86: #{tpu_custom_call.1} parent=1 // pred_check
      _
    $region87: #{tpu_custom_call.1} parent=1 // pred_check_branch
      %5269 = sbr.rel (0) target = $region89
    $region88: #{tpu_custom_call.1} parent=1 // pred_region
      %s5271 = ssub.s32 640, 640
      %5272 = vsyncadd [#allocation21], %s5271
      %s5274 = sshll.u32 [#allocation20], 4
      %s5275 = int_to_ptr.vmem [resolvable:$true] %s5274
      %5277 = dma.vmem_to_hbm [thread:$0]  %s5275, 640, %s11, [#allocation21]
    $region89: #{tpu_custom_call.1} parent=1 // pred_fallthru
      _
    // Predicated region
    $region90: #{tpu_custom_call.1} parent=1 // pred_check
      _
    $region91: #{tpu_custom_call.1} parent=1 // pred_check_branch
      %5279 = sbr.rel (0) target = $region93
    $region92: #{tpu_custom_call.1} parent=1 // pred_region
      %5280 = dma.done [#allocation4], 384
    $region93: #{tpu_custom_call.1} parent=1 // pred_fallthru
      _
    // Predicated region
    $region94: #{tpu_custom_call.1} parent=1 // pred_check
      _
    $region95: #{tpu_custom_call.1} parent=1 // pred_check_branch
      %5282 = sbr.rel (0) target = $region97
    $region96: #{tpu_custom_call.1} parent=1 // pred_region
      %5283 = dma.done [#allocation21], 640
    $region97: #{tpu_custom_call.1} parent=1 // pred_fallthru
      _
    %5284 = vsyncpa [#allocation3], 1
    %5285 = vsyncpa [#allocation6], 1
    %5286 = vsyncpa [#allocation9], 1
    %5287 = vsyncpa [#allocation12], 1
    %5288 = vsyncpa [#allocation15], 1
    %5289 = vsyncpa [#allocation18], 1
    %5290 = vsyncpa [#allocation4], 1
    %5291 = vsyncpa [#allocation21], 1

</llo_original>
